<compile_context>
chip_gen: v6e
topology: v6e:2x2x1
jax: 0.10.0
libtpu: 0.0.40
codegen_flags: <defaults>
</compile_context>

<pallas_src>
import jax
import jax.numpy as jnp
import numpy as np
from jax.experimental import pallas as pl
from jax.experimental.pallas import tpu as pltpu

IN_CHANNELS = 1
CONV_CHANNELS = 16
KERNEL_SIZE = 3
OUTPUT_SIZE = 3
SEQ_LEN = 255          # sequence_length from the PyTorch script
BATCH = 2

K_DIM = 8              # padded MXU contraction dim: [xp[2p], xp[2p+1], xp[2p+2], xp[2p+3], 1, 0, 0, 0]
OUT_LANES = 128        # lane-dense output width (results live in lanes 0..2)
MAX_NB = 128           # batch-block cap: VMEM-safe on v5e/v7x, >=2 steps for megacore at large batch


def _round_up(v, m):
    return (v + m - 1) // m * m


def cnn_kernel(xin_ref, wconv_ref, wfc_ref, bfc_ref, out_ref):
    """Fused Conv1d(k=3,pad=1) + ReLU + MaxPool1d(2) + Linear for one batch block.

    xin_ref  : (NB, 8, Lp)  rows [xp[2p], xp[2p+1], xp[2p+2], xp[2p+3], ones, 0, 0, 0]
    wconv_ref: (1, 32, 8)   rows 0..15 = even-position taps, 16..31 = odd; bias in col 4
    wfc_ref  : (3, 16, Lp)  lane-dense FC weights, zero past the valid pooled length
    bfc_ref  : (1, 128)     FC bias in lanes 0..2 (rest zero)
    out_ref  : (NB, 128)    results in lanes 0..2
    """
    nb = xin_ref.shape[0]
    lanes = out_ref.shape[1]

    # 3-tap conv for both maxpool candidates (+ bias via the ones row) as one
    # batched MXU matmul: (nb,32,8) x (nb,8,Lp) -> (nb,32,Lp).
    w32 = jnp.broadcast_to(wconv_ref[...], (nb,) + wconv_ref.shape[1:])      # (nb, 32, 8)
    conv = jnp.einsum("nck,nkp->ncp", w32, xin_ref[...],
                      preferred_element_type=jnp.float32,
                      precision=jax.lax.Precision.HIGHEST)                   # (nb, 32, Lp)

    # ReLU + MaxPool1d(2): max of the two ReLU'd candidates.
    zero = jnp.float32(0.0)
    pooled = jnp.maximum(jnp.maximum(conv[:, :CONV_CHANNELS, :], zero),
                         jnp.maximum(conv[:, CONV_CHANNELS:, :], zero))      # (nb, 16, Lp)

    # FC: out[n, o] = sum_{c,p} pooled[n,c,p] * wfc[o,c,p].
    # Reduce channels (sublane) first -> lane-dense (nb, Lp), then lanes, and
    # scatter each result into its output lane of a lane-dense (nb, 128) row.
    lane_idx = jax.lax.broadcasted_iota(jnp.int32, (1, lanes), 1)
    acc = jnp.zeros((nb, lanes), jnp.float32)
    for o in range(OUTPUT_SIZE):
        prod = pooled * wfc_ref[o:o + 1, :, :]            # (nb, 16, Lp)
        s = jnp.sum(prod, axis=1)                         # sublane reduce -> (nb, Lp)
        s = jnp.sum(s, axis=1, keepdims=True)             # lane reduce    -> (nb, 1)
        acc = acc + s * (lane_idx == o).astype(jnp.float32)
    out_ref[...] = acc + bfc_ref[...]                     # unmasked (NB, 128) store


def cnn_forward(x, wconv, bconv, wfc, bfc):
    """x: (N, 1, L) float32  ->  (N, OUTPUT_SIZE) float32."""
    n, cin, seq = x.shape
    assert cin == IN_CHANNELS == 1
    lh = seq // 2                               # pooled length
    lp = _round_up(lh, 128)                     # lane-padded pooled length
    nb = min(_round_up(n, 8), MAX_NB)           # adaptive batch block
    n_pad = _round_up(n, nb)

    # ---- glue (plain JAX): pre-shifted lane-dense rows + ones row (folds bias into MXU) ----
    xp = jnp.pad(x[:, 0, :].astype(jnp.float32), ((0, 0), (1, 1)))           # (N, L+2)
    rows = [xp[:, k:k + 2 * lh:2] for k in range(4)]                         # 4 x (N, lh)
    rows.append(jnp.ones((n, lh), jnp.float32))                              # bias row
    rows.extend([jnp.zeros((n, lh), jnp.float32)] * (K_DIM - 5))             # pad K to 8
    xin = jnp.stack(rows, axis=1)                                            # (N, 8, lh)
    xin = jnp.pad(xin, ((0, n_pad - n), (0, 0), (0, lp - lh)))               # (N_pad, 8, Lp)

    # MXU conv weights: rows 0..15 even positions [w0,w1,w2,0,b,0,0,0],
    #                   rows 16..31 odd positions [0,w0,w1,w2,b,0,0,0].
    w = wconv[:, 0, :].astype(jnp.float32)                                   # (16, 3)
    b = bconv.astype(jnp.float32)[:, None]                                   # (16, 1)
    z1 = jnp.zeros((CONV_CHANNELS, 1), jnp.float32)
    z3 = jnp.zeros((CONV_CHANNELS, K_DIM - 5), jnp.float32)
    w_even = jnp.concatenate([w, z1, b, z3], axis=1)                         # (16, 8)
    w_odd = jnp.concatenate([z1, w, b, z3], axis=1)                          # (16, 8)
    wconv32 = jnp.concatenate([w_even, w_odd], axis=0)[None]                 # (1, 32, 8)

    # PyTorch flatten is channel-major: flat[c*lh + p] = pooled[c, p].
    wfc3 = wfc.reshape(OUTPUT_SIZE, CONV_CHANNELS, lh).astype(jnp.float32)
    wfc3 = jnp.pad(wfc3, ((0, 0), (0, 0), (0, lp - lh)))                     # (3, 16, Lp)
    bfc2 = jnp.pad(bfc.astype(jnp.float32)[None, :],
                   ((0, 0), (0, OUT_LANES - OUTPUT_SIZE)))                   # (1, 128)

    out = pl.pallas_call(
        cnn_kernel,
        out_shape=jax.ShapeDtypeStruct((n_pad, OUT_LANES), jnp.float32),
        grid=(n_pad // nb,),
        in_specs=[
            pl.BlockSpec((nb, K_DIM, lp), lambda i: (i, 0, 0)),
            pl.BlockSpec((1, 2 * CONV_CHANNELS, K_DIM), lambda i: (0, 0, 0)),
            pl.BlockSpec((OUTPUT_SIZE, CONV_CHANNELS, lp), lambda i: (0, 0, 0)),
            pl.BlockSpec((1, OUT_LANES), lambda i: (0, 0)),
        ],
        out_specs=pl.BlockSpec((nb, OUT_LANES), lambda i: (i, 0)),
        compiler_params=pltpu.CompilerParams(
            dimension_semantics=("parallel",),
            vmem_limit_bytes=32 * 1024 * 1024),
    )(xin, wconv32, wfc3, bfc2)

    return out[:n, :OUTPUT_SIZE]


def ref_forward(x, wconv, bconv, wfc, bfc):
    """Pure-JAX reference matching the PyTorch forward pass."""
    n, _, seq = x.shape
    lh = seq // 2
    xp = jnp.pad(x[:, 0, :], ((0, 0), (1, 1)))                               # (N, L+2)
    w = wconv[:, 0, :]                                                       # (16, 3)
    conv = sum(w[:, k][None, :, None] * xp[:, None, k:k + seq] for k in range(3))
    conv = conv + bconv[None, :, None]                                       # (N, 16, L)
    r = jnp.maximum(conv, 0.0)
    pooled = jnp.max(r[:, :, :2 * lh].reshape(n, CONV_CHANNELS, lh, 2), axis=-1)
    flat = pooled.reshape(n, -1)                                             # channel-major flatten
    return flat @ wfc.T + bfc[None, :]


if __name__ == "__main__":
    # deterministic parameters / input (synthetic init; shapes match the nn.Module)
    kp = jax.random.PRNGKey(0)
    kx, k1, k2, k3, k4 = jax.random.split(kp, 5)
    lh = SEQ_LEN // 2

    wconv = jax.random.normal(k1, (CONV_CHANNELS, IN_CHANNELS, KERNEL_SIZE),
                              dtype=jnp.float32) * 0.1
    bconv = jax.random.normal(k2, (CONV_CHANNELS,), dtype=jnp.float32) * 0.1
    wfc = jax.random.normal(k3, (OUTPUT_SIZE, CONV_CHANNELS * lh),
                            dtype=jnp.float32) * 0.05
    bfc = jax.random.normal(k4, (OUTPUT_SIZE,), dtype=jnp.float32) * 0.1

    x = jax.random.normal(kx, (BATCH, IN_CHANNELS, SEQ_LEN), dtype=jnp.float32)

    out = jax.block_until_ready(cnn_forward(x, wconv, bconv, wfc, bfc))
    ref = ref_forward(x, wconv, bconv, wfc, bfc)

    assert out.shape == (BATCH, OUTPUT_SIZE)
    # MXU f32 matmul (multi-pass) tolerance; structural bugs would show as O(0.1+) errors.
    np.testing.assert_allclose(np.asarray(out), np.asarray(ref), rtol=1e-2, atol=1e-2)
    print("KERNEL_OK")
</pallas_src>

<mosaic_0001>
module attributes {stable_mosaic.version = 11 : i64} {
  func.func @cnn_kernel(%arg0: i32, %arg1: memref<8x8x128xf32, #tpu.memory_space<vmem>>, %arg2: memref<1x32x8xf32, #tpu.memory_space<vmem>>, %arg3: memref<3x16x128xf32, #tpu.memory_space<vmem>>, %arg4: memref<1x128xf32, #tpu.memory_space<vmem>>, %arg5: memref<8x128xf32, #tpu.memory_space<vmem>>) attributes {dimension_semantics = [#tpu.dimension_semantics<parallel>], iteration_bounds = array<i64: 1>, scalar_prefetch = 0 : i64, scratch_operands = 0 : i64, tpu.core_type = #tpu.core_type<tc>, window_params = [{transform_indices = @transform_0, window_bounds = array<i64: 8, 8, 128>}, {pipeline_mode = #tpu.pipeline_mode<synchronous>, transform_indices = @transform_1, window_bounds = array<i64: 1, 32, 8>}, {pipeline_mode = #tpu.pipeline_mode<synchronous>, transform_indices = @transform_2, window_bounds = array<i64: 3, 16, 128>}, {pipeline_mode = #tpu.pipeline_mode<synchronous>, transform_indices = @transform_3, window_bounds = array<i64: 1, 128>}, {transform_indices = @transform_4, window_bounds = array<i64: 8, 128>}]} {
    %c0 = arith.constant 0 : index
    %c0_0 = arith.constant 0 : index
    %c0_1 = arith.constant 0 : index
    %0 = vector.load %arg2[%c0, %c0_0, %c0_1] : memref<1x32x8xf32, #tpu.memory_space<vmem>>, vector<1x32x8xf32>
    %1 = vector.shape_cast %0 : vector<1x32x8xf32> to vector<1x32x8xf32>
    %2 = vector.broadcast %1 : vector<1x32x8xf32> to vector<8x32x8xf32>
    %c0_2 = arith.constant 0 : index
    %c0_3 = arith.constant 0 : index
    %c0_4 = arith.constant 0 : index
    %3 = vector.load %arg1[%c0_2, %c0_3, %c0_4] : memref<8x8x128xf32, #tpu.memory_space<vmem>>, vector<8x8x128xf32>
    "tpu.trace_start"() <{level = 10 : i32, message = "nck,nkp->ncp"}> : () -> ()
    %cst = arith.constant dense<0.000000e+00> : vector<8x32x128xf32>
    %4 = tpu.matmul %2, %3, %cst {dimension_numbers = #tpu.dot_dimension_numbers<[2], [1], [1], [2], [0, 0, 0, 1, 1, 2], [0], [0]>, precision = #tpu.contract_precision<fp32>} : vector<8x32x8xf32>, vector<8x8x128xf32>, vector<8x32x128xf32> -> vector<8x32x128xf32>
    "tpu.trace_stop"() : () -> ()
    %5 = vector.extract_strided_slice %4 {offsets = [0, 0, 0], sizes = [8, 16, 128], strides = [1, 1, 1]} : vector<8x32x128xf32> to vector<8x16x128xf32>
    %cst_5 = arith.constant 0.000000e+00 : f32
    %6 = vector.broadcast %cst_5 : f32 to vector<8x16x128xf32>
    %7 = arith.maximumf %5, %6 : vector<8x16x128xf32>
    %8 = vector.extract_strided_slice %4 {offsets = [0, 16, 0], sizes = [8, 16, 128], strides = [1, 1, 1]} : vector<8x32x128xf32> to vector<8x16x128xf32>
    %cst_6 = arith.constant 0.000000e+00 : f32
    %9 = vector.broadcast %cst_6 : f32 to vector<8x16x128xf32>
    %10 = arith.maximumf %8, %9 : vector<8x16x128xf32>
    %11 = arith.maximumf %7, %10 : vector<8x16x128xf32>
    %12 = tpu.iota {dimensions = array<i32: 1>} : vector<1x128xi32>
    %cst_7 = arith.constant 0.000000e+00 : f32
    %13 = vector.broadcast %cst_7 : f32 to vector<8x128xf32>
    %c0_8 = arith.constant 0 : index
    %c0_9 = arith.constant 0 : index
    %c0_10 = arith.constant 0 : index
    %14 = vector.load %arg3[%c0_8, %c0_9, %c0_10] : memref<3x16x128xf32, #tpu.memory_space<vmem>>, vector<1x16x128xf32>
    %15 = vector.broadcast %14 : vector<1x16x128xf32> to vector<8x16x128xf32>
    %16 = arith.mulf %11, %15 : vector<8x16x128xf32>
    %cst_11 = arith.constant dense<0.000000e+00> : vector<8x128xf32>
    %17 = vector.multi_reduction <add>, %16, %cst_11 [1] : vector<8x16x128xf32> to vector<8x128xf32>
    %cst_12 = arith.constant dense<0.000000e+00> : vector<8xf32>
    %18 = vector.multi_reduction <add>, %17, %cst_12 [1] : vector<8x128xf32> to vector<8xf32>
    %19 = vector.shape_cast %18 : vector<8xf32> to vector<8x1xf32>
    %c0_i32 = arith.constant 0 : i32
    %20 = vector.broadcast %c0_i32 : i32 to vector<1x128xi32>
    %21 = arith.cmpi eq, %12, %20 : vector<1x128xi32>
    %22 = arith.extui %21 : vector<1x128xi1> to vector<1x128xi32>
    %23 = arith.sitofp %22 : vector<1x128xi32> to vector<1x128xf32>
    %24 = vector.broadcast %19 : vector<8x1xf32> to vector<8x128xf32>
    %25 = vector.broadcast %23 : vector<1x128xf32> to vector<8x128xf32>
    %26 = arith.mulf %24, %25 : vector<8x128xf32>
    %27 = arith.addf %13, %26 : vector<8x128xf32>
    %c1 = arith.constant 1 : index
    %c0_13 = arith.constant 0 : index
    %c0_14 = arith.constant 0 : index
    %28 = vector.load %arg3[%c1, %c0_13, %c0_14] : memref<3x16x128xf32, #tpu.memory_space<vmem>>, vector<1x16x128xf32>
    %29 = vector.broadcast %28 : vector<1x16x128xf32> to vector<8x16x128xf32>
    %30 = arith.mulf %11, %29 : vector<8x16x128xf32>
    %cst_15 = arith.constant dense<0.000000e+00> : vector<8x128xf32>
    %31 = vector.multi_reduction <add>, %30, %cst_15 [1] : vector<8x16x128xf32> to vector<8x128xf32>
    %cst_16 = arith.constant dense<0.000000e+00> : vector<8xf32>
    %32 = vector.multi_reduction <add>, %31, %cst_16 [1] : vector<8x128xf32> to vector<8xf32>
    %33 = vector.shape_cast %32 : vector<8xf32> to vector<8x1xf32>
    %c1_i32 = arith.constant 1 : i32
    %34 = vector.broadcast %c1_i32 : i32 to vector<1x128xi32>
    %35 = arith.cmpi eq, %12, %34 : vector<1x128xi32>
    %36 = arith.extui %35 : vector<1x128xi1> to vector<1x128xi32>
    %37 = arith.sitofp %36 : vector<1x128xi32> to vector<1x128xf32>
    %38 = vector.broadcast %33 : vector<8x1xf32> to vector<8x128xf32>
    %39 = vector.broadcast %37 : vector<1x128xf32> to vector<8x128xf32>
    %40 = arith.mulf %38, %39 : vector<8x128xf32>
    %41 = arith.addf %27, %40 : vector<8x128xf32>
    %c2 = arith.constant 2 : index
    %c0_17 = arith.constant 0 : index
    %c0_18 = arith.constant 0 : index
    %42 = vector.load %arg3[%c2, %c0_17, %c0_18] : memref<3x16x128xf32, #tpu.memory_space<vmem>>, vector<1x16x128xf32>
    %43 = vector.broadcast %42 : vector<1x16x128xf32> to vector<8x16x128xf32>
    %44 = arith.mulf %11, %43 : vector<8x16x128xf32>
    %cst_19 = arith.constant dense<0.000000e+00> : vector<8x128xf32>
    %45 = vector.multi_reduction <add>, %44, %cst_19 [1] : vector<8x16x128xf32> to vector<8x128xf32>
    %cst_20 = arith.constant dense<0.000000e+00> : vector<8xf32>
    %46 = vector.multi_reduction <add>, %45, %cst_20 [1] : vector<8x128xf32> to vector<8xf32>
    %47 = vector.shape_cast %46 : vector<8xf32> to vector<8x1xf32>
    %c2_i32 = arith.constant 2 : i32
    %48 = vector.broadcast %c2_i32 : i32 to vector<1x128xi32>
    %49 = arith.cmpi eq, %12, %48 : vector<1x128xi32>
    %50 = arith.extui %49 : vector<1x128xi1> to vector<1x128xi32>
    %51 = arith.sitofp %50 : vector<1x128xi32> to vector<1x128xf32>
    %52 = vector.broadcast %47 : vector<8x1xf32> to vector<8x128xf32>
    %53 = vector.broadcast %51 : vector<1x128xf32> to vector<8x128xf32>
    %54 = arith.mulf %52, %53 : vector<8x128xf32>
    %55 = arith.addf %41, %54 : vector<8x128xf32>
    %c0_21 = arith.constant 0 : index
    %c0_22 = arith.constant 0 : index
    %56 = vector.load %arg4[%c0_21, %c0_22] : memref<1x128xf32, #tpu.memory_space<vmem>>, vector<1x128xf32>
    %57 = vector.broadcast %56 : vector<1x128xf32> to vector<8x128xf32>
    %58 = arith.addf %55, %57 : vector<8x128xf32>
    %c0_23 = arith.constant 0 : index
    %c0_24 = arith.constant 0 : index
    %59 = vector.load %arg5[%c0_23, %c0_24] : memref<8x128xf32, #tpu.memory_space<vmem>>, vector<8x128xf32>
    tpu.vector_store %arg5[%c0_23, %c0_24], %58 {strides = array<i32>} : memref<8x128xf32, #tpu.memory_space<vmem>>, vector<8x128xf32>,
    return
  }
  func.func @transform_0(%arg0: i32) -> (i32, i32, i32) {
    %c0_i32 = arith.constant 0 : i32
    %c0_i32_0 = arith.constant 0 : i32
    %c0_i32_1 = arith.constant 0 : i32
    return %arg0, %c0_i32, %c0_i32_0 : i32, i32, i32
  }
  func.func @transform_1(%arg0: i32) -> (i32, i32, i32) {
    %c0_i32 = arith.constant 0 : i32
    %c0_i32_0 = arith.constant 0 : i32
    %c0_i32_1 = arith.constant 0 : i32
    %c0_i32_2 = arith.constant 0 : i32
    return %c0_i32, %c0_i32_0, %c0_i32_1 : i32, i32, i32
  }
  func.func @transform_2(%arg0: i32) -> (i32, i32, i32) {
    %c0_i32 = arith.constant 0 : i32
    %c0_i32_0 = arith.constant 0 : i32
    %c0_i32_1 = arith.constant 0 : i32
    %c0_i32_2 = arith.constant 0 : i32
    return %c0_i32, %c0_i32_0, %c0_i32_1 : i32, i32, i32
  }
  func.func @transform_3(%arg0: i32) -> (i32, i32) {
    %c0_i32 = arith.constant 0 : i32
    %c0_i32_0 = arith.constant 0 : i32
    %c0_i32_1 = arith.constant 0 : i32
    return %c0_i32, %c0_i32_0 : i32, i32
  }
  func.func @transform_4(%arg0: i32) -> (i32, i32) {
    %c0_i32 = arith.constant 0 : i32
    %c0_i32_0 = arith.constant 0 : i32
    return %arg0, %c0_i32 : i32, i32
  }
}

</mosaic_0001>

<llo_original>
// kernel: tpu_custom_call.1
$region0: #{tpu_custom_call.1}
  #allocation0 [shape = 'u32[]', space=smem, size = 0x4, offset = 0x4, fixed_abs, tag = 'smem constant byte address 0x4 - core index']
  #allocation1 [shape = 'u32[144,128]{1,0:T(1,128)}', space=vmem, size = 0x12000, scoped, tag = 'internal scratch']
  %s0 = inlined_call_operand.hbm [shape: f32[8,8,128], index: 0, kind: input, shape index: {}]
  %s1 = inlined_call_operand.vmem [shape: f32[1,32,8], index: 1, kind: input, shape index: {}]
  %s2 = inlined_call_operand.hbm [shape: f32[3,16,128], index: 2, kind: input, shape index: {}]
  %s3 = inlined_call_operand.vmem [shape: f32[1,128], index: 3, kind: input, shape index: {}]
  %s4 = inlined_call_operand.hbm [shape: f32[8,128], index: 4, kind: output, shape index: {}]
  %s5 = sld [smem:[#allocation0]]
  $region34: #{tpu_custom_call.1} parent=0
    _
  %s7 = ssub.s32 1, %s5
  %s8 = scalar_select 0, %s7, %s5
  $region1: #{tpu_custom_call.1} parent=0
    #allocation2 [shape = 'u8[32768]{0}', space=vmem, size = 0x8000, scoped, tag = 'input window, operand 0, single buffered']
    #allocation3 [shape = 's32[1]{0}', space=sflag, size = 0x4, scoped, tag = 'scoped memory for tpu_custom_call.1']
    #allocation4 [shape = 's32[1]{0}', space=sflag, size = 0x4, scoped, tag = 'scoped memory for tpu_custom_call.1']
    #allocation5 [shape = 'u8[24576]{0}', space=vmem, size = 0x6000, scoped, tag = 'input window, operand 2, single buffered']
    #allocation6 [shape = 's32[1]{0}', space=sflag, size = 0x4, scoped, tag = 'scoped memory for tpu_custom_call.1']
    #allocation7 [shape = 'u8[4096]{0}', space=vmem, size = 0x1000, scoped, tag = 'output window, operand 0, single buffered']
    %9 = vsyncpa [#allocation3], 0
    %10 = vsyncpa [#allocation6], 0
    %11 = vsyncpa [#allocation4], 0
    // Predicated region
    $region2: #{tpu_custom_call.1} parent=1 // pred_check
      _
    $region3: #{tpu_custom_call.1} parent=1 // pred_check_branch
      %13 = sbr.rel (0) target = $region5
    $region4: #{tpu_custom_call.1} parent=1 // pred_region
      %s15 = ssub.s32 1024, 1024
      %16 = vsyncadd [#allocation3], %s15
      %s17 = sshll.u32 [#allocation2], 4
      %s18 = int_to_ptr.vmem [resolvable:$true] %s17
      %23 = dma.hbm_to_vmem [thread:$0]  %s0, 1024, %s18, [#allocation3], 128, 128, 8
    $region5: #{tpu_custom_call.1} parent=1 // pred_fallthru
      _
    // Predicated region
    $region6: #{tpu_custom_call.1} parent=1 // pred_check
      _
    $region7: #{tpu_custom_call.1} parent=1 // pred_check_branch
      %25 = sbr.rel (0) target = $region9
    $region8: #{tpu_custom_call.1} parent=1 // pred_region
      _
    $region9: #{tpu_custom_call.1} parent=1 // pred_fallthru
      _
    // Predicated region
    $region10: #{tpu_custom_call.1} parent=1 // pred_check
      _
    $region11: #{tpu_custom_call.1} parent=1 // pred_check_branch
      %27 = sbr.rel (0) target = $region13
    $region12: #{tpu_custom_call.1} parent=1 // pred_region
      %s29 = ssub.s32 768, 768
      %30 = vsyncadd [#allocation6], %s29
      %s31 = sshll.u32 [#allocation5], 4
      %s32 = int_to_ptr.vmem [resolvable:$true] %s31
      %37 = dma.hbm_to_vmem [thread:$0]  %s2, 768, %s32, [#allocation6], 128, 128, 8
    $region13: #{tpu_custom_call.1} parent=1 // pred_fallthru
      _
    // Predicated region
    $region14: #{tpu_custom_call.1} parent=1 // pred_check
      _
    $region15: #{tpu_custom_call.1} parent=1 // pred_check_branch
      %39 = sbr.rel (0) target = $region17
    $region16: #{tpu_custom_call.1} parent=1 // pred_region
      _
    $region17: #{tpu_custom_call.1} parent=1 // pred_fallthru
      _
    // Predicated region
    $region18: #{tpu_custom_call.1} parent=1 // pred_check
      _
    $region19: #{tpu_custom_call.1} parent=1 // pred_check_branch
      %41 = sbr.rel (0) target = $region21
    $region20: #{tpu_custom_call.1} parent=1 // pred_region
      %42 = dma.done [#allocation3], 1024
    $region21: #{tpu_custom_call.1} parent=1 // pred_fallthru
      _
    // Predicated region
    $region22: #{tpu_custom_call.1} parent=1 // pred_check
      _
    $region23: #{tpu_custom_call.1} parent=1 // pred_check_branch
      %44 = sbr.rel (0) target = $region25
    $region24: #{tpu_custom_call.1} parent=1 // pred_region
      %45 = dma.done [#allocation6], 768
    $region25: #{tpu_custom_call.1} parent=1 // pred_fallthru
      _
    %v46 = vld [vmem:[%s1] sm:$0xff]
    %v47 = vld [vmem:[%s1 + $0x8] sm:$0xff]
    %v48 = vld [vmem:[%s1 + $0x10] sm:$0xff]
    %v49 = vld [vmem:[%s1 + $0x18] sm:$0xff]
    %v50 = vld [vmem:[#allocation2] sm:$0xff]
    %v51 = vld [vmem:[#allocation2 + $0x8] sm:$0xff]
    %v52 = vld [vmem:[#allocation2 + $0x10] sm:$0xff]
    %v53 = vld [vmem:[#allocation2 + $0x18] sm:$0xff]
    %v54 = vld [vmem:[#allocation2 + $0x20] sm:$0xff]
    %v55 = vld [vmem:[#allocation2 + $0x28] sm:$0xff]
    %v56 = vld [vmem:[#allocation2 + $0x30] sm:$0xff]
    %v57 = vld [vmem:[#allocation2 + $0x38] sm:$0xff]
    %vm58 = vcmask 64512
    %v60 = vsel %vm58, %v46, 0
    %v63 = vsel %vm58, %v47, 0
    %v66 = vsel %vm58, %v48, 0
    %v69 = vsel %vm58, %v49, 0
    %71 = vmatprep.subr.mxu0 0.0
    %72 = vmatpush1.msra.mxu0 0.0
    %73 = vmatprep.subr.mxu0 0.0
    %74 = vmatpush1.msra.mxu0 0.0
    %75 = vmatprep.subr.mxu0 0.0
    %76 = vmatpush1.msra.mxu0 0.0
    %77 = vmatprep.subr.mxu0 0.0
    %78 = vmatpush1.msra.mxu0 0.0
    %79 = vmatprep.subr.mxu0 0.0
    %80 = vmatpush1.msra.mxu0 0.0
    %81 = vmatprep.subr.mxu0 0.0
    %82 = vmatpush1.msra.mxu0 0.0
    %83 = vmatprep.subr.mxu0 0.0
    %84 = vmatpush1.msra.mxu0 0.0
    %85 = vmatprep.subr.mxu0 0.0
    %86 = vmatpush1.msra.mxu0 0.0
    %87 = vmatprep.subr.mxu0 0.0
    %88 = vmatpush1.msra.mxu0 0.0
    %89 = vmatprep.subr.mxu0 0.0
    %90 = vmatpush1.msra.mxu0 0.0
    %91 = vmatprep.subr.mxu0 0.0
    %92 = vmatpush1.msra.mxu0 0.0
    %93 = vmatprep.subr.mxu0 0.0
    %94 = vmatpush1.msra.mxu0 0.0
    %95 = vmatprep.subr.mxu0 0.0
    %96 = vmatpush1.msra.mxu0 0.0
    %97 = vmatprep.subr.mxu0 0.0
    %98 = vmatpush1.msra.mxu0 0.0
    %99 = vmatprep.subr.mxu0 0.0
    %100 = vmatpush1.msra.mxu0 0.0
    %101 = vmatprep.subr.mxu0 0.0
    %v102 = vand.u32 %v50, 4294901760
    %103 = vmatpush1.msra.mxu0 %v102
    %104 = vmatprep.subr.mxu0 0.0
    %105 = vmatpush2.msra.mxu0 0.0
    %106 = vmatprep.subr.mxu0 0.0
    %107 = vmatpush2.msra.mxu0 0.0
    %108 = vmatprep.subr.mxu0 0.0
    %109 = vmatpush2.msra.mxu0 0.0
    %110 = vmatprep.subr.mxu0 0.0
    %111 = vmatpush2.msra.mxu0 0.0
    %112 = vmatprep.subr.mxu0 0.0
    %113 = vmatpush2.msra.mxu0 0.0
    %114 = vmatprep.subr.mxu0 0.0
    %115 = vmatpush2.msra.mxu0 0.0
    %116 = vmatprep.subr.mxu0 0.0
    %117 = vmatpush2.msra.mxu0 0.0
    %118 = vmatprep.subr.mxu0 0.0
    %119 = vmatpush2.msra.mxu0 0.0
    %120 = vmatprep.subr.mxu0 0.0
    %121 = vmatpush2.msra.mxu0 0.0
    %122 = vmatprep.subr.mxu0 0.0
    %123 = vmatpush2.msra.mxu0 0.0
    %124 = vmatprep.subr.mxu0 0.0
    %125 = vmatpush2.msra.mxu0 0.0
    %126 = vmatprep.subr.mxu0 0.0
    %127 = vmatpush2.msra.mxu0 0.0
    %128 = vmatprep.subr.mxu0 0.0
    %129 = vmatpush2.msra.mxu0 0.0
    %130 = vmatprep.subr.mxu0 0.0
    %131 = vmatpush2.msra.mxu0 0.0
    %132 = vmatprep.subr.mxu0 0.0
    %133 = vmatpush2.msra.mxu0 0.0
    %134 = vmatprep.subr.mxu0 0.0
    %135 = vmatpush2.msra.mxu0 0.0
    %136 = vmatprep.mubr.f32.mxu0 0.0
    %v137 = vand.u32 %v60, 4294901760
    %v138 = vsub.f32 %v60, %v137
    %v139 = vand.u32 %v138, 4294901760
    %v140 = vsub.f32 %v138, %v139
    %v141 = vand.u32 %v140, 4294901760
    %142 = vmatmul.mubr.f32.gmra.mxu0 %v141
    %v143 = vpop.f32.mrf.mxu0
    %v144 = vadd.f32 0.0, %v143
    %v145 = vpop.f32.mrf.mxu0
    %146 = vmatprep.mubr.f32.mxu0 0.0
    %v147 = vand.u32 %v63, 4294901760
    %v148 = vsub.f32 %v63, %v147
    %v149 = vand.u32 %v148, 4294901760
    %v150 = vsub.f32 %v148, %v149
    %v151 = vand.u32 %v150, 4294901760
    %152 = vmatmul.mubr.f32.gmra.mxu0 %v151
    %v153 = vpop.f32.mrf.mxu0
    %v154 = vadd.f32 0.0, %v153
    %v155 = vpop.f32.mrf.mxu0
    %156 = vmatprep.mubr.f32.mxu0 0.0
    %v157 = vand.u32 %v66, 4294901760
    %v158 = vsub.f32 %v66, %v157
    %v159 = vand.u32 %v158, 4294901760
    %v160 = vsub.f32 %v158, %v159
    %v161 = vand.u32 %v160, 4294901760
    %162 = vmatmul.mubr.f32.gmra.mxu0 %v161
    %v163 = vpop.f32.mrf.mxu0
    %v164 = vadd.f32 0.0, %v163
    %v165 = vpop.f32.mrf.mxu0
    %166 = vmatprep.mubr.f32.mxu0 0.0
    %v167 = vand.u32 %v69, 4294901760
    %v168 = vsub.f32 %v69, %v167
    %v169 = vand.u32 %v168, 4294901760
    %v170 = vsub.f32 %v168, %v169
    %v171 = vand.u32 %v170, 4294901760
    %172 = vmatmul.mubr.f32.gmra.mxu0 %v171
    %v173 = vpop.f32.mrf.mxu0
    %v174 = vadd.f32 0.0, %v173
    %v175 = vpop.f32.mrf.mxu0
    %176 = vdwg.mxu0
    %177 = vmatprep.subr.mxu0 0.0
    %178 = vmatpush1.msra.mxu0 0.0
    %179 = vmatprep.subr.mxu0 0.0
    %180 = vmatpush1.msra.mxu0 0.0
    %181 = vmatprep.subr.mxu0 0.0
    %182 = vmatpush1.msra.mxu0 0.0
    %183 = vmatprep.subr.mxu0 0.0
    %184 = vmatpush1.msra.mxu0 0.0
    %185 = vmatprep.subr.mxu0 0.0
    %186 = vmatpush1.msra.mxu0 0.0
    %187 = vmatprep.subr.mxu0 0.0
    %188 = vmatpush1.msra.mxu0 0.0
    %189 = vmatprep.subr.mxu0 0.0
    %190 = vmatpush1.msra.mxu0 0.0
    %191 = vmatprep.subr.mxu0 0.0
    %192 = vmatpush1.msra.mxu0 0.0
    %193 = vmatprep.subr.mxu0 0.0
    %194 = vmatpush1.msra.mxu0 0.0
    %195 = vmatprep.subr.mxu0 0.0
    %196 = vmatpush1.msra.mxu0 0.0
    %197 = vmatprep.subr.mxu0 0.0
    %198 = vmatpush1.msra.mxu0 0.0
    %199 = vmatprep.subr.mxu0 0.0
    %200 = vmatpush1.msra.mxu0 0.0
    %201 = vmatprep.subr.mxu0 0.0
    %202 = vmatpush1.msra.mxu0 0.0
    %203 = vmatprep.subr.mxu0 0.0
    %204 = vmatpush1.msra.mxu0 0.0
    %205 = vmatprep.subr.mxu0 0.0
    %206 = vmatpush1.msra.mxu0 0.0
    %207 = vmatprep.subr.mxu0 0.0
    %v208 = vand.u32 %v50, 4294901760
    %v209 = vsub.f32 %v50, %v208
    %v210 = vand.u32 %v209, 4294901760
    %v211 = vsub.f32 %v209, %v210
    %v212 = vand.u32 %v211, 4294901760
    %213 = vmatpush1.msra.mxu0 %v212
    %214 = vmatprep.subr.mxu0 0.0
    %215 = vmatpush2.msra.mxu0 0.0
    %216 = vmatprep.subr.mxu0 0.0
    %217 = vmatpush2.msra.mxu0 0.0
    %218 = vmatprep.subr.mxu0 0.0
    %219 = vmatpush2.msra.mxu0 0.0
    %220 = vmatprep.subr.mxu0 0.0
    %221 = vmatpush2.msra.mxu0 0.0
    %222 = vmatprep.subr.mxu0 0.0
    %223 = vmatpush2.msra.mxu0 0.0
    %224 = vmatprep.subr.mxu0 0.0
    %225 = vmatpush2.msra.mxu0 0.0
    %226 = vmatprep.subr.mxu0 0.0
    %227 = vmatpush2.msra.mxu0 0.0
    %228 = vmatprep.subr.mxu0 0.0
    %229 = vmatpush2.msra.mxu0 0.0
    %230 = vmatprep.subr.mxu0 0.0
    %231 = vmatpush2.msra.mxu0 0.0
    %232 = vmatprep.subr.mxu0 0.0
    %233 = vmatpush2.msra.mxu0 0.0
    %234 = vmatprep.subr.mxu0 0.0
    %235 = vmatpush2.msra.mxu0 0.0
    %236 = vmatprep.subr.mxu0 0.0
    %237 = vmatpush2.msra.mxu0 0.0
    %238 = vmatprep.subr.mxu0 0.0
    %239 = vmatpush2.msra.mxu0 0.0
    %240 = vmatprep.subr.mxu0 0.0
    %241 = vmatpush2.msra.mxu0 0.0
    %242 = vmatprep.subr.mxu0 0.0
    %243 = vmatpush2.msra.mxu0 0.0
    %244 = vmatprep.subr.mxu0 0.0
    %245 = vmatpush2.msra.mxu0 0.0
    %246 = vmatprep.mubr.f32.mxu0 0.0
    %v247 = vand.u32 %v60, 4294901760
    %248 = vmatmul.mubr.f32.gmra.mxu0 %v247
    %v249 = vpop.f32.mrf.mxu0
    %v250 = vadd.f32 %v144, %v249
    %v251 = vpop.f32.mrf.mxu0
    %252 = vmatprep.mubr.f32.mxu0 0.0
    %v253 = vand.u32 %v63, 4294901760
    %254 = vmatmul.mubr.f32.gmra.mxu0 %v253
    %v255 = vpop.f32.mrf.mxu0
    %v256 = vadd.f32 %v154, %v255
    %v257 = vpop.f32.mrf.mxu0
    %258 = vmatprep.mubr.f32.mxu0 0.0
    %v259 = vand.u32 %v66, 4294901760
    %260 = vmatmul.mubr.f32.gmra.mxu0 %v259
    %v261 = vpop.f32.mrf.mxu0
    %v262 = vadd.f32 %v164, %v261
    %v263 = vpop.f32.mrf.mxu0
    %264 = vmatprep.mubr.f32.mxu0 0.0
    %v265 = vand.u32 %v69, 4294901760
    %266 = vmatmul.mubr.f32.gmra.mxu0 %v265
    %v267 = vpop.f32.mrf.mxu0
    %v268 = vadd.f32 %v174, %v267
    %v269 = vpop.f32.mrf.mxu0
    %270 = vdwg.mxu0
    %271 = vmatprep.subr.mxu0 0.0
    %272 = vmatpush1.msra.mxu0 0.0
    %273 = vmatprep.subr.mxu0 0.0
    %274 = vmatpush1.msra.mxu0 0.0
    %275 = vmatprep.subr.mxu0 0.0
    %276 = vmatpush1.msra.mxu0 0.0
    %277 = vmatprep.subr.mxu0 0.0
    %278 = vmatpush1.msra.mxu0 0.0
    %279 = vmatprep.subr.mxu0 0.0
    %280 = vmatpush1.msra.mxu0 0.0
    %281 = vmatprep.subr.mxu0 0.0
    %282 = vmatpush1.msra.mxu0 0.0
    %283 = vmatprep.subr.mxu0 0.0
    %284 = vmatpush1.msra.mxu0 0.0
    %285 = vmatprep.subr.mxu0 0.0
    %286 = vmatpush1.msra.mxu0 0.0
    %287 = vmatprep.subr.mxu0 0.0
    %288 = vmatpush1.msra.mxu0 0.0
    %289 = vmatprep.subr.mxu0 0.0
    %290 = vmatpush1.msra.mxu0 0.0
    %291 = vmatprep.subr.mxu0 0.0
    %292 = vmatpush1.msra.mxu0 0.0
    %293 = vmatprep.subr.mxu0 0.0
    %294 = vmatpush1.msra.mxu0 0.0
    %295 = vmatprep.subr.mxu0 0.0
    %296 = vmatpush1.msra.mxu0 0.0
    %297 = vmatprep.subr.mxu0 0.0
    %298 = vmatpush1.msra.mxu0 0.0
    %299 = vmatprep.subr.mxu0 0.0
    %300 = vmatpush1.msra.mxu0 0.0
    %301 = vmatprep.subr.mxu0 0.0
    %v302 = vand.u32 %v50, 4294901760
    %v303 = vsub.f32 %v50, %v302
    %304 = vmatpush1.msra.mxu0 %v303
    %305 = vmatprep.subr.mxu0 0.0
    %306 = vmatpush2.msra.mxu0 0.0
    %307 = vmatprep.subr.mxu0 0.0
    %308 = vmatpush2.msra.mxu0 0.0
    %309 = vmatprep.subr.mxu0 0.0
    %310 = vmatpush2.msra.mxu0 0.0
    %311 = vmatprep.subr.mxu0 0.0
    %312 = vmatpush2.msra.mxu0 0.0
    %313 = vmatprep.subr.mxu0 0.0
    %314 = vmatpush2.msra.mxu0 0.0
    %315 = vmatprep.subr.mxu0 0.0
    %316 = vmatpush2.msra.mxu0 0.0
    %317 = vmatprep.subr.mxu0 0.0
    %318 = vmatpush2.msra.mxu0 0.0
    %319 = vmatprep.subr.mxu0 0.0
    %320 = vmatpush2.msra.mxu0 0.0
    %321 = vmatprep.subr.mxu0 0.0
    %322 = vmatpush2.msra.mxu0 0.0
    %323 = vmatprep.subr.mxu0 0.0
    %324 = vmatpush2.msra.mxu0 0.0
    %325 = vmatprep.subr.mxu0 0.0
    %326 = vmatpush2.msra.mxu0 0.0
    %327 = vmatprep.subr.mxu0 0.0
    %328 = vmatpush2.msra.mxu0 0.0
    %329 = vmatprep.subr.mxu0 0.0
    %330 = vmatpush2.msra.mxu0 0.0
    %331 = vmatprep.subr.mxu0 0.0
    %332 = vmatpush2.msra.mxu0 0.0
    %333 = vmatprep.subr.mxu0 0.0
    %334 = vmatpush2.msra.mxu0 0.0
    %335 = vmatprep.subr.mxu0 0.0
    %336 = vmatpush2.msra.mxu0 0.0
    %337 = vmatprep.mubr.f32.mxu0 0.0
    %v338 = vand.u32 %v60, 4294901760
    %v339 = vsub.f32 %v60, %v338
    %340 = vmatmul.mubr.f32.gmra.mxu0 %v339
    %v341 = vpop.f32.mrf.mxu0
    %v342 = vadd.f32 %v250, %v341
    %v343 = vpop.f32.mrf.mxu0
    %344 = vmatprep.mubr.f32.mxu0 0.0
    %v345 = vand.u32 %v63, 4294901760
    %v346 = vsub.f32 %v63, %v345
    %347 = vmatmul.mubr.f32.gmra.mxu0 %v346
    %v348 = vpop.f32.mrf.mxu0
    %v349 = vadd.f32 %v256, %v348
    %v350 = vpop.f32.mrf.mxu0
    %351 = vmatprep.mubr.f32.mxu0 0.0
    %v352 = vand.u32 %v66, 4294901760
    %v353 = vsub.f32 %v66, %v352
    %354 = vmatmul.mubr.f32.gmra.mxu0 %v353
    %v355 = vpop.f32.mrf.mxu0
    %v356 = vadd.f32 %v262, %v355
    %v357 = vpop.f32.mrf.mxu0
    %358 = vmatprep.mubr.f32.mxu0 0.0
    %v359 = vand.u32 %v69, 4294901760
    %v360 = vsub.f32 %v69, %v359
    %361 = vmatmul.mubr.f32.gmra.mxu0 %v360
    %v362 = vpop.f32.mrf.mxu0
    %v363 = vadd.f32 %v268, %v362
    %v364 = vpop.f32.mrf.mxu0
    %365 = vdwg.mxu0
    %366 = vmatprep.subr.mxu0 0.0
    %367 = vmatpush1.msra.mxu0 0.0
    %368 = vmatprep.subr.mxu0 0.0
    %369 = vmatpush1.msra.mxu0 0.0
    %370 = vmatprep.subr.mxu0 0.0
    %371 = vmatpush1.msra.mxu0 0.0
    %372 = vmatprep.subr.mxu0 0.0
    %373 = vmatpush1.msra.mxu0 0.0
    %374 = vmatprep.subr.mxu0 0.0
    %375 = vmatpush1.msra.mxu0 0.0
    %376 = vmatprep.subr.mxu0 0.0
    %377 = vmatpush1.msra.mxu0 0.0
    %378 = vmatprep.subr.mxu0 0.0
    %379 = vmatpush1.msra.mxu0 0.0
    %380 = vmatprep.subr.mxu0 0.0
    %381 = vmatpush1.msra.mxu0 0.0
    %382 = vmatprep.subr.mxu0 0.0
    %383 = vmatpush1.msra.mxu0 0.0
    %384 = vmatprep.subr.mxu0 0.0
    %385 = vmatpush1.msra.mxu0 0.0
    %386 = vmatprep.subr.mxu0 0.0
    %387 = vmatpush1.msra.mxu0 0.0
    %388 = vmatprep.subr.mxu0 0.0
    %389 = vmatpush1.msra.mxu0 0.0
    %390 = vmatprep.subr.mxu0 0.0
    %391 = vmatpush1.msra.mxu0 0.0
    %392 = vmatprep.subr.mxu0 0.0
    %393 = vmatpush1.msra.mxu0 0.0
    %394 = vmatprep.subr.mxu0 0.0
    %395 = vmatpush1.msra.mxu0 0.0
    %396 = vmatprep.subr.mxu0 0.0
    %v397 = vand.u32 %v50, 4294901760
    %398 = vmatpush1.msra.mxu0 %v397
    %399 = vmatprep.subr.mxu0 0.0
    %400 = vmatpush2.msra.mxu0 0.0
    %401 = vmatprep.subr.mxu0 0.0
    %402 = vmatpush2.msra.mxu0 0.0
    %403 = vmatprep.subr.mxu0 0.0
    %404 = vmatpush2.msra.mxu0 0.0
    %405 = vmatprep.subr.mxu0 0.0
    %406 = vmatpush2.msra.mxu0 0.0
    %407 = vmatprep.subr.mxu0 0.0
    %408 = vmatpush2.msra.mxu0 0.0
    %409 = vmatprep.subr.mxu0 0.0
    %410 = vmatpush2.msra.mxu0 0.0
    %411 = vmatprep.subr.mxu0 0.0
    %412 = vmatpush2.msra.mxu0 0.0
    %413 = vmatprep.subr.mxu0 0.0
    %414 = vmatpush2.msra.mxu0 0.0
    %415 = vmatprep.subr.mxu0 0.0
    %416 = vmatpush2.msra.mxu0 0.0
    %417 = vmatprep.subr.mxu0 0.0
    %418 = vmatpush2.msra.mxu0 0.0
    %419 = vmatprep.subr.mxu0 0.0
    %420 = vmatpush2.msra.mxu0 0.0
    %421 = vmatprep.subr.mxu0 0.0
    %422 = vmatpush2.msra.mxu0 0.0
    %423 = vmatprep.subr.mxu0 0.0
    %424 = vmatpush2.msra.mxu0 0.0
    %425 = vmatprep.subr.mxu0 0.0
    %426 = vmatpush2.msra.mxu0 0.0
    %427 = vmatprep.subr.mxu0 0.0
    %428 = vmatpush2.msra.mxu0 0.0
    %429 = vmatprep.subr.mxu0 0.0
    %430 = vmatpush2.msra.mxu0 0.0
    %431 = vmatprep.mubr.f32.mxu0 0.0
    %v432 = vand.u32 %v60, 4294901760
    %v433 = vsub.f32 %v60, %v432
    %v434 = vand.u32 %v433, 4294901760
    %435 = vmatmul.mubr.f32.gmra.mxu0 %v434
    %v436 = vpop.f32.mrf.mxu0
    %v437 = vadd.f32 %v342, %v436
    %v438 = vpop.f32.mrf.mxu0
    %439 = vmatprep.mubr.f32.mxu0 0.0
    %v440 = vand.u32 %v63, 4294901760
    %v441 = vsub.f32 %v63, %v440
    %v442 = vand.u32 %v441, 4294901760
    %443 = vmatmul.mubr.f32.gmra.mxu0 %v442
    %v444 = vpop.f32.mrf.mxu0
    %v445 = vadd.f32 %v349, %v444
    %v446 = vpop.f32.mrf.mxu0
    %447 = vmatprep.mubr.f32.mxu0 0.0
    %v448 = vand.u32 %v66, 4294901760
    %v449 = vsub.f32 %v66, %v448
    %v450 = vand.u32 %v449, 4294901760
    %451 = vmatmul.mubr.f32.gmra.mxu0 %v450
    %v452 = vpop.f32.mrf.mxu0
    %v453 = vadd.f32 %v356, %v452
    %v454 = vpop.f32.mrf.mxu0
    %455 = vmatprep.mubr.f32.mxu0 0.0
    %v456 = vand.u32 %v69, 4294901760
    %v457 = vsub.f32 %v69, %v456
    %v458 = vand.u32 %v457, 4294901760
    %459 = vmatmul.mubr.f32.gmra.mxu0 %v458
    %v460 = vpop.f32.mrf.mxu0
    %v461 = vadd.f32 %v363, %v460
    %v462 = vpop.f32.mrf.mxu0
    %463 = vdwg.mxu0
    %464 = vmatprep.subr.mxu0 0.0
    %465 = vmatpush1.msra.mxu0 0.0
    %466 = vmatprep.subr.mxu0 0.0
    %467 = vmatpush1.msra.mxu0 0.0
    %468 = vmatprep.subr.mxu0 0.0
    %469 = vmatpush1.msra.mxu0 0.0
    %470 = vmatprep.subr.mxu0 0.0
    %471 = vmatpush1.msra.mxu0 0.0
    %472 = vmatprep.subr.mxu0 0.0
    %473 = vmatpush1.msra.mxu0 0.0
    %474 = vmatprep.subr.mxu0 0.0
    %475 = vmatpush1.msra.mxu0 0.0
    %476 = vmatprep.subr.mxu0 0.0
    %477 = vmatpush1.msra.mxu0 0.0
    %478 = vmatprep.subr.mxu0 0.0
    %479 = vmatpush1.msra.mxu0 0.0
    %480 = vmatprep.subr.mxu0 0.0
    %481 = vmatpush1.msra.mxu0 0.0
    %482 = vmatprep.subr.mxu0 0.0
    %483 = vmatpush1.msra.mxu0 0.0
    %484 = vmatprep.subr.mxu0 0.0
    %485 = vmatpush1.msra.mxu0 0.0
    %486 = vmatprep.subr.mxu0 0.0
    %487 = vmatpush1.msra.mxu0 0.0
    %488 = vmatprep.subr.mxu0 0.0
    %489 = vmatpush1.msra.mxu0 0.0
    %490 = vmatprep.subr.mxu0 0.0
    %491 = vmatpush1.msra.mxu0 0.0
    %492 = vmatprep.subr.mxu0 0.0
    %493 = vmatpush1.msra.mxu0 0.0
    %494 = vmatprep.subr.mxu0 0.0
    %v495 = vand.u32 %v50, 4294901760
    %v496 = vsub.f32 %v50, %v495
    %v497 = vand.u32 %v496, 4294901760
    %498 = vmatpush1.msra.mxu0 %v497
    %499 = vmatprep.subr.mxu0 0.0
    %500 = vmatpush2.msra.mxu0 0.0
    %501 = vmatprep.subr.mxu0 0.0
    %502 = vmatpush2.msra.mxu0 0.0
    %503 = vmatprep.subr.mxu0 0.0
    %504 = vmatpush2.msra.mxu0 0.0
    %505 = vmatprep.subr.mxu0 0.0
    %506 = vmatpush2.msra.mxu0 0.0
    %507 = vmatprep.subr.mxu0 0.0
    %508 = vmatpush2.msra.mxu0 0.0
    %509 = vmatprep.subr.mxu0 0.0
    %510 = vmatpush2.msra.mxu0 0.0
    %511 = vmatprep.subr.mxu0 0.0
    %512 = vmatpush2.msra.mxu0 0.0
    %513 = vmatprep.subr.mxu0 0.0
    %514 = vmatpush2.msra.mxu0 0.0
    %515 = vmatprep.subr.mxu0 0.0
    %516 = vmatpush2.msra.mxu0 0.0
    %517 = vmatprep.subr.mxu0 0.0
    %518 = vmatpush2.msra.mxu0 0.0
    %519 = vmatprep.subr.mxu0 0.0
    %520 = vmatpush2.msra.mxu0 0.0
    %521 = vmatprep.subr.mxu0 0.0
    %522 = vmatpush2.msra.mxu0 0.0
    %523 = vmatprep.subr.mxu0 0.0
    %524 = vmatpush2.msra.mxu0 0.0
    %525 = vmatprep.subr.mxu0 0.0
    %526 = vmatpush2.msra.mxu0 0.0
    %527 = vmatprep.subr.mxu0 0.0
    %528 = vmatpush2.msra.mxu0 0.0
    %529 = vmatprep.subr.mxu0 0.0
    %530 = vmatpush2.msra.mxu0 0.0
    %531 = vmatprep.mubr.f32.mxu0 0.0
    %v532 = vand.u32 %v60, 4294901760
    %533 = vmatmul.mubr.f32.gmra.mxu0 %v532
    %v534 = vpop.f32.mrf.mxu0
    %v535 = vadd.f32 %v437, %v534
    %v536 = vpop.f32.mrf.mxu0
    %537 = vmatprep.mubr.f32.mxu0 0.0
    %v538 = vand.u32 %v63, 4294901760
    %539 = vmatmul.mubr.f32.gmra.mxu0 %v538
    %v540 = vpop.f32.mrf.mxu0
    %v541 = vadd.f32 %v445, %v540
    %v542 = vpop.f32.mrf.mxu0
    %543 = vmatprep.mubr.f32.mxu0 0.0
    %v544 = vand.u32 %v66, 4294901760
    %545 = vmatmul.mubr.f32.gmra.mxu0 %v544
    %v546 = vpop.f32.mrf.mxu0
    %v547 = vadd.f32 %v453, %v546
    %v548 = vpop.f32.mrf.mxu0
    %549 = vmatprep.mubr.f32.mxu0 0.0
    %v550 = vand.u32 %v69, 4294901760
    %551 = vmatmul.mubr.f32.gmra.mxu0 %v550
    %v552 = vpop.f32.mrf.mxu0
    %v553 = vadd.f32 %v461, %v552
    %v554 = vpop.f32.mrf.mxu0
    %555 = vdwg.mxu0
    %556 = vmatprep.subr.mxu0 0.0
    %557 = vmatpush1.msra.mxu0 0.0
    %558 = vmatprep.subr.mxu0 0.0
    %559 = vmatpush1.msra.mxu0 0.0
    %560 = vmatprep.subr.mxu0 0.0
    %561 = vmatpush1.msra.mxu0 0.0
    %562 = vmatprep.subr.mxu0 0.0
    %563 = vmatpush1.msra.mxu0 0.0
    %564 = vmatprep.subr.mxu0 0.0
    %565 = vmatpush1.msra.mxu0 0.0
    %566 = vmatprep.subr.mxu0 0.0
    %567 = vmatpush1.msra.mxu0 0.0
    %568 = vmatprep.subr.mxu0 0.0
    %569 = vmatpush1.msra.mxu0 0.0
    %570 = vmatprep.subr.mxu0 0.0
    %571 = vmatpush1.msra.mxu0 0.0
    %572 = vmatprep.subr.mxu0 0.0
    %573 = vmatpush1.msra.mxu0 0.0
    %574 = vmatprep.subr.mxu0 0.0
    %575 = vmatpush1.msra.mxu0 0.0
    %576 = vmatprep.subr.mxu0 0.0
    %577 = vmatpush1.msra.mxu0 0.0
    %578 = vmatprep.subr.mxu0 0.0
    %579 = vmatpush1.msra.mxu0 0.0
    %580 = vmatprep.subr.mxu0 0.0
    %581 = vmatpush1.msra.mxu0 0.0
    %582 = vmatprep.subr.mxu0 0.0
    %583 = vmatpush1.msra.mxu0 0.0
    %584 = vmatprep.subr.mxu0 0.0
    %585 = vmatpush1.msra.mxu0 0.0
    %586 = vmatprep.subr.mxu0 0.0
    %v587 = vand.u32 %v50, 4294901760
    %588 = vmatpush1.msra.mxu0 %v587
    %589 = vmatprep.subr.mxu0 0.0
    %590 = vmatpush2.msra.mxu0 0.0
    %591 = vmatprep.subr.mxu0 0.0
    %592 = vmatpush2.msra.mxu0 0.0
    %593 = vmatprep.subr.mxu0 0.0
    %594 = vmatpush2.msra.mxu0 0.0
    %595 = vmatprep.subr.mxu0 0.0
    %596 = vmatpush2.msra.mxu0 0.0
    %597 = vmatprep.subr.mxu0 0.0
    %598 = vmatpush2.msra.mxu0 0.0
    %599 = vmatprep.subr.mxu0 0.0
    %600 = vmatpush2.msra.mxu0 0.0
    %601 = vmatprep.subr.mxu0 0.0
    %602 = vmatpush2.msra.mxu0 0.0
    %603 = vmatprep.subr.mxu0 0.0
    %604 = vmatpush2.msra.mxu0 0.0
    %605 = vmatprep.subr.mxu0 0.0
    %606 = vmatpush2.msra.mxu0 0.0
    %607 = vmatprep.subr.mxu0 0.0
    %608 = vmatpush2.msra.mxu0 0.0
    %609 = vmatprep.subr.mxu0 0.0
    %610 = vmatpush2.msra.mxu0 0.0
    %611 = vmatprep.subr.mxu0 0.0
    %612 = vmatpush2.msra.mxu0 0.0
    %613 = vmatprep.subr.mxu0 0.0
    %614 = vmatpush2.msra.mxu0 0.0
    %615 = vmatprep.subr.mxu0 0.0
    %616 = vmatpush2.msra.mxu0 0.0
    %617 = vmatprep.subr.mxu0 0.0
    %618 = vmatpush2.msra.mxu0 0.0
    %619 = vmatprep.subr.mxu0 0.0
    %620 = vmatpush2.msra.mxu0 0.0
    %621 = vmatprep.mubr.f32.mxu0 0.0
    %v622 = vand.u32 %v60, 4294901760
    %623 = vmatmul.mubr.f32.gmra.mxu0 %v622
    %v624 = vpop.f32.mrf.mxu0
    %v625 = vadd.f32 %v535, %v624
    %v626 = vpop.f32.mrf.mxu0
    %627 = vmatprep.mubr.f32.mxu0 0.0
    %v628 = vand.u32 %v63, 4294901760
    %629 = vmatmul.mubr.f32.gmra.mxu0 %v628
    %v630 = vpop.f32.mrf.mxu0
    %v631 = vadd.f32 %v541, %v630
    %v632 = vpop.f32.mrf.mxu0
    %633 = vmatprep.mubr.f32.mxu0 0.0
    %v634 = vand.u32 %v66, 4294901760
    %635 = vmatmul.mubr.f32.gmra.mxu0 %v634
    %v636 = vpop.f32.mrf.mxu0
    %v637 = vadd.f32 %v547, %v636
    %v638 = vpop.f32.mrf.mxu0
    %639 = vmatprep.mubr.f32.mxu0 0.0
    %v640 = vand.u32 %v69, 4294901760
    %641 = vmatmul.mubr.f32.gmra.mxu0 %v640
    %v642 = vpop.f32.mrf.mxu0
    %v643 = vadd.f32 %v553, %v642
    %v644 = vpop.f32.mrf.mxu0
    %645 = vdwg.mxu0
    %646 = vmatprep.subr.mxu0 0.0
    %647 = vmatpush1.msra.mxu0 0.0
    %648 = vmatprep.subr.mxu0 0.0
    %649 = vmatpush1.msra.mxu0 0.0
    %650 = vmatprep.subr.mxu0 0.0
    %651 = vmatpush1.msra.mxu0 0.0
    %652 = vmatprep.subr.mxu0 0.0
    %653 = vmatpush1.msra.mxu0 0.0
    %654 = vmatprep.subr.mxu0 0.0
    %655 = vmatpush1.msra.mxu0 0.0
    %656 = vmatprep.subr.mxu0 0.0
    %657 = vmatpush1.msra.mxu0 0.0
    %658 = vmatprep.subr.mxu0 0.0
    %659 = vmatpush1.msra.mxu0 0.0
    %660 = vmatprep.subr.mxu0 0.0
    %661 = vmatpush1.msra.mxu0 0.0
    %662 = vmatprep.subr.mxu0 0.0
    %663 = vmatpush1.msra.mxu0 0.0
    %664 = vmatprep.subr.mxu0 0.0
    %665 = vmatpush1.msra.mxu0 0.0
    %666 = vmatprep.subr.mxu0 0.0
    %667 = vmatpush1.msra.mxu0 0.0
    %668 = vmatprep.subr.mxu0 0.0
    %669 = vmatpush1.msra.mxu0 0.0
    %670 = vmatprep.subr.mxu0 0.0
    %671 = vmatpush1.msra.mxu0 0.0
    %672 = vmatprep.subr.mxu0 0.0
    %673 = vmatpush1.msra.mxu0 0.0
    %674 = vmatprep.subr.mxu0 0.0
    %675 = vmatpush1.msra.mxu0 0.0
    %676 = vmatprep.subr.mxu0 0.0
    %v677 = vand.u32 %v51, 4294901760
    %678 = vmatpush1.msra.mxu0 %v677
    %679 = vmatprep.subr.mxu0 0.0
    %680 = vmatpush2.msra.mxu0 0.0
    %681 = vmatprep.subr.mxu0 0.0
    %682 = vmatpush2.msra.mxu0 0.0
    %683 = vmatprep.subr.mxu0 0.0
    %684 = vmatpush2.msra.mxu0 0.0
    %685 = vmatprep.subr.mxu0 0.0
    %686 = vmatpush2.msra.mxu0 0.0
    %687 = vmatprep.subr.mxu0 0.0
    %688 = vmatpush2.msra.mxu0 0.0
    %689 = vmatprep.subr.mxu0 0.0
    %690 = vmatpush2.msra.mxu0 0.0
    %691 = vmatprep.subr.mxu0 0.0
    %692 = vmatpush2.msra.mxu0 0.0
    %693 = vmatprep.subr.mxu0 0.0
    %694 = vmatpush2.msra.mxu0 0.0
    %695 = vmatprep.subr.mxu0 0.0
    %696 = vmatpush2.msra.mxu0 0.0
    %697 = vmatprep.subr.mxu0 0.0
    %698 = vmatpush2.msra.mxu0 0.0
    %699 = vmatprep.subr.mxu0 0.0
    %700 = vmatpush2.msra.mxu0 0.0
    %701 = vmatprep.subr.mxu0 0.0
    %702 = vmatpush2.msra.mxu0 0.0
    %703 = vmatprep.subr.mxu0 0.0
    %704 = vmatpush2.msra.mxu0 0.0
    %705 = vmatprep.subr.mxu0 0.0
    %706 = vmatpush2.msra.mxu0 0.0
    %707 = vmatprep.subr.mxu0 0.0
    %708 = vmatpush2.msra.mxu0 0.0
    %709 = vmatprep.subr.mxu0 0.0
    %710 = vmatpush2.msra.mxu0 0.0
    %711 = vmatprep.mubr.f32.mxu0 0.0
    %v712 = vand.u32 %v60, 4294901760
    %v713 = vsub.f32 %v60, %v712
    %v714 = vand.u32 %v713, 4294901760
    %v715 = vsub.f32 %v713, %v714
    %v716 = vand.u32 %v715, 4294901760
    %717 = vmatmul.mubr.f32.gmra.mxu0 %v716
    %v718 = vpop.f32.mrf.mxu0
    %v719 = vadd.f32 0.0, %v718
    %v720 = vpop.f32.mrf.mxu0
    %721 = vmatprep.mubr.f32.mxu0 0.0
    %v722 = vand.u32 %v63, 4294901760
    %v723 = vsub.f32 %v63, %v722
    %v724 = vand.u32 %v723, 4294901760
    %v725 = vsub.f32 %v723, %v724
    %v726 = vand.u32 %v725, 4294901760
    %727 = vmatmul.mubr.f32.gmra.mxu0 %v726
    %v728 = vpop.f32.mrf.mxu0
    %v729 = vadd.f32 0.0, %v728
    %v730 = vpop.f32.mrf.mxu0
    %731 = vmatprep.mubr.f32.mxu0 0.0
    %v732 = vand.u32 %v66, 4294901760
    %v733 = vsub.f32 %v66, %v732
    %v734 = vand.u32 %v733, 4294901760
    %v735 = vsub.f32 %v733, %v734
    %v736 = vand.u32 %v735, 4294901760
    %737 = vmatmul.mubr.f32.gmra.mxu0 %v736
    %v738 = vpop.f32.mrf.mxu0
    %v739 = vadd.f32 0.0, %v738
    %v740 = vpop.f32.mrf.mxu0
    %741 = vmatprep.mubr.f32.mxu0 0.0
    %v742 = vand.u32 %v69, 4294901760
    %v743 = vsub.f32 %v69, %v742
    %v744 = vand.u32 %v743, 4294901760
    %v745 = vsub.f32 %v743, %v744
    %v746 = vand.u32 %v745, 4294901760
    %747 = vmatmul.mubr.f32.gmra.mxu0 %v746
    %v748 = vpop.f32.mrf.mxu0
    %v749 = vadd.f32 0.0, %v748
    %v750 = vpop.f32.mrf.mxu0
    %751 = vdwg.mxu0
    %752 = vmatprep.subr.mxu0 0.0
    %753 = vmatpush1.msra.mxu0 0.0
    %754 = vmatprep.subr.mxu0 0.0
    %755 = vmatpush1.msra.mxu0 0.0
    %756 = vmatprep.subr.mxu0 0.0
    %757 = vmatpush1.msra.mxu0 0.0
    %758 = vmatprep.subr.mxu0 0.0
    %759 = vmatpush1.msra.mxu0 0.0
    %760 = vmatprep.subr.mxu0 0.0
    %761 = vmatpush1.msra.mxu0 0.0
    %762 = vmatprep.subr.mxu0 0.0
    %763 = vmatpush1.msra.mxu0 0.0
    %764 = vmatprep.subr.mxu0 0.0
    %765 = vmatpush1.msra.mxu0 0.0
    %766 = vmatprep.subr.mxu0 0.0
    %767 = vmatpush1.msra.mxu0 0.0
    %768 = vmatprep.subr.mxu0 0.0
    %769 = vmatpush1.msra.mxu0 0.0
    %770 = vmatprep.subr.mxu0 0.0
    %771 = vmatpush1.msra.mxu0 0.0
    %772 = vmatprep.subr.mxu0 0.0
    %773 = vmatpush1.msra.mxu0 0.0
    %774 = vmatprep.subr.mxu0 0.0
    %775 = vmatpush1.msra.mxu0 0.0
    %776 = vmatprep.subr.mxu0 0.0
    %777 = vmatpush1.msra.mxu0 0.0
    %778 = vmatprep.subr.mxu0 0.0
    %779 = vmatpush1.msra.mxu0 0.0
    %780 = vmatprep.subr.mxu0 0.0
    %781 = vmatpush1.msra.mxu0 0.0
    %782 = vmatprep.subr.mxu0 0.0
    %v783 = vand.u32 %v51, 4294901760
    %v784 = vsub.f32 %v51, %v783
    %v785 = vand.u32 %v784, 4294901760
    %v786 = vsub.f32 %v784, %v785
    %v787 = vand.u32 %v786, 4294901760
    %788 = vmatpush1.msra.mxu0 %v787
    %789 = vmatprep.subr.mxu0 0.0
    %790 = vmatpush2.msra.mxu0 0.0
    %791 = vmatprep.subr.mxu0 0.0
    %792 = vmatpush2.msra.mxu0 0.0
    %793 = vmatprep.subr.mxu0 0.0
    %794 = vmatpush2.msra.mxu0 0.0
    %795 = vmatprep.subr.mxu0 0.0
    %796 = vmatpush2.msra.mxu0 0.0
    %797 = vmatprep.subr.mxu0 0.0
    %798 = vmatpush2.msra.mxu0 0.0
    %799 = vmatprep.subr.mxu0 0.0
    %800 = vmatpush2.msra.mxu0 0.0
    %801 = vmatprep.subr.mxu0 0.0
    %802 = vmatpush2.msra.mxu0 0.0
    %803 = vmatprep.subr.mxu0 0.0
    %804 = vmatpush2.msra.mxu0 0.0
    %805 = vmatprep.subr.mxu0 0.0
    %806 = vmatpush2.msra.mxu0 0.0
    %807 = vmatprep.subr.mxu0 0.0
    %808 = vmatpush2.msra.mxu0 0.0
    %809 = vmatprep.subr.mxu0 0.0
    %810 = vmatpush2.msra.mxu0 0.0
    %811 = vmatprep.subr.mxu0 0.0
    %812 = vmatpush2.msra.mxu0 0.0
    %813 = vmatprep.subr.mxu0 0.0
    %814 = vmatpush2.msra.mxu0 0.0
    %815 = vmatprep.subr.mxu0 0.0
    %816 = vmatpush2.msra.mxu0 0.0
    %817 = vmatprep.subr.mxu0 0.0
    %818 = vmatpush2.msra.mxu0 0.0
    %819 = vmatprep.subr.mxu0 0.0
    %820 = vmatpush2.msra.mxu0 0.0
    %821 = vmatprep.mubr.f32.mxu0 0.0
    %v822 = vand.u32 %v60, 4294901760
    %823 = vmatmul.mubr.f32.gmra.mxu0 %v822
    %v824 = vpop.f32.mrf.mxu0
    %v825 = vadd.f32 %v719, %v824
    %v826 = vpop.f32.mrf.mxu0
    %827 = vmatprep.mubr.f32.mxu0 0.0
    %v828 = vand.u32 %v63, 4294901760
    %829 = vmatmul.mubr.f32.gmra.mxu0 %v828
    %v830 = vpop.f32.mrf.mxu0
    %v831 = vadd.f32 %v729, %v830
    %v832 = vpop.f32.mrf.mxu0
    %833 = vmatprep.mubr.f32.mxu0 0.0
    %v834 = vand.u32 %v66, 4294901760
    %835 = vmatmul.mubr.f32.gmra.mxu0 %v834
    %v836 = vpop.f32.mrf.mxu0
    %v837 = vadd.f32 %v739, %v836
    %v838 = vpop.f32.mrf.mxu0
    %839 = vmatprep.mubr.f32.mxu0 0.0
    %v840 = vand.u32 %v69, 4294901760
    %841 = vmatmul.mubr.f32.gmra.mxu0 %v840
    %v842 = vpop.f32.mrf.mxu0
    %v843 = vadd.f32 %v749, %v842
    %v844 = vpop.f32.mrf.mxu0
    %845 = vdwg.mxu0
    %846 = vmatprep.subr.mxu0 0.0
    %847 = vmatpush1.msra.mxu0 0.0
    %848 = vmatprep.subr.mxu0 0.0
    %849 = vmatpush1.msra.mxu0 0.0
    %850 = vmatprep.subr.mxu0 0.0
    %851 = vmatpush1.msra.mxu0 0.0
    %852 = vmatprep.subr.mxu0 0.0
    %853 = vmatpush1.msra.mxu0 0.0
    %854 = vmatprep.subr.mxu0 0.0
    %855 = vmatpush1.msra.mxu0 0.0
    %856 = vmatprep.subr.mxu0 0.0
    %857 = vmatpush1.msra.mxu0 0.0
    %858 = vmatprep.subr.mxu0 0.0
    %859 = vmatpush1.msra.mxu0 0.0
    %860 = vmatprep.subr.mxu0 0.0
    %861 = vmatpush1.msra.mxu0 0.0
    %862 = vmatprep.subr.mxu0 0.0
    %863 = vmatpush1.msra.mxu0 0.0
    %864 = vmatprep.subr.mxu0 0.0
    %865 = vmatpush1.msra.mxu0 0.0
    %866 = vmatprep.subr.mxu0 0.0
    %867 = vmatpush1.msra.mxu0 0.0
    %868 = vmatprep.subr.mxu0 0.0
    %869 = vmatpush1.msra.mxu0 0.0
    %870 = vmatprep.subr.mxu0 0.0
    %871 = vmatpush1.msra.mxu0 0.0
    %872 = vmatprep.subr.mxu0 0.0
    %873 = vmatpush1.msra.mxu0 0.0
    %874 = vmatprep.subr.mxu0 0.0
    %875 = vmatpush1.msra.mxu0 0.0
    %876 = vmatprep.subr.mxu0 0.0
    %v877 = vand.u32 %v51, 4294901760
    %v878 = vsub.f32 %v51, %v877
    %879 = vmatpush1.msra.mxu0 %v878
    %880 = vmatprep.subr.mxu0 0.0
    %881 = vmatpush2.msra.mxu0 0.0
    %882 = vmatprep.subr.mxu0 0.0
    %883 = vmatpush2.msra.mxu0 0.0
    %884 = vmatprep.subr.mxu0 0.0
    %885 = vmatpush2.msra.mxu0 0.0
    %886 = vmatprep.subr.mxu0 0.0
    %887 = vmatpush2.msra.mxu0 0.0
    %888 = vmatprep.subr.mxu0 0.0
    %889 = vmatpush2.msra.mxu0 0.0
    %890 = vmatprep.subr.mxu0 0.0
    %891 = vmatpush2.msra.mxu0 0.0
    %892 = vmatprep.subr.mxu0 0.0
    %893 = vmatpush2.msra.mxu0 0.0
    %894 = vmatprep.subr.mxu0 0.0
    %895 = vmatpush2.msra.mxu0 0.0
    %896 = vmatprep.subr.mxu0 0.0
    %897 = vmatpush2.msra.mxu0 0.0
    %898 = vmatprep.subr.mxu0 0.0
    %899 = vmatpush2.msra.mxu0 0.0
    %900 = vmatprep.subr.mxu0 0.0
    %901 = vmatpush2.msra.mxu0 0.0
    %902 = vmatprep.subr.mxu0 0.0
    %903 = vmatpush2.msra.mxu0 0.0
    %904 = vmatprep.subr.mxu0 0.0
    %905 = vmatpush2.msra.mxu0 0.0
    %906 = vmatprep.subr.mxu0 0.0
    %907 = vmatpush2.msra.mxu0 0.0
    %908 = vmatprep.subr.mxu0 0.0
    %909 = vmatpush2.msra.mxu0 0.0
    %910 = vmatprep.subr.mxu0 0.0
    %911 = vmatpush2.msra.mxu0 0.0
    %912 = vmatprep.mubr.f32.mxu0 0.0
    %v913 = vand.u32 %v60, 4294901760
    %v914 = vsub.f32 %v60, %v913
    %915 = vmatmul.mubr.f32.gmra.mxu0 %v914
    %v916 = vpop.f32.mrf.mxu0
    %v917 = vadd.f32 %v825, %v916
    %v918 = vpop.f32.mrf.mxu0
    %919 = vmatprep.mubr.f32.mxu0 0.0
    %v920 = vand.u32 %v63, 4294901760
    %v921 = vsub.f32 %v63, %v920
    %922 = vmatmul.mubr.f32.gmra.mxu0 %v921
    %v923 = vpop.f32.mrf.mxu0
    %v924 = vadd.f32 %v831, %v923
    %v925 = vpop.f32.mrf.mxu0
    %926 = vmatprep.mubr.f32.mxu0 0.0
    %v927 = vand.u32 %v66, 4294901760
    %v928 = vsub.f32 %v66, %v927
    %929 = vmatmul.mubr.f32.gmra.mxu0 %v928
    %v930 = vpop.f32.mrf.mxu0
    %v931 = vadd.f32 %v837, %v930
    %v932 = vpop.f32.mrf.mxu0
    %933 = vmatprep.mubr.f32.mxu0 0.0
    %v934 = vand.u32 %v69, 4294901760
    %v935 = vsub.f32 %v69, %v934
    %936 = vmatmul.mubr.f32.gmra.mxu0 %v935
    %v937 = vpop.f32.mrf.mxu0
    %v938 = vadd.f32 %v843, %v937
    %v939 = vpop.f32.mrf.mxu0
    %940 = vdwg.mxu0
    %941 = vmatprep.subr.mxu0 0.0
    %942 = vmatpush1.msra.mxu0 0.0
    %943 = vmatprep.subr.mxu0 0.0
    %944 = vmatpush1.msra.mxu0 0.0
    %945 = vmatprep.subr.mxu0 0.0
    %946 = vmatpush1.msra.mxu0 0.0
    %947 = vmatprep.subr.mxu0 0.0
    %948 = vmatpush1.msra.mxu0 0.0
    %949 = vmatprep.subr.mxu0 0.0
    %950 = vmatpush1.msra.mxu0 0.0
    %951 = vmatprep.subr.mxu0 0.0
    %952 = vmatpush1.msra.mxu0 0.0
    %953 = vmatprep.subr.mxu0 0.0
    %954 = vmatpush1.msra.mxu0 0.0
    %955 = vmatprep.subr.mxu0 0.0
    %956 = vmatpush1.msra.mxu0 0.0
    %957 = vmatprep.subr.mxu0 0.0
    %958 = vmatpush1.msra.mxu0 0.0
    %959 = vmatprep.subr.mxu0 0.0
    %960 = vmatpush1.msra.mxu0 0.0
    %961 = vmatprep.subr.mxu0 0.0
    %962 = vmatpush1.msra.mxu0 0.0
    %963 = vmatprep.subr.mxu0 0.0
    %964 = vmatpush1.msra.mxu0 0.0
    %965 = vmatprep.subr.mxu0 0.0
    %966 = vmatpush1.msra.mxu0 0.0
    %967 = vmatprep.subr.mxu0 0.0
    %968 = vmatpush1.msra.mxu0 0.0
    %969 = vmatprep.subr.mxu0 0.0
    %970 = vmatpush1.msra.mxu0 0.0
    %971 = vmatprep.subr.mxu0 0.0
    %v972 = vand.u32 %v51, 4294901760
    %973 = vmatpush1.msra.mxu0 %v972
    %974 = vmatprep.subr.mxu0 0.0
    %975 = vmatpush2.msra.mxu0 0.0
    %976 = vmatprep.subr.mxu0 0.0
    %977 = vmatpush2.msra.mxu0 0.0
    %978 = vmatprep.subr.mxu0 0.0
    %979 = vmatpush2.msra.mxu0 0.0
    %980 = vmatprep.subr.mxu0 0.0
    %981 = vmatpush2.msra.mxu0 0.0
    %982 = vmatprep.subr.mxu0 0.0
    %983 = vmatpush2.msra.mxu0 0.0
    %984 = vmatprep.subr.mxu0 0.0
    %985 = vmatpush2.msra.mxu0 0.0
    %986 = vmatprep.subr.mxu0 0.0
    %987 = vmatpush2.msra.mxu0 0.0
    %988 = vmatprep.subr.mxu0 0.0
    %989 = vmatpush2.msra.mxu0 0.0
    %990 = vmatprep.subr.mxu0 0.0
    %991 = vmatpush2.msra.mxu0 0.0
    %992 = vmatprep.subr.mxu0 0.0
    %993 = vmatpush2.msra.mxu0 0.0
    %994 = vmatprep.subr.mxu0 0.0
    %995 = vmatpush2.msra.mxu0 0.0
    %996 = vmatprep.subr.mxu0 0.0
    %997 = vmatpush2.msra.mxu0 0.0
    %998 = vmatprep.subr.mxu0 0.0
    %999 = vmatpush2.msra.mxu0 0.0
    %1000 = vmatprep.subr.mxu0 0.0
    %1001 = vmatpush2.msra.mxu0 0.0
    %1002 = vmatprep.subr.mxu0 0.0
    %1003 = vmatpush2.msra.mxu0 0.0
    %1004 = vmatprep.subr.mxu0 0.0
    %1005 = vmatpush2.msra.mxu0 0.0
    %1006 = vmatprep.mubr.f32.mxu0 0.0
    %v1007 = vand.u32 %v60, 4294901760
    %v1008 = vsub.f32 %v60, %v1007
    %v1009 = vand.u32 %v1008, 4294901760
    %1010 = vmatmul.mubr.f32.gmra.mxu0 %v1009
    %v1011 = vpop.f32.mrf.mxu0
    %v1012 = vadd.f32 %v917, %v1011
    %v1013 = vpop.f32.mrf.mxu0
    %1014 = vmatprep.mubr.f32.mxu0 0.0
    %v1015 = vand.u32 %v63, 4294901760
    %v1016 = vsub.f32 %v63, %v1015
    %v1017 = vand.u32 %v1016, 4294901760
    %1018 = vmatmul.mubr.f32.gmra.mxu0 %v1017
    %v1019 = vpop.f32.mrf.mxu0
    %v1020 = vadd.f32 %v924, %v1019
    %v1021 = vpop.f32.mrf.mxu0
    %1022 = vmatprep.mubr.f32.mxu0 0.0
    %v1023 = vand.u32 %v66, 4294901760
    %v1024 = vsub.f32 %v66, %v1023
    %v1025 = vand.u32 %v1024, 4294901760
    %1026 = vmatmul.mubr.f32.gmra.mxu0 %v1025
    %v1027 = vpop.f32.mrf.mxu0
    %v1028 = vadd.f32 %v931, %v1027
    %v1029 = vpop.f32.mrf.mxu0
    %1030 = vmatprep.mubr.f32.mxu0 0.0
    %v1031 = vand.u32 %v69, 4294901760
    %v1032 = vsub.f32 %v69, %v1031
    %v1033 = vand.u32 %v1032, 4294901760
    %1034 = vmatmul.mubr.f32.gmra.mxu0 %v1033
    %v1035 = vpop.f32.mrf.mxu0
    %v1036 = vadd.f32 %v938, %v1035
    %v1037 = vpop.f32.mrf.mxu0
    %1038 = vdwg.mxu0
    %1039 = vmatprep.subr.mxu0 0.0
    %1040 = vmatpush1.msra.mxu0 0.0
    %1041 = vmatprep.subr.mxu0 0.0
    %1042 = vmatpush1.msra.mxu0 0.0
    %1043 = vmatprep.subr.mxu0 0.0
    %1044 = vmatpush1.msra.mxu0 0.0
    %1045 = vmatprep.subr.mxu0 0.0
    %1046 = vmatpush1.msra.mxu0 0.0
    %1047 = vmatprep.subr.mxu0 0.0
    %1048 = vmatpush1.msra.mxu0 0.0
    %1049 = vmatprep.subr.mxu0 0.0
    %1050 = vmatpush1.msra.mxu0 0.0
    %1051 = vmatprep.subr.mxu0 0.0
    %1052 = vmatpush1.msra.mxu0 0.0
    %1053 = vmatprep.subr.mxu0 0.0
    %1054 = vmatpush1.msra.mxu0 0.0
    %1055 = vmatprep.subr.mxu0 0.0
    %1056 = vmatpush1.msra.mxu0 0.0
    %1057 = vmatprep.subr.mxu0 0.0
    %1058 = vmatpush1.msra.mxu0 0.0
    %1059 = vmatprep.subr.mxu0 0.0
    %1060 = vmatpush1.msra.mxu0 0.0
    %1061 = vmatprep.subr.mxu0 0.0
    %1062 = vmatpush1.msra.mxu0 0.0
    %1063 = vmatprep.subr.mxu0 0.0
    %1064 = vmatpush1.msra.mxu0 0.0
    %1065 = vmatprep.subr.mxu0 0.0
    %1066 = vmatpush1.msra.mxu0 0.0
    %1067 = vmatprep.subr.mxu0 0.0
    %1068 = vmatpush1.msra.mxu0 0.0
    %1069 = vmatprep.subr.mxu0 0.0
    %v1070 = vand.u32 %v51, 4294901760
    %v1071 = vsub.f32 %v51, %v1070
    %v1072 = vand.u32 %v1071, 4294901760
    %1073 = vmatpush1.msra.mxu0 %v1072
    %1074 = vmatprep.subr.mxu0 0.0
    %1075 = vmatpush2.msra.mxu0 0.0
    %1076 = vmatprep.subr.mxu0 0.0
    %1077 = vmatpush2.msra.mxu0 0.0
    %1078 = vmatprep.subr.mxu0 0.0
    %1079 = vmatpush2.msra.mxu0 0.0
    %1080 = vmatprep.subr.mxu0 0.0
    %1081 = vmatpush2.msra.mxu0 0.0
    %1082 = vmatprep.subr.mxu0 0.0
    %1083 = vmatpush2.msra.mxu0 0.0
    %1084 = vmatprep.subr.mxu0 0.0
    %1085 = vmatpush2.msra.mxu0 0.0
    %1086 = vmatprep.subr.mxu0 0.0
    %1087 = vmatpush2.msra.mxu0 0.0
    %1088 = vmatprep.subr.mxu0 0.0
    %1089 = vmatpush2.msra.mxu0 0.0
    %1090 = vmatprep.subr.mxu0 0.0
    %1091 = vmatpush2.msra.mxu0 0.0
    %1092 = vmatprep.subr.mxu0 0.0
    %1093 = vmatpush2.msra.mxu0 0.0
    %1094 = vmatprep.subr.mxu0 0.0
    %1095 = vmatpush2.msra.mxu0 0.0
    %1096 = vmatprep.subr.mxu0 0.0
    %1097 = vmatpush2.msra.mxu0 0.0
    %1098 = vmatprep.subr.mxu0 0.0
    %1099 = vmatpush2.msra.mxu0 0.0
    %1100 = vmatprep.subr.mxu0 0.0
    %1101 = vmatpush2.msra.mxu0 0.0
    %1102 = vmatprep.subr.mxu0 0.0
    %1103 = vmatpush2.msra.mxu0 0.0
    %1104 = vmatprep.subr.mxu0 0.0
    %1105 = vmatpush2.msra.mxu0 0.0
    %1106 = vmatprep.mubr.f32.mxu0 0.0
    %v1107 = vand.u32 %v60, 4294901760
    %1108 = vmatmul.mubr.f32.gmra.mxu0 %v1107
    %v1109 = vpop.f32.mrf.mxu0
    %v1110 = vadd.f32 %v1012, %v1109
    %v1111 = vpop.f32.mrf.mxu0
    %1112 = vmatprep.mubr.f32.mxu0 0.0
    %v1113 = vand.u32 %v63, 4294901760
    %1114 = vmatmul.mubr.f32.gmra.mxu0 %v1113
    %v1115 = vpop.f32.mrf.mxu0
    %v1116 = vadd.f32 %v1020, %v1115
    %v1117 = vpop.f32.mrf.mxu0
    %1118 = vmatprep.mubr.f32.mxu0 0.0
    %v1119 = vand.u32 %v66, 4294901760
    %1120 = vmatmul.mubr.f32.gmra.mxu0 %v1119
    %v1121 = vpop.f32.mrf.mxu0
    %v1122 = vadd.f32 %v1028, %v1121
    %v1123 = vpop.f32.mrf.mxu0
    %1124 = vmatprep.mubr.f32.mxu0 0.0
    %v1125 = vand.u32 %v69, 4294901760
    %1126 = vmatmul.mubr.f32.gmra.mxu0 %v1125
    %v1127 = vpop.f32.mrf.mxu0
    %v1128 = vadd.f32 %v1036, %v1127
    %v1129 = vpop.f32.mrf.mxu0
    %1130 = vdwg.mxu0
    %1131 = vmatprep.subr.mxu0 0.0
    %1132 = vmatpush1.msra.mxu0 0.0
    %1133 = vmatprep.subr.mxu0 0.0
    %1134 = vmatpush1.msra.mxu0 0.0
    %1135 = vmatprep.subr.mxu0 0.0
    %1136 = vmatpush1.msra.mxu0 0.0
    %1137 = vmatprep.subr.mxu0 0.0
    %1138 = vmatpush1.msra.mxu0 0.0
    %1139 = vmatprep.subr.mxu0 0.0
    %1140 = vmatpush1.msra.mxu0 0.0
    %1141 = vmatprep.subr.mxu0 0.0
    %1142 = vmatpush1.msra.mxu0 0.0
    %1143 = vmatprep.subr.mxu0 0.0
    %1144 = vmatpush1.msra.mxu0 0.0
    %1145 = vmatprep.subr.mxu0 0.0
    %1146 = vmatpush1.msra.mxu0 0.0
    %1147 = vmatprep.subr.mxu0 0.0
    %1148 = vmatpush1.msra.mxu0 0.0
    %1149 = vmatprep.subr.mxu0 0.0
    %1150 = vmatpush1.msra.mxu0 0.0
    %1151 = vmatprep.subr.mxu0 0.0
    %1152 = vmatpush1.msra.mxu0 0.0
    %1153 = vmatprep.subr.mxu0 0.0
    %1154 = vmatpush1.msra.mxu0 0.0
    %1155 = vmatprep.subr.mxu0 0.0
    %1156 = vmatpush1.msra.mxu0 0.0
    %1157 = vmatprep.subr.mxu0 0.0
    %1158 = vmatpush1.msra.mxu0 0.0
    %1159 = vmatprep.subr.mxu0 0.0
    %1160 = vmatpush1.msra.mxu0 0.0
    %1161 = vmatprep.subr.mxu0 0.0
    %v1162 = vand.u32 %v51, 4294901760
    %1163 = vmatpush1.msra.mxu0 %v1162
    %1164 = vmatprep.subr.mxu0 0.0
    %1165 = vmatpush2.msra.mxu0 0.0
    %1166 = vmatprep.subr.mxu0 0.0
    %1167 = vmatpush2.msra.mxu0 0.0
    %1168 = vmatprep.subr.mxu0 0.0
    %1169 = vmatpush2.msra.mxu0 0.0
    %1170 = vmatprep.subr.mxu0 0.0
    %1171 = vmatpush2.msra.mxu0 0.0
    %1172 = vmatprep.subr.mxu0 0.0
    %1173 = vmatpush2.msra.mxu0 0.0
    %1174 = vmatprep.subr.mxu0 0.0
    %1175 = vmatpush2.msra.mxu0 0.0
    %1176 = vmatprep.subr.mxu0 0.0
    %1177 = vmatpush2.msra.mxu0 0.0
    %1178 = vmatprep.subr.mxu0 0.0
    %1179 = vmatpush2.msra.mxu0 0.0
    %1180 = vmatprep.subr.mxu0 0.0
    %1181 = vmatpush2.msra.mxu0 0.0
    %1182 = vmatprep.subr.mxu0 0.0
    %1183 = vmatpush2.msra.mxu0 0.0
    %1184 = vmatprep.subr.mxu0 0.0
    %1185 = vmatpush2.msra.mxu0 0.0
    %1186 = vmatprep.subr.mxu0 0.0
    %1187 = vmatpush2.msra.mxu0 0.0
    %1188 = vmatprep.subr.mxu0 0.0
    %1189 = vmatpush2.msra.mxu0 0.0
    %1190 = vmatprep.subr.mxu0 0.0
    %1191 = vmatpush2.msra.mxu0 0.0
    %1192 = vmatprep.subr.mxu0 0.0
    %1193 = vmatpush2.msra.mxu0 0.0
    %1194 = vmatprep.subr.mxu0 0.0
    %1195 = vmatpush2.msra.mxu0 0.0
    %1196 = vmatprep.mubr.f32.mxu0 0.0
    %v1197 = vand.u32 %v60, 4294901760
    %1198 = vmatmul.mubr.f32.gmra.mxu0 %v1197
    %v1199 = vpop.f32.mrf.mxu0
    %v1200 = vadd.f32 %v1110, %v1199
    %v1201 = vpop.f32.mrf.mxu0
    %1202 = vmatprep.mubr.f32.mxu0 0.0
    %v1203 = vand.u32 %v63, 4294901760
    %1204 = vmatmul.mubr.f32.gmra.mxu0 %v1203
    %v1205 = vpop.f32.mrf.mxu0
    %v1206 = vadd.f32 %v1116, %v1205
    %v1207 = vpop.f32.mrf.mxu0
    %1208 = vmatprep.mubr.f32.mxu0 0.0
    %v1209 = vand.u32 %v66, 4294901760
    %1210 = vmatmul.mubr.f32.gmra.mxu0 %v1209
    %v1211 = vpop.f32.mrf.mxu0
    %v1212 = vadd.f32 %v1122, %v1211
    %v1213 = vpop.f32.mrf.mxu0
    %1214 = vmatprep.mubr.f32.mxu0 0.0
    %v1215 = vand.u32 %v69, 4294901760
    %1216 = vmatmul.mubr.f32.gmra.mxu0 %v1215
    %v1217 = vpop.f32.mrf.mxu0
    %v1218 = vadd.f32 %v1128, %v1217
    %v1219 = vpop.f32.mrf.mxu0
    %1220 = vdwg.mxu0
    %1221 = vmatprep.subr.mxu0 0.0
    %1222 = vmatpush1.msra.mxu0 0.0
    %1223 = vmatprep.subr.mxu0 0.0
    %1224 = vmatpush1.msra.mxu0 0.0
    %1225 = vmatprep.subr.mxu0 0.0
    %1226 = vmatpush1.msra.mxu0 0.0
    %1227 = vmatprep.subr.mxu0 0.0
    %1228 = vmatpush1.msra.mxu0 0.0
    %1229 = vmatprep.subr.mxu0 0.0
    %1230 = vmatpush1.msra.mxu0 0.0
    %1231 = vmatprep.subr.mxu0 0.0
    %1232 = vmatpush1.msra.mxu0 0.0
    %1233 = vmatprep.subr.mxu0 0.0
    %1234 = vmatpush1.msra.mxu0 0.0
    %1235 = vmatprep.subr.mxu0 0.0
    %1236 = vmatpush1.msra.mxu0 0.0
    %1237 = vmatprep.subr.mxu0 0.0
    %1238 = vmatpush1.msra.mxu0 0.0
    %1239 = vmatprep.subr.mxu0 0.0
    %1240 = vmatpush1.msra.mxu0 0.0
    %1241 = vmatprep.subr.mxu0 0.0
    %1242 = vmatpush1.msra.mxu0 0.0
    %1243 = vmatprep.subr.mxu0 0.0
    %1244 = vmatpush1.msra.mxu0 0.0
    %1245 = vmatprep.subr.mxu0 0.0
    %1246 = vmatpush1.msra.mxu0 0.0
    %1247 = vmatprep.subr.mxu0 0.0
    %1248 = vmatpush1.msra.mxu0 0.0
    %1249 = vmatprep.subr.mxu0 0.0
    %1250 = vmatpush1.msra.mxu0 0.0
    %1251 = vmatprep.subr.mxu0 0.0
    %v1252 = vand.u32 %v52, 4294901760
    %1253 = vmatpush1.msra.mxu0 %v1252
    %1254 = vmatprep.subr.mxu0 0.0
    %1255 = vmatpush2.msra.mxu0 0.0
    %1256 = vmatprep.subr.mxu0 0.0
    %1257 = vmatpush2.msra.mxu0 0.0
    %1258 = vmatprep.subr.mxu0 0.0
    %1259 = vmatpush2.msra.mxu0 0.0
    %1260 = vmatprep.subr.mxu0 0.0
    %1261 = vmatpush2.msra.mxu0 0.0
    %1262 = vmatprep.subr.mxu0 0.0
    %1263 = vmatpush2.msra.mxu0 0.0
    %1264 = vmatprep.subr.mxu0 0.0
    %1265 = vmatpush2.msra.mxu0 0.0
    %1266 = vmatprep.subr.mxu0 0.0
    %1267 = vmatpush2.msra.mxu0 0.0
    %1268 = vmatprep.subr.mxu0 0.0
    %1269 = vmatpush2.msra.mxu0 0.0
    %1270 = vmatprep.subr.mxu0 0.0
    %1271 = vmatpush2.msra.mxu0 0.0
    %1272 = vmatprep.subr.mxu0 0.0
    %1273 = vmatpush2.msra.mxu0 0.0
    %1274 = vmatprep.subr.mxu0 0.0
    %1275 = vmatpush2.msra.mxu0 0.0
    %1276 = vmatprep.subr.mxu0 0.0
    %1277 = vmatpush2.msra.mxu0 0.0
    %1278 = vmatprep.subr.mxu0 0.0
    %1279 = vmatpush2.msra.mxu0 0.0
    %1280 = vmatprep.subr.mxu0 0.0
    %1281 = vmatpush2.msra.mxu0 0.0
    %1282 = vmatprep.subr.mxu0 0.0
    %1283 = vmatpush2.msra.mxu0 0.0
    %1284 = vmatprep.subr.mxu0 0.0
    %1285 = vmatpush2.msra.mxu0 0.0
    %1286 = vmatprep.mubr.f32.mxu0 0.0
    %v1287 = vand.u32 %v60, 4294901760
    %v1288 = vsub.f32 %v60, %v1287
    %v1289 = vand.u32 %v1288, 4294901760
    %v1290 = vsub.f32 %v1288, %v1289
    %v1291 = vand.u32 %v1290, 4294901760
    %1292 = vmatmul.mubr.f32.gmra.mxu0 %v1291
    %v1293 = vpop.f32.mrf.mxu0
    %v1294 = vadd.f32 0.0, %v1293
    %v1295 = vpop.f32.mrf.mxu0
    %1296 = vmatprep.mubr.f32.mxu0 0.0
    %v1297 = vand.u32 %v63, 4294901760
    %v1298 = vsub.f32 %v63, %v1297
    %v1299 = vand.u32 %v1298, 4294901760
    %v1300 = vsub.f32 %v1298, %v1299
    %v1301 = vand.u32 %v1300, 4294901760
    %1302 = vmatmul.mubr.f32.gmra.mxu0 %v1301
    %v1303 = vpop.f32.mrf.mxu0
    %v1304 = vadd.f32 0.0, %v1303
    %v1305 = vpop.f32.mrf.mxu0
    %1306 = vmatprep.mubr.f32.mxu0 0.0
    %v1307 = vand.u32 %v66, 4294901760
    %v1308 = vsub.f32 %v66, %v1307
    %v1309 = vand.u32 %v1308, 4294901760
    %v1310 = vsub.f32 %v1308, %v1309
    %v1311 = vand.u32 %v1310, 4294901760
    %1312 = vmatmul.mubr.f32.gmra.mxu0 %v1311
    %v1313 = vpop.f32.mrf.mxu0
    %v1314 = vadd.f32 0.0, %v1313
    %v1315 = vpop.f32.mrf.mxu0
    %1316 = vmatprep.mubr.f32.mxu0 0.0
    %v1317 = vand.u32 %v69, 4294901760
    %v1318 = vsub.f32 %v69, %v1317
    %v1319 = vand.u32 %v1318, 4294901760
    %v1320 = vsub.f32 %v1318, %v1319
    %v1321 = vand.u32 %v1320, 4294901760
    %1322 = vmatmul.mubr.f32.gmra.mxu0 %v1321
    %v1323 = vpop.f32.mrf.mxu0
    %v1324 = vadd.f32 0.0, %v1323
    %v1325 = vpop.f32.mrf.mxu0
    %1326 = vdwg.mxu0
    %1327 = vmatprep.subr.mxu0 0.0
    %1328 = vmatpush1.msra.mxu0 0.0
    %1329 = vmatprep.subr.mxu0 0.0
    %1330 = vmatpush1.msra.mxu0 0.0
    %1331 = vmatprep.subr.mxu0 0.0
    %1332 = vmatpush1.msra.mxu0 0.0
    %1333 = vmatprep.subr.mxu0 0.0
    %1334 = vmatpush1.msra.mxu0 0.0
    %1335 = vmatprep.subr.mxu0 0.0
    %1336 = vmatpush1.msra.mxu0 0.0
    %1337 = vmatprep.subr.mxu0 0.0
    %1338 = vmatpush1.msra.mxu0 0.0
    %1339 = vmatprep.subr.mxu0 0.0
    %1340 = vmatpush1.msra.mxu0 0.0
    %1341 = vmatprep.subr.mxu0 0.0
    %1342 = vmatpush1.msra.mxu0 0.0
    %1343 = vmatprep.subr.mxu0 0.0
    %1344 = vmatpush1.msra.mxu0 0.0
    %1345 = vmatprep.subr.mxu0 0.0
    %1346 = vmatpush1.msra.mxu0 0.0
    %1347 = vmatprep.subr.mxu0 0.0
    %1348 = vmatpush1.msra.mxu0 0.0
    %1349 = vmatprep.subr.mxu0 0.0
    %1350 = vmatpush1.msra.mxu0 0.0
    %1351 = vmatprep.subr.mxu0 0.0
    %1352 = vmatpush1.msra.mxu0 0.0
    %1353 = vmatprep.subr.mxu0 0.0
    %1354 = vmatpush1.msra.mxu0 0.0
    %1355 = vmatprep.subr.mxu0 0.0
    %1356 = vmatpush1.msra.mxu0 0.0
    %1357 = vmatprep.subr.mxu0 0.0
    %v1358 = vand.u32 %v52, 4294901760
    %v1359 = vsub.f32 %v52, %v1358
    %v1360 = vand.u32 %v1359, 4294901760
    %v1361 = vsub.f32 %v1359, %v1360
    %v1362 = vand.u32 %v1361, 4294901760
    %1363 = vmatpush1.msra.mxu0 %v1362
    %1364 = vmatprep.subr.mxu0 0.0
    %1365 = vmatpush2.msra.mxu0 0.0
    %1366 = vmatprep.subr.mxu0 0.0
    %1367 = vmatpush2.msra.mxu0 0.0
    %1368 = vmatprep.subr.mxu0 0.0
    %1369 = vmatpush2.msra.mxu0 0.0
    %1370 = vmatprep.subr.mxu0 0.0
    %1371 = vmatpush2.msra.mxu0 0.0
    %1372 = vmatprep.subr.mxu0 0.0
    %1373 = vmatpush2.msra.mxu0 0.0
    %1374 = vmatprep.subr.mxu0 0.0
    %1375 = vmatpush2.msra.mxu0 0.0
    %1376 = vmatprep.subr.mxu0 0.0
    %1377 = vmatpush2.msra.mxu0 0.0
    %1378 = vmatprep.subr.mxu0 0.0
    %1379 = vmatpush2.msra.mxu0 0.0
    %1380 = vmatprep.subr.mxu0 0.0
    %1381 = vmatpush2.msra.mxu0 0.0
    %1382 = vmatprep.subr.mxu0 0.0
    %1383 = vmatpush2.msra.mxu0 0.0
    %1384 = vmatprep.subr.mxu0 0.0
    %1385 = vmatpush2.msra.mxu0 0.0
    %1386 = vmatprep.subr.mxu0 0.0
    %1387 = vmatpush2.msra.mxu0 0.0
    %1388 = vmatprep.subr.mxu0 0.0
    %1389 = vmatpush2.msra.mxu0 0.0
    %1390 = vmatprep.subr.mxu0 0.0
    %1391 = vmatpush2.msra.mxu0 0.0
    %1392 = vmatprep.subr.mxu0 0.0
    %1393 = vmatpush2.msra.mxu0 0.0
    %1394 = vmatprep.subr.mxu0 0.0
    %1395 = vmatpush2.msra.mxu0 0.0
    %1396 = vmatprep.mubr.f32.mxu0 0.0
    %v1397 = vand.u32 %v60, 4294901760
    %1398 = vmatmul.mubr.f32.gmra.mxu0 %v1397
    %v1399 = vpop.f32.mrf.mxu0
    %v1400 = vadd.f32 %v1294, %v1399
    %v1401 = vpop.f32.mrf.mxu0
    %1402 = vmatprep.mubr.f32.mxu0 0.0
    %v1403 = vand.u32 %v63, 4294901760
    %1404 = vmatmul.mubr.f32.gmra.mxu0 %v1403
    %v1405 = vpop.f32.mrf.mxu0
    %v1406 = vadd.f32 %v1304, %v1405
    %v1407 = vpop.f32.mrf.mxu0
    %1408 = vmatprep.mubr.f32.mxu0 0.0
    %v1409 = vand.u32 %v66, 4294901760
    %1410 = vmatmul.mubr.f32.gmra.mxu0 %v1409
    %v1411 = vpop.f32.mrf.mxu0
    %v1412 = vadd.f32 %v1314, %v1411
    %v1413 = vpop.f32.mrf.mxu0
    %1414 = vmatprep.mubr.f32.mxu0 0.0
    %v1415 = vand.u32 %v69, 4294901760
    %1416 = vmatmul.mubr.f32.gmra.mxu0 %v1415
    %v1417 = vpop.f32.mrf.mxu0
    %v1418 = vadd.f32 %v1324, %v1417
    %v1419 = vpop.f32.mrf.mxu0
    %1420 = vdwg.mxu0
    %1421 = vmatprep.subr.mxu0 0.0
    %1422 = vmatpush1.msra.mxu0 0.0
    %1423 = vmatprep.subr.mxu0 0.0
    %1424 = vmatpush1.msra.mxu0 0.0
    %1425 = vmatprep.subr.mxu0 0.0
    %1426 = vmatpush1.msra.mxu0 0.0
    %1427 = vmatprep.subr.mxu0 0.0
    %1428 = vmatpush1.msra.mxu0 0.0
    %1429 = vmatprep.subr.mxu0 0.0
    %1430 = vmatpush1.msra.mxu0 0.0
    %1431 = vmatprep.subr.mxu0 0.0
    %1432 = vmatpush1.msra.mxu0 0.0
    %1433 = vmatprep.subr.mxu0 0.0
    %1434 = vmatpush1.msra.mxu0 0.0
    %1435 = vmatprep.subr.mxu0 0.0
    %1436 = vmatpush1.msra.mxu0 0.0
    %1437 = vmatprep.subr.mxu0 0.0
    %1438 = vmatpush1.msra.mxu0 0.0
    %1439 = vmatprep.subr.mxu0 0.0
    %1440 = vmatpush1.msra.mxu0 0.0
    %1441 = vmatprep.subr.mxu0 0.0
    %1442 = vmatpush1.msra.mxu0 0.0
    %1443 = vmatprep.subr.mxu0 0.0
    %1444 = vmatpush1.msra.mxu0 0.0
    %1445 = vmatprep.subr.mxu0 0.0
    %1446 = vmatpush1.msra.mxu0 0.0
    %1447 = vmatprep.subr.mxu0 0.0
    %1448 = vmatpush1.msra.mxu0 0.0
    %1449 = vmatprep.subr.mxu0 0.0
    %1450 = vmatpush1.msra.mxu0 0.0
    %1451 = vmatprep.subr.mxu0 0.0
    %v1452 = vand.u32 %v52, 4294901760
    %v1453 = vsub.f32 %v52, %v1452
    %1454 = vmatpush1.msra.mxu0 %v1453
    %1455 = vmatprep.subr.mxu0 0.0
    %1456 = vmatpush2.msra.mxu0 0.0
    %1457 = vmatprep.subr.mxu0 0.0
    %1458 = vmatpush2.msra.mxu0 0.0
    %1459 = vmatprep.subr.mxu0 0.0
    %1460 = vmatpush2.msra.mxu0 0.0
    %1461 = vmatprep.subr.mxu0 0.0
    %1462 = vmatpush2.msra.mxu0 0.0
    %1463 = vmatprep.subr.mxu0 0.0
    %1464 = vmatpush2.msra.mxu0 0.0
    %1465 = vmatprep.subr.mxu0 0.0
    %1466 = vmatpush2.msra.mxu0 0.0
    %1467 = vmatprep.subr.mxu0 0.0
    %1468 = vmatpush2.msra.mxu0 0.0
    %1469 = vmatprep.subr.mxu0 0.0
    %1470 = vmatpush2.msra.mxu0 0.0
    %1471 = vmatprep.subr.mxu0 0.0
    %1472 = vmatpush2.msra.mxu0 0.0
    %1473 = vmatprep.subr.mxu0 0.0
    %1474 = vmatpush2.msra.mxu0 0.0
    %1475 = vmatprep.subr.mxu0 0.0
    %1476 = vmatpush2.msra.mxu0 0.0
    %1477 = vmatprep.subr.mxu0 0.0
    %1478 = vmatpush2.msra.mxu0 0.0
    %1479 = vmatprep.subr.mxu0 0.0
    %1480 = vmatpush2.msra.mxu0 0.0
    %1481 = vmatprep.subr.mxu0 0.0
    %1482 = vmatpush2.msra.mxu0 0.0
    %1483 = vmatprep.subr.mxu0 0.0
    %1484 = vmatpush2.msra.mxu0 0.0
    %1485 = vmatprep.subr.mxu0 0.0
    %1486 = vmatpush2.msra.mxu0 0.0
    %1487 = vmatprep.mubr.f32.mxu0 0.0
    %v1488 = vand.u32 %v60, 4294901760
    %v1489 = vsub.f32 %v60, %v1488
    %1490 = vmatmul.mubr.f32.gmra.mxu0 %v1489
    %v1491 = vpop.f32.mrf.mxu0
    %v1492 = vadd.f32 %v1400, %v1491
    %v1493 = vpop.f32.mrf.mxu0
    %1494 = vmatprep.mubr.f32.mxu0 0.0
    %v1495 = vand.u32 %v63, 4294901760
    %v1496 = vsub.f32 %v63, %v1495
    %1497 = vmatmul.mubr.f32.gmra.mxu0 %v1496
    %v1498 = vpop.f32.mrf.mxu0
    %v1499 = vadd.f32 %v1406, %v1498
    %v1500 = vpop.f32.mrf.mxu0
    %1501 = vmatprep.mubr.f32.mxu0 0.0
    %v1502 = vand.u32 %v66, 4294901760
    %v1503 = vsub.f32 %v66, %v1502
    %1504 = vmatmul.mubr.f32.gmra.mxu0 %v1503
    %v1505 = vpop.f32.mrf.mxu0
    %v1506 = vadd.f32 %v1412, %v1505
    %v1507 = vpop.f32.mrf.mxu0
    %1508 = vmatprep.mubr.f32.mxu0 0.0
    %v1509 = vand.u32 %v69, 4294901760
    %v1510 = vsub.f32 %v69, %v1509
    %1511 = vmatmul.mubr.f32.gmra.mxu0 %v1510
    %v1512 = vpop.f32.mrf.mxu0
    %v1513 = vadd.f32 %v1418, %v1512
    %v1514 = vpop.f32.mrf.mxu0
    %1515 = vdwg.mxu0
    %1516 = vmatprep.subr.mxu0 0.0
    %1517 = vmatpush1.msra.mxu0 0.0
    %1518 = vmatprep.subr.mxu0 0.0
    %1519 = vmatpush1.msra.mxu0 0.0
    %1520 = vmatprep.subr.mxu0 0.0
    %1521 = vmatpush1.msra.mxu0 0.0
    %1522 = vmatprep.subr.mxu0 0.0
    %1523 = vmatpush1.msra.mxu0 0.0
    %1524 = vmatprep.subr.mxu0 0.0
    %1525 = vmatpush1.msra.mxu0 0.0
    %1526 = vmatprep.subr.mxu0 0.0
    %1527 = vmatpush1.msra.mxu0 0.0
    %1528 = vmatprep.subr.mxu0 0.0
    %1529 = vmatpush1.msra.mxu0 0.0
    %1530 = vmatprep.subr.mxu0 0.0
    %1531 = vmatpush1.msra.mxu0 0.0
    %1532 = vmatprep.subr.mxu0 0.0
    %1533 = vmatpush1.msra.mxu0 0.0
    %1534 = vmatprep.subr.mxu0 0.0
    %1535 = vmatpush1.msra.mxu0 0.0
    %1536 = vmatprep.subr.mxu0 0.0
    %1537 = vmatpush1.msra.mxu0 0.0
    %1538 = vmatprep.subr.mxu0 0.0
    %1539 = vmatpush1.msra.mxu0 0.0
    %1540 = vmatprep.subr.mxu0 0.0
    %1541 = vmatpush1.msra.mxu0 0.0
    %1542 = vmatprep.subr.mxu0 0.0
    %1543 = vmatpush1.msra.mxu0 0.0
    %1544 = vmatprep.subr.mxu0 0.0
    %1545 = vmatpush1.msra.mxu0 0.0
    %1546 = vmatprep.subr.mxu0 0.0
    %v1547 = vand.u32 %v52, 4294901760
    %1548 = vmatpush1.msra.mxu0 %v1547
    %1549 = vmatprep.subr.mxu0 0.0
    %1550 = vmatpush2.msra.mxu0 0.0
    %1551 = vmatprep.subr.mxu0 0.0
    %1552 = vmatpush2.msra.mxu0 0.0
    %1553 = vmatprep.subr.mxu0 0.0
    %1554 = vmatpush2.msra.mxu0 0.0
    %1555 = vmatprep.subr.mxu0 0.0
    %1556 = vmatpush2.msra.mxu0 0.0
    %1557 = vmatprep.subr.mxu0 0.0
    %1558 = vmatpush2.msra.mxu0 0.0
    %1559 = vmatprep.subr.mxu0 0.0
    %1560 = vmatpush2.msra.mxu0 0.0
    %1561 = vmatprep.subr.mxu0 0.0
    %1562 = vmatpush2.msra.mxu0 0.0
    %1563 = vmatprep.subr.mxu0 0.0
    %1564 = vmatpush2.msra.mxu0 0.0
    %1565 = vmatprep.subr.mxu0 0.0
    %1566 = vmatpush2.msra.mxu0 0.0
    %1567 = vmatprep.subr.mxu0 0.0
    %1568 = vmatpush2.msra.mxu0 0.0
    %1569 = vmatprep.subr.mxu0 0.0
    %1570 = vmatpush2.msra.mxu0 0.0
    %1571 = vmatprep.subr.mxu0 0.0
    %1572 = vmatpush2.msra.mxu0 0.0
    %1573 = vmatprep.subr.mxu0 0.0
    %1574 = vmatpush2.msra.mxu0 0.0
    %1575 = vmatprep.subr.mxu0 0.0
    %1576 = vmatpush2.msra.mxu0 0.0
    %1577 = vmatprep.subr.mxu0 0.0
    %1578 = vmatpush2.msra.mxu0 0.0
    %1579 = vmatprep.subr.mxu0 0.0
    %1580 = vmatpush2.msra.mxu0 0.0
    %1581 = vmatprep.mubr.f32.mxu0 0.0
    %v1582 = vand.u32 %v60, 4294901760
    %v1583 = vsub.f32 %v60, %v1582
    %v1584 = vand.u32 %v1583, 4294901760
    %1585 = vmatmul.mubr.f32.gmra.mxu0 %v1584
    %v1586 = vpop.f32.mrf.mxu0
    %v1587 = vadd.f32 %v1492, %v1586
    %v1588 = vpop.f32.mrf.mxu0
    %1589 = vmatprep.mubr.f32.mxu0 0.0
    %v1590 = vand.u32 %v63, 4294901760
    %v1591 = vsub.f32 %v63, %v1590
    %v1592 = vand.u32 %v1591, 4294901760
    %1593 = vmatmul.mubr.f32.gmra.mxu0 %v1592
    %v1594 = vpop.f32.mrf.mxu0
    %v1595 = vadd.f32 %v1499, %v1594
    %v1596 = vpop.f32.mrf.mxu0
    %1597 = vmatprep.mubr.f32.mxu0 0.0
    %v1598 = vand.u32 %v66, 4294901760
    %v1599 = vsub.f32 %v66, %v1598
    %v1600 = vand.u32 %v1599, 4294901760
    %1601 = vmatmul.mubr.f32.gmra.mxu0 %v1600
    %v1602 = vpop.f32.mrf.mxu0
    %v1603 = vadd.f32 %v1506, %v1602
    %v1604 = vpop.f32.mrf.mxu0
    %1605 = vmatprep.mubr.f32.mxu0 0.0
    %v1606 = vand.u32 %v69, 4294901760
    %v1607 = vsub.f32 %v69, %v1606
    %v1608 = vand.u32 %v1607, 4294901760
    %1609 = vmatmul.mubr.f32.gmra.mxu0 %v1608
    %v1610 = vpop.f32.mrf.mxu0
    %v1611 = vadd.f32 %v1513, %v1610
    %v1612 = vpop.f32.mrf.mxu0
    %1613 = vdwg.mxu0
    %1614 = vmatprep.subr.mxu0 0.0
    %1615 = vmatpush1.msra.mxu0 0.0
    %1616 = vmatprep.subr.mxu0 0.0
    %1617 = vmatpush1.msra.mxu0 0.0
    %1618 = vmatprep.subr.mxu0 0.0
    %1619 = vmatpush1.msra.mxu0 0.0
    %1620 = vmatprep.subr.mxu0 0.0
    %1621 = vmatpush1.msra.mxu0 0.0
    %1622 = vmatprep.subr.mxu0 0.0
    %1623 = vmatpush1.msra.mxu0 0.0
    %1624 = vmatprep.subr.mxu0 0.0
    %1625 = vmatpush1.msra.mxu0 0.0
    %1626 = vmatprep.subr.mxu0 0.0
    %1627 = vmatpush1.msra.mxu0 0.0
    %1628 = vmatprep.subr.mxu0 0.0
    %1629 = vmatpush1.msra.mxu0 0.0
    %1630 = vmatprep.subr.mxu0 0.0
    %1631 = vmatpush1.msra.mxu0 0.0
    %1632 = vmatprep.subr.mxu0 0.0
    %1633 = vmatpush1.msra.mxu0 0.0
    %1634 = vmatprep.subr.mxu0 0.0
    %1635 = vmatpush1.msra.mxu0 0.0
    %1636 = vmatprep.subr.mxu0 0.0
    %1637 = vmatpush1.msra.mxu0 0.0
    %1638 = vmatprep.subr.mxu0 0.0
    %1639 = vmatpush1.msra.mxu0 0.0
    %1640 = vmatprep.subr.mxu0 0.0
    %1641 = vmatpush1.msra.mxu0 0.0
    %1642 = vmatprep.subr.mxu0 0.0
    %1643 = vmatpush1.msra.mxu0 0.0
    %1644 = vmatprep.subr.mxu0 0.0
    %v1645 = vand.u32 %v52, 4294901760
    %v1646 = vsub.f32 %v52, %v1645
    %v1647 = vand.u32 %v1646, 4294901760
    %1648 = vmatpush1.msra.mxu0 %v1647
    %1649 = vmatprep.subr.mxu0 0.0
    %1650 = vmatpush2.msra.mxu0 0.0
    %1651 = vmatprep.subr.mxu0 0.0
    %1652 = vmatpush2.msra.mxu0 0.0
    %1653 = vmatprep.subr.mxu0 0.0
    %1654 = vmatpush2.msra.mxu0 0.0
    %1655 = vmatprep.subr.mxu0 0.0
    %1656 = vmatpush2.msra.mxu0 0.0
    %1657 = vmatprep.subr.mxu0 0.0
    %1658 = vmatpush2.msra.mxu0 0.0
    %1659 = vmatprep.subr.mxu0 0.0
    %1660 = vmatpush2.msra.mxu0 0.0
    %1661 = vmatprep.subr.mxu0 0.0
    %1662 = vmatpush2.msra.mxu0 0.0
    %1663 = vmatprep.subr.mxu0 0.0
    %1664 = vmatpush2.msra.mxu0 0.0
    %1665 = vmatprep.subr.mxu0 0.0
    %1666 = vmatpush2.msra.mxu0 0.0
    %1667 = vmatprep.subr.mxu0 0.0
    %1668 = vmatpush2.msra.mxu0 0.0
    %1669 = vmatprep.subr.mxu0 0.0
    %1670 = vmatpush2.msra.mxu0 0.0
    %1671 = vmatprep.subr.mxu0 0.0
    %1672 = vmatpush2.msra.mxu0 0.0
    %1673 = vmatprep.subr.mxu0 0.0
    %1674 = vmatpush2.msra.mxu0 0.0
    %1675 = vmatprep.subr.mxu0 0.0
    %1676 = vmatpush2.msra.mxu0 0.0
    %1677 = vmatprep.subr.mxu0 0.0
    %1678 = vmatpush2.msra.mxu0 0.0
    %1679 = vmatprep.subr.mxu0 0.0
    %1680 = vmatpush2.msra.mxu0 0.0
    %1681 = vmatprep.mubr.f32.mxu0 0.0
    %v1682 = vand.u32 %v60, 4294901760
    %1683 = vmatmul.mubr.f32.gmra.mxu0 %v1682
    %v1684 = vpop.f32.mrf.mxu0
    %v1685 = vadd.f32 %v1587, %v1684
    %v1686 = vpop.f32.mrf.mxu0
    %1687 = vmatprep.mubr.f32.mxu0 0.0
    %v1688 = vand.u32 %v63, 4294901760
    %1689 = vmatmul.mubr.f32.gmra.mxu0 %v1688
    %v1690 = vpop.f32.mrf.mxu0
    %v1691 = vadd.f32 %v1595, %v1690
    %v1692 = vpop.f32.mrf.mxu0
    %1693 = vmatprep.mubr.f32.mxu0 0.0
    %v1694 = vand.u32 %v66, 4294901760
    %1695 = vmatmul.mubr.f32.gmra.mxu0 %v1694
    %v1696 = vpop.f32.mrf.mxu0
    %v1697 = vadd.f32 %v1603, %v1696
    %v1698 = vpop.f32.mrf.mxu0
    %1699 = vmatprep.mubr.f32.mxu0 0.0
    %v1700 = vand.u32 %v69, 4294901760
    %1701 = vmatmul.mubr.f32.gmra.mxu0 %v1700
    %v1702 = vpop.f32.mrf.mxu0
    %v1703 = vadd.f32 %v1611, %v1702
    %v1704 = vpop.f32.mrf.mxu0
    %1705 = vdwg.mxu0
    %1706 = vmatprep.subr.mxu0 0.0
    %1707 = vmatpush1.msra.mxu0 0.0
    %1708 = vmatprep.subr.mxu0 0.0
    %1709 = vmatpush1.msra.mxu0 0.0
    %1710 = vmatprep.subr.mxu0 0.0
    %1711 = vmatpush1.msra.mxu0 0.0
    %1712 = vmatprep.subr.mxu0 0.0
    %1713 = vmatpush1.msra.mxu0 0.0
    %1714 = vmatprep.subr.mxu0 0.0
    %1715 = vmatpush1.msra.mxu0 0.0
    %1716 = vmatprep.subr.mxu0 0.0
    %1717 = vmatpush1.msra.mxu0 0.0
    %1718 = vmatprep.subr.mxu0 0.0
    %1719 = vmatpush1.msra.mxu0 0.0
    %1720 = vmatprep.subr.mxu0 0.0
    %1721 = vmatpush1.msra.mxu0 0.0
    %1722 = vmatprep.subr.mxu0 0.0
    %1723 = vmatpush1.msra.mxu0 0.0
    %1724 = vmatprep.subr.mxu0 0.0
    %1725 = vmatpush1.msra.mxu0 0.0
    %1726 = vmatprep.subr.mxu0 0.0
    %1727 = vmatpush1.msra.mxu0 0.0
    %1728 = vmatprep.subr.mxu0 0.0
    %1729 = vmatpush1.msra.mxu0 0.0
    %1730 = vmatprep.subr.mxu0 0.0
    %1731 = vmatpush1.msra.mxu0 0.0
    %1732 = vmatprep.subr.mxu0 0.0
    %1733 = vmatpush1.msra.mxu0 0.0
    %1734 = vmatprep.subr.mxu0 0.0
    %1735 = vmatpush1.msra.mxu0 0.0
    %1736 = vmatprep.subr.mxu0 0.0
    %v1737 = vand.u32 %v52, 4294901760
    %1738 = vmatpush1.msra.mxu0 %v1737
    %1739 = vmatprep.subr.mxu0 0.0
    %1740 = vmatpush2.msra.mxu0 0.0
    %1741 = vmatprep.subr.mxu0 0.0
    %1742 = vmatpush2.msra.mxu0 0.0
    %1743 = vmatprep.subr.mxu0 0.0
    %1744 = vmatpush2.msra.mxu0 0.0
    %1745 = vmatprep.subr.mxu0 0.0
    %1746 = vmatpush2.msra.mxu0 0.0
    %1747 = vmatprep.subr.mxu0 0.0
    %1748 = vmatpush2.msra.mxu0 0.0
    %1749 = vmatprep.subr.mxu0 0.0
    %1750 = vmatpush2.msra.mxu0 0.0
    %1751 = vmatprep.subr.mxu0 0.0
    %1752 = vmatpush2.msra.mxu0 0.0
    %1753 = vmatprep.subr.mxu0 0.0
    %1754 = vmatpush2.msra.mxu0 0.0
    %1755 = vmatprep.subr.mxu0 0.0
    %1756 = vmatpush2.msra.mxu0 0.0
    %1757 = vmatprep.subr.mxu0 0.0
    %1758 = vmatpush2.msra.mxu0 0.0
    %1759 = vmatprep.subr.mxu0 0.0
    %1760 = vmatpush2.msra.mxu0 0.0
    %1761 = vmatprep.subr.mxu0 0.0
    %1762 = vmatpush2.msra.mxu0 0.0
    %1763 = vmatprep.subr.mxu0 0.0
    %1764 = vmatpush2.msra.mxu0 0.0
    %1765 = vmatprep.subr.mxu0 0.0
    %1766 = vmatpush2.msra.mxu0 0.0
    %1767 = vmatprep.subr.mxu0 0.0
    %1768 = vmatpush2.msra.mxu0 0.0
    %1769 = vmatprep.subr.mxu0 0.0
    %1770 = vmatpush2.msra.mxu0 0.0
    %1771 = vmatprep.mubr.f32.mxu0 0.0
    %v1772 = vand.u32 %v60, 4294901760
    %1773 = vmatmul.mubr.f32.gmra.mxu0 %v1772
    %v1774 = vpop.f32.mrf.mxu0
    %v1775 = vadd.f32 %v1685, %v1774
    %v1776 = vpop.f32.mrf.mxu0
    %1777 = vmatprep.mubr.f32.mxu0 0.0
    %v1778 = vand.u32 %v63, 4294901760
    %1779 = vmatmul.mubr.f32.gmra.mxu0 %v1778
    %v1780 = vpop.f32.mrf.mxu0
    %v1781 = vadd.f32 %v1691, %v1780
    %v1782 = vpop.f32.mrf.mxu0
    %1783 = vmatprep.mubr.f32.mxu0 0.0
    %v1784 = vand.u32 %v66, 4294901760
    %1785 = vmatmul.mubr.f32.gmra.mxu0 %v1784
    %v1786 = vpop.f32.mrf.mxu0
    %v1787 = vadd.f32 %v1697, %v1786
    %v1788 = vpop.f32.mrf.mxu0
    %1789 = vmatprep.mubr.f32.mxu0 0.0
    %v1790 = vand.u32 %v69, 4294901760
    %1791 = vmatmul.mubr.f32.gmra.mxu0 %v1790
    %v1792 = vpop.f32.mrf.mxu0
    %v1793 = vadd.f32 %v1703, %v1792
    %v1794 = vpop.f32.mrf.mxu0
    %1795 = vdwg.mxu0
    %1796 = vmatprep.subr.mxu0 0.0
    %1797 = vmatpush1.msra.mxu0 0.0
    %1798 = vmatprep.subr.mxu0 0.0
    %1799 = vmatpush1.msra.mxu0 0.0
    %1800 = vmatprep.subr.mxu0 0.0
    %1801 = vmatpush1.msra.mxu0 0.0
    %1802 = vmatprep.subr.mxu0 0.0
    %1803 = vmatpush1.msra.mxu0 0.0
    %1804 = vmatprep.subr.mxu0 0.0
    %1805 = vmatpush1.msra.mxu0 0.0
    %1806 = vmatprep.subr.mxu0 0.0
    %1807 = vmatpush1.msra.mxu0 0.0
    %1808 = vmatprep.subr.mxu0 0.0
    %1809 = vmatpush1.msra.mxu0 0.0
    %1810 = vmatprep.subr.mxu0 0.0
    %1811 = vmatpush1.msra.mxu0 0.0
    %1812 = vmatprep.subr.mxu0 0.0
    %1813 = vmatpush1.msra.mxu0 0.0
    %1814 = vmatprep.subr.mxu0 0.0
    %1815 = vmatpush1.msra.mxu0 0.0
    %1816 = vmatprep.subr.mxu0 0.0
    %1817 = vmatpush1.msra.mxu0 0.0
    %1818 = vmatprep.subr.mxu0 0.0
    %1819 = vmatpush1.msra.mxu0 0.0
    %1820 = vmatprep.subr.mxu0 0.0
    %1821 = vmatpush1.msra.mxu0 0.0
    %1822 = vmatprep.subr.mxu0 0.0
    %1823 = vmatpush1.msra.mxu0 0.0
    %1824 = vmatprep.subr.mxu0 0.0
    %1825 = vmatpush1.msra.mxu0 0.0
    %1826 = vmatprep.subr.mxu0 0.0
    %v1827 = vand.u32 %v53, 4294901760
    %1828 = vmatpush1.msra.mxu0 %v1827
    %1829 = vmatprep.subr.mxu0 0.0
    %1830 = vmatpush2.msra.mxu0 0.0
    %1831 = vmatprep.subr.mxu0 0.0
    %1832 = vmatpush2.msra.mxu0 0.0
    %1833 = vmatprep.subr.mxu0 0.0
    %1834 = vmatpush2.msra.mxu0 0.0
    %1835 = vmatprep.subr.mxu0 0.0
    %1836 = vmatpush2.msra.mxu0 0.0
    %1837 = vmatprep.subr.mxu0 0.0
    %1838 = vmatpush2.msra.mxu0 0.0
    %1839 = vmatprep.subr.mxu0 0.0
    %1840 = vmatpush2.msra.mxu0 0.0
    %1841 = vmatprep.subr.mxu0 0.0
    %1842 = vmatpush2.msra.mxu0 0.0
    %1843 = vmatprep.subr.mxu0 0.0
    %1844 = vmatpush2.msra.mxu0 0.0
    %1845 = vmatprep.subr.mxu0 0.0
    %1846 = vmatpush2.msra.mxu0 0.0
    %1847 = vmatprep.subr.mxu0 0.0
    %1848 = vmatpush2.msra.mxu0 0.0
    %1849 = vmatprep.subr.mxu0 0.0
    %1850 = vmatpush2.msra.mxu0 0.0
    %1851 = vmatprep.subr.mxu0 0.0
    %1852 = vmatpush2.msra.mxu0 0.0
    %1853 = vmatprep.subr.mxu0 0.0
    %1854 = vmatpush2.msra.mxu0 0.0
    %1855 = vmatprep.subr.mxu0 0.0
    %1856 = vmatpush2.msra.mxu0 0.0
    %1857 = vmatprep.subr.mxu0 0.0
    %1858 = vmatpush2.msra.mxu0 0.0
    %1859 = vmatprep.subr.mxu0 0.0
    %1860 = vmatpush2.msra.mxu0 0.0
    %1861 = vmatprep.mubr.f32.mxu0 0.0
    %v1862 = vand.u32 %v60, 4294901760
    %v1863 = vsub.f32 %v60, %v1862
    %v1864 = vand.u32 %v1863, 4294901760
    %v1865 = vsub.f32 %v1863, %v1864
    %v1866 = vand.u32 %v1865, 4294901760
    %1867 = vmatmul.mubr.f32.gmra.mxu0 %v1866
    %v1868 = vpop.f32.mrf.mxu0
    %v1869 = vadd.f32 0.0, %v1868
    %v1870 = vpop.f32.mrf.mxu0
    %1871 = vmatprep.mubr.f32.mxu0 0.0
    %v1872 = vand.u32 %v63, 4294901760
    %v1873 = vsub.f32 %v63, %v1872
    %v1874 = vand.u32 %v1873, 4294901760
    %v1875 = vsub.f32 %v1873, %v1874
    %v1876 = vand.u32 %v1875, 4294901760
    %1877 = vmatmul.mubr.f32.gmra.mxu0 %v1876
    %v1878 = vpop.f32.mrf.mxu0
    %v1879 = vadd.f32 0.0, %v1878
    %v1880 = vpop.f32.mrf.mxu0
    %1881 = vmatprep.mubr.f32.mxu0 0.0
    %v1882 = vand.u32 %v66, 4294901760
    %v1883 = vsub.f32 %v66, %v1882
    %v1884 = vand.u32 %v1883, 4294901760
    %v1885 = vsub.f32 %v1883, %v1884
    %v1886 = vand.u32 %v1885, 4294901760
    %1887 = vmatmul.mubr.f32.gmra.mxu0 %v1886
    %v1888 = vpop.f32.mrf.mxu0
    %v1889 = vadd.f32 0.0, %v1888
    %v1890 = vpop.f32.mrf.mxu0
    %1891 = vmatprep.mubr.f32.mxu0 0.0
    %v1892 = vand.u32 %v69, 4294901760
    %v1893 = vsub.f32 %v69, %v1892
    %v1894 = vand.u32 %v1893, 4294901760
    %v1895 = vsub.f32 %v1893, %v1894
    %v1896 = vand.u32 %v1895, 4294901760
    %1897 = vmatmul.mubr.f32.gmra.mxu0 %v1896
    %v1898 = vpop.f32.mrf.mxu0
    %v1899 = vadd.f32 0.0, %v1898
    %v1900 = vpop.f32.mrf.mxu0
    %1901 = vdwg.mxu0
    %1902 = vmatprep.subr.mxu0 0.0
    %1903 = vmatpush1.msra.mxu0 0.0
    %1904 = vmatprep.subr.mxu0 0.0
    %1905 = vmatpush1.msra.mxu0 0.0
    %1906 = vmatprep.subr.mxu0 0.0
    %1907 = vmatpush1.msra.mxu0 0.0
    %1908 = vmatprep.subr.mxu0 0.0
    %1909 = vmatpush1.msra.mxu0 0.0
    %1910 = vmatprep.subr.mxu0 0.0
    %1911 = vmatpush1.msra.mxu0 0.0
    %1912 = vmatprep.subr.mxu0 0.0
    %1913 = vmatpush1.msra.mxu0 0.0
    %1914 = vmatprep.subr.mxu0 0.0
    %1915 = vmatpush1.msra.mxu0 0.0
    %1916 = vmatprep.subr.mxu0 0.0
    %1917 = vmatpush1.msra.mxu0 0.0
    %1918 = vmatprep.subr.mxu0 0.0
    %1919 = vmatpush1.msra.mxu0 0.0
    %1920 = vmatprep.subr.mxu0 0.0
    %1921 = vmatpush1.msra.mxu0 0.0
    %1922 = vmatprep.subr.mxu0 0.0
    %1923 = vmatpush1.msra.mxu0 0.0
    %1924 = vmatprep.subr.mxu0 0.0
    %1925 = vmatpush1.msra.mxu0 0.0
    %1926 = vmatprep.subr.mxu0 0.0
    %1927 = vmatpush1.msra.mxu0 0.0
    %1928 = vmatprep.subr.mxu0 0.0
    %1929 = vmatpush1.msra.mxu0 0.0
    %1930 = vmatprep.subr.mxu0 0.0
    %1931 = vmatpush1.msra.mxu0 0.0
    %1932 = vmatprep.subr.mxu0 0.0
    %v1933 = vand.u32 %v53, 4294901760
    %v1934 = vsub.f32 %v53, %v1933
    %v1935 = vand.u32 %v1934, 4294901760
    %v1936 = vsub.f32 %v1934, %v1935
    %v1937 = vand.u32 %v1936, 4294901760
    %1938 = vmatpush1.msra.mxu0 %v1937
    %1939 = vmatprep.subr.mxu0 0.0
    %1940 = vmatpush2.msra.mxu0 0.0
    %1941 = vmatprep.subr.mxu0 0.0
    %1942 = vmatpush2.msra.mxu0 0.0
    %1943 = vmatprep.subr.mxu0 0.0
    %1944 = vmatpush2.msra.mxu0 0.0
    %1945 = vmatprep.subr.mxu0 0.0
    %1946 = vmatpush2.msra.mxu0 0.0
    %1947 = vmatprep.subr.mxu0 0.0
    %1948 = vmatpush2.msra.mxu0 0.0
    %1949 = vmatprep.subr.mxu0 0.0
    %1950 = vmatpush2.msra.mxu0 0.0
    %1951 = vmatprep.subr.mxu0 0.0
    %1952 = vmatpush2.msra.mxu0 0.0
    %1953 = vmatprep.subr.mxu0 0.0
    %1954 = vmatpush2.msra.mxu0 0.0
    %1955 = vmatprep.subr.mxu0 0.0
    %1956 = vmatpush2.msra.mxu0 0.0
    %1957 = vmatprep.subr.mxu0 0.0
    %1958 = vmatpush2.msra.mxu0 0.0
    %1959 = vmatprep.subr.mxu0 0.0
    %1960 = vmatpush2.msra.mxu0 0.0
    %1961 = vmatprep.subr.mxu0 0.0
    %1962 = vmatpush2.msra.mxu0 0.0
    %1963 = vmatprep.subr.mxu0 0.0
    %1964 = vmatpush2.msra.mxu0 0.0
    %1965 = vmatprep.subr.mxu0 0.0
    %1966 = vmatpush2.msra.mxu0 0.0
    %1967 = vmatprep.subr.mxu0 0.0
    %1968 = vmatpush2.msra.mxu0 0.0
    %1969 = vmatprep.subr.mxu0 0.0
    %1970 = vmatpush2.msra.mxu0 0.0
    %1971 = vmatprep.mubr.f32.mxu0 0.0
    %v1972 = vand.u32 %v60, 4294901760
    %1973 = vmatmul.mubr.f32.gmra.mxu0 %v1972
    %v1974 = vpop.f32.mrf.mxu0
    %v1975 = vadd.f32 %v1869, %v1974
    %v1976 = vpop.f32.mrf.mxu0
    %1977 = vmatprep.mubr.f32.mxu0 0.0
    %v1978 = vand.u32 %v63, 4294901760
    %1979 = vmatmul.mubr.f32.gmra.mxu0 %v1978
    %v1980 = vpop.f32.mrf.mxu0
    %v1981 = vadd.f32 %v1879, %v1980
    %v1982 = vpop.f32.mrf.mxu0
    %1983 = vmatprep.mubr.f32.mxu0 0.0
    %v1984 = vand.u32 %v66, 4294901760
    %1985 = vmatmul.mubr.f32.gmra.mxu0 %v1984
    %v1986 = vpop.f32.mrf.mxu0
    %v1987 = vadd.f32 %v1889, %v1986
    %v1988 = vpop.f32.mrf.mxu0
    %1989 = vmatprep.mubr.f32.mxu0 0.0
    %v1990 = vand.u32 %v69, 4294901760
    %1991 = vmatmul.mubr.f32.gmra.mxu0 %v1990
    %v1992 = vpop.f32.mrf.mxu0
    %v1993 = vadd.f32 %v1899, %v1992
    %v1994 = vpop.f32.mrf.mxu0
    %1995 = vdwg.mxu0
    %1996 = vmatprep.subr.mxu0 0.0
    %1997 = vmatpush1.msra.mxu0 0.0
    %1998 = vmatprep.subr.mxu0 0.0
    %1999 = vmatpush1.msra.mxu0 0.0
    %2000 = vmatprep.subr.mxu0 0.0
    %2001 = vmatpush1.msra.mxu0 0.0
    %2002 = vmatprep.subr.mxu0 0.0
    %2003 = vmatpush1.msra.mxu0 0.0
    %2004 = vmatprep.subr.mxu0 0.0
    %2005 = vmatpush1.msra.mxu0 0.0
    %2006 = vmatprep.subr.mxu0 0.0
    %2007 = vmatpush1.msra.mxu0 0.0
    %2008 = vmatprep.subr.mxu0 0.0
    %2009 = vmatpush1.msra.mxu0 0.0
    %2010 = vmatprep.subr.mxu0 0.0
    %2011 = vmatpush1.msra.mxu0 0.0
    %2012 = vmatprep.subr.mxu0 0.0
    %2013 = vmatpush1.msra.mxu0 0.0
    %2014 = vmatprep.subr.mxu0 0.0
    %2015 = vmatpush1.msra.mxu0 0.0
    %2016 = vmatprep.subr.mxu0 0.0
    %2017 = vmatpush1.msra.mxu0 0.0
    %2018 = vmatprep.subr.mxu0 0.0
    %2019 = vmatpush1.msra.mxu0 0.0
    %2020 = vmatprep.subr.mxu0 0.0
    %2021 = vmatpush1.msra.mxu0 0.0
    %2022 = vmatprep.subr.mxu0 0.0
    %2023 = vmatpush1.msra.mxu0 0.0
    %2024 = vmatprep.subr.mxu0 0.0
    %2025 = vmatpush1.msra.mxu0 0.0
    %2026 = vmatprep.subr.mxu0 0.0
    %v2027 = vand.u32 %v53, 4294901760
    %v2028 = vsub.f32 %v53, %v2027
    %2029 = vmatpush1.msra.mxu0 %v2028
    %2030 = vmatprep.subr.mxu0 0.0
    %2031 = vmatpush2.msra.mxu0 0.0
    %2032 = vmatprep.subr.mxu0 0.0
    %2033 = vmatpush2.msra.mxu0 0.0
    %2034 = vmatprep.subr.mxu0 0.0
    %2035 = vmatpush2.msra.mxu0 0.0
    %2036 = vmatprep.subr.mxu0 0.0
    %2037 = vmatpush2.msra.mxu0 0.0
    %2038 = vmatprep.subr.mxu0 0.0
    %2039 = vmatpush2.msra.mxu0 0.0
    %2040 = vmatprep.subr.mxu0 0.0
    %2041 = vmatpush2.msra.mxu0 0.0
    %2042 = vmatprep.subr.mxu0 0.0
    %2043 = vmatpush2.msra.mxu0 0.0
    %2044 = vmatprep.subr.mxu0 0.0
    %2045 = vmatpush2.msra.mxu0 0.0
    %2046 = vmatprep.subr.mxu0 0.0
    %2047 = vmatpush2.msra.mxu0 0.0
    %2048 = vmatprep.subr.mxu0 0.0
    %2049 = vmatpush2.msra.mxu0 0.0
    %2050 = vmatprep.subr.mxu0 0.0
    %2051 = vmatpush2.msra.mxu0 0.0
    %2052 = vmatprep.subr.mxu0 0.0
    %2053 = vmatpush2.msra.mxu0 0.0
    %2054 = vmatprep.subr.mxu0 0.0
    %2055 = vmatpush2.msra.mxu0 0.0
    %2056 = vmatprep.subr.mxu0 0.0
    %2057 = vmatpush2.msra.mxu0 0.0
    %2058 = vmatprep.subr.mxu0 0.0
    %2059 = vmatpush2.msra.mxu0 0.0
    %2060 = vmatprep.subr.mxu0 0.0
    %2061 = vmatpush2.msra.mxu0 0.0
    %2062 = vmatprep.mubr.f32.mxu0 0.0
    %v2063 = vand.u32 %v60, 4294901760
    %v2064 = vsub.f32 %v60, %v2063
    %2065 = vmatmul.mubr.f32.gmra.mxu0 %v2064
    %v2066 = vpop.f32.mrf.mxu0
    %v2067 = vadd.f32 %v1975, %v2066
    %v2068 = vpop.f32.mrf.mxu0
    %2069 = vmatprep.mubr.f32.mxu0 0.0
    %v2070 = vand.u32 %v63, 4294901760
    %v2071 = vsub.f32 %v63, %v2070
    %2072 = vmatmul.mubr.f32.gmra.mxu0 %v2071
    %v2073 = vpop.f32.mrf.mxu0
    %v2074 = vadd.f32 %v1981, %v2073
    %v2075 = vpop.f32.mrf.mxu0
    %2076 = vmatprep.mubr.f32.mxu0 0.0
    %v2077 = vand.u32 %v66, 4294901760
    %v2078 = vsub.f32 %v66, %v2077
    %2079 = vmatmul.mubr.f32.gmra.mxu0 %v2078
    %v2080 = vpop.f32.mrf.mxu0
    %v2081 = vadd.f32 %v1987, %v2080
    %v2082 = vpop.f32.mrf.mxu0
    %2083 = vmatprep.mubr.f32.mxu0 0.0
    %v2084 = vand.u32 %v69, 4294901760
    %v2085 = vsub.f32 %v69, %v2084
    %2086 = vmatmul.mubr.f32.gmra.mxu0 %v2085
    %v2087 = vpop.f32.mrf.mxu0
    %v2088 = vadd.f32 %v1993, %v2087
    %v2089 = vpop.f32.mrf.mxu0
    %2090 = vdwg.mxu0
    %2091 = vmatprep.subr.mxu0 0.0
    %2092 = vmatpush1.msra.mxu0 0.0
    %2093 = vmatprep.subr.mxu0 0.0
    %2094 = vmatpush1.msra.mxu0 0.0
    %2095 = vmatprep.subr.mxu0 0.0
    %2096 = vmatpush1.msra.mxu0 0.0
    %2097 = vmatprep.subr.mxu0 0.0
    %2098 = vmatpush1.msra.mxu0 0.0
    %2099 = vmatprep.subr.mxu0 0.0
    %2100 = vmatpush1.msra.mxu0 0.0
    %2101 = vmatprep.subr.mxu0 0.0
    %2102 = vmatpush1.msra.mxu0 0.0
    %2103 = vmatprep.subr.mxu0 0.0
    %2104 = vmatpush1.msra.mxu0 0.0
    %2105 = vmatprep.subr.mxu0 0.0
    %2106 = vmatpush1.msra.mxu0 0.0
    %2107 = vmatprep.subr.mxu0 0.0
    %2108 = vmatpush1.msra.mxu0 0.0
    %2109 = vmatprep.subr.mxu0 0.0
    %2110 = vmatpush1.msra.mxu0 0.0
    %2111 = vmatprep.subr.mxu0 0.0
    %2112 = vmatpush1.msra.mxu0 0.0
    %2113 = vmatprep.subr.mxu0 0.0
    %2114 = vmatpush1.msra.mxu0 0.0
    %2115 = vmatprep.subr.mxu0 0.0
    %2116 = vmatpush1.msra.mxu0 0.0
    %2117 = vmatprep.subr.mxu0 0.0
    %2118 = vmatpush1.msra.mxu0 0.0
    %2119 = vmatprep.subr.mxu0 0.0
    %2120 = vmatpush1.msra.mxu0 0.0
    %2121 = vmatprep.subr.mxu0 0.0
    %v2122 = vand.u32 %v53, 4294901760
    %2123 = vmatpush1.msra.mxu0 %v2122
    %2124 = vmatprep.subr.mxu0 0.0
    %2125 = vmatpush2.msra.mxu0 0.0
    %2126 = vmatprep.subr.mxu0 0.0
    %2127 = vmatpush2.msra.mxu0 0.0
    %2128 = vmatprep.subr.mxu0 0.0
    %2129 = vmatpush2.msra.mxu0 0.0
    %2130 = vmatprep.subr.mxu0 0.0
    %2131 = vmatpush2.msra.mxu0 0.0
    %2132 = vmatprep.subr.mxu0 0.0
    %2133 = vmatpush2.msra.mxu0 0.0
    %2134 = vmatprep.subr.mxu0 0.0
    %2135 = vmatpush2.msra.mxu0 0.0
    %2136 = vmatprep.subr.mxu0 0.0
    %2137 = vmatpush2.msra.mxu0 0.0
    %2138 = vmatprep.subr.mxu0 0.0
    %2139 = vmatpush2.msra.mxu0 0.0
    %2140 = vmatprep.subr.mxu0 0.0
    %2141 = vmatpush2.msra.mxu0 0.0
    %2142 = vmatprep.subr.mxu0 0.0
    %2143 = vmatpush2.msra.mxu0 0.0
    %2144 = vmatprep.subr.mxu0 0.0
    %2145 = vmatpush2.msra.mxu0 0.0
    %2146 = vmatprep.subr.mxu0 0.0
    %2147 = vmatpush2.msra.mxu0 0.0
    %2148 = vmatprep.subr.mxu0 0.0
    %2149 = vmatpush2.msra.mxu0 0.0
    %2150 = vmatprep.subr.mxu0 0.0
    %2151 = vmatpush2.msra.mxu0 0.0
    %2152 = vmatprep.subr.mxu0 0.0
    %2153 = vmatpush2.msra.mxu0 0.0
    %2154 = vmatprep.subr.mxu0 0.0
    %2155 = vmatpush2.msra.mxu0 0.0
    %2156 = vmatprep.mubr.f32.mxu0 0.0
    %v2157 = vand.u32 %v60, 4294901760
    %v2158 = vsub.f32 %v60, %v2157
    %v2159 = vand.u32 %v2158, 4294901760
    %2160 = vmatmul.mubr.f32.gmra.mxu0 %v2159
    %v2161 = vpop.f32.mrf.mxu0
    %v2162 = vadd.f32 %v2067, %v2161
    %v2163 = vpop.f32.mrf.mxu0
    %2164 = vmatprep.mubr.f32.mxu0 0.0
    %v2165 = vand.u32 %v63, 4294901760
    %v2166 = vsub.f32 %v63, %v2165
    %v2167 = vand.u32 %v2166, 4294901760
    %2168 = vmatmul.mubr.f32.gmra.mxu0 %v2167
    %v2169 = vpop.f32.mrf.mxu0
    %v2170 = vadd.f32 %v2074, %v2169
    %v2171 = vpop.f32.mrf.mxu0
    %2172 = vmatprep.mubr.f32.mxu0 0.0
    %v2173 = vand.u32 %v66, 4294901760
    %v2174 = vsub.f32 %v66, %v2173
    %v2175 = vand.u32 %v2174, 4294901760
    %2176 = vmatmul.mubr.f32.gmra.mxu0 %v2175
    %v2177 = vpop.f32.mrf.mxu0
    %v2178 = vadd.f32 %v2081, %v2177
    %v2179 = vpop.f32.mrf.mxu0
    %2180 = vmatprep.mubr.f32.mxu0 0.0
    %v2181 = vand.u32 %v69, 4294901760
    %v2182 = vsub.f32 %v69, %v2181
    %v2183 = vand.u32 %v2182, 4294901760
    %2184 = vmatmul.mubr.f32.gmra.mxu0 %v2183
    %v2185 = vpop.f32.mrf.mxu0
    %v2186 = vadd.f32 %v2088, %v2185
    %v2187 = vpop.f32.mrf.mxu0
    %2188 = vdwg.mxu0
    %2189 = vmatprep.subr.mxu0 0.0
    %2190 = vmatpush1.msra.mxu0 0.0
    %2191 = vmatprep.subr.mxu0 0.0
    %2192 = vmatpush1.msra.mxu0 0.0
    %2193 = vmatprep.subr.mxu0 0.0
    %2194 = vmatpush1.msra.mxu0 0.0
    %2195 = vmatprep.subr.mxu0 0.0
    %2196 = vmatpush1.msra.mxu0 0.0
    %2197 = vmatprep.subr.mxu0 0.0
    %2198 = vmatpush1.msra.mxu0 0.0
    %2199 = vmatprep.subr.mxu0 0.0
    %2200 = vmatpush1.msra.mxu0 0.0
    %2201 = vmatprep.subr.mxu0 0.0
    %2202 = vmatpush1.msra.mxu0 0.0
    %2203 = vmatprep.subr.mxu0 0.0
    %2204 = vmatpush1.msra.mxu0 0.0
    %2205 = vmatprep.subr.mxu0 0.0
    %2206 = vmatpush1.msra.mxu0 0.0
    %2207 = vmatprep.subr.mxu0 0.0
    %2208 = vmatpush1.msra.mxu0 0.0
    %2209 = vmatprep.subr.mxu0 0.0
    %2210 = vmatpush1.msra.mxu0 0.0
    %2211 = vmatprep.subr.mxu0 0.0
    %2212 = vmatpush1.msra.mxu0 0.0
    %2213 = vmatprep.subr.mxu0 0.0
    %2214 = vmatpush1.msra.mxu0 0.0
    %2215 = vmatprep.subr.mxu0 0.0
    %2216 = vmatpush1.msra.mxu0 0.0
    %2217 = vmatprep.subr.mxu0 0.0
    %2218 = vmatpush1.msra.mxu0 0.0
    %2219 = vmatprep.subr.mxu0 0.0
    %v2220 = vand.u32 %v53, 4294901760
    %v2221 = vsub.f32 %v53, %v2220
    %v2222 = vand.u32 %v2221, 4294901760
    %2223 = vmatpush1.msra.mxu0 %v2222
    %2224 = vmatprep.subr.mxu0 0.0
    %2225 = vmatpush2.msra.mxu0 0.0
    %2226 = vmatprep.subr.mxu0 0.0
    %2227 = vmatpush2.msra.mxu0 0.0
    %2228 = vmatprep.subr.mxu0 0.0
    %2229 = vmatpush2.msra.mxu0 0.0
    %2230 = vmatprep.subr.mxu0 0.0
    %2231 = vmatpush2.msra.mxu0 0.0
    %2232 = vmatprep.subr.mxu0 0.0
    %2233 = vmatpush2.msra.mxu0 0.0
    %2234 = vmatprep.subr.mxu0 0.0
    %2235 = vmatpush2.msra.mxu0 0.0
    %2236 = vmatprep.subr.mxu0 0.0
    %2237 = vmatpush2.msra.mxu0 0.0
    %2238 = vmatprep.subr.mxu0 0.0
    %2239 = vmatpush2.msra.mxu0 0.0
    %2240 = vmatprep.subr.mxu0 0.0
    %2241 = vmatpush2.msra.mxu0 0.0
    %2242 = vmatprep.subr.mxu0 0.0
    %2243 = vmatpush2.msra.mxu0 0.0
    %2244 = vmatprep.subr.mxu0 0.0
    %2245 = vmatpush2.msra.mxu0 0.0
    %2246 = vmatprep.subr.mxu0 0.0
    %2247 = vmatpush2.msra.mxu0 0.0
    %2248 = vmatprep.subr.mxu0 0.0
    %2249 = vmatpush2.msra.mxu0 0.0
    %2250 = vmatprep.subr.mxu0 0.0
    %2251 = vmatpush2.msra.mxu0 0.0
    %2252 = vmatprep.subr.mxu0 0.0
    %2253 = vmatpush2.msra.mxu0 0.0
    %2254 = vmatprep.subr.mxu0 0.0
    %2255 = vmatpush2.msra.mxu0 0.0
    %2256 = vmatprep.mubr.f32.mxu0 0.0
    %v2257 = vand.u32 %v60, 4294901760
    %2258 = vmatmul.mubr.f32.gmra.mxu0 %v2257
    %v2259 = vpop.f32.mrf.mxu0
    %v2260 = vadd.f32 %v2162, %v2259
    %v2261 = vpop.f32.mrf.mxu0
    %2262 = vmatprep.mubr.f32.mxu0 0.0
    %v2263 = vand.u32 %v63, 4294901760
    %2264 = vmatmul.mubr.f32.gmra.mxu0 %v2263
    %v2265 = vpop.f32.mrf.mxu0
    %v2266 = vadd.f32 %v2170, %v2265
    %v2267 = vpop.f32.mrf.mxu0
    %2268 = vmatprep.mubr.f32.mxu0 0.0
    %v2269 = vand.u32 %v66, 4294901760
    %2270 = vmatmul.mubr.f32.gmra.mxu0 %v2269
    %v2271 = vpop.f32.mrf.mxu0
    %v2272 = vadd.f32 %v2178, %v2271
    %v2273 = vpop.f32.mrf.mxu0
    %2274 = vmatprep.mubr.f32.mxu0 0.0
    %v2275 = vand.u32 %v69, 4294901760
    %2276 = vmatmul.mubr.f32.gmra.mxu0 %v2275
    %v2277 = vpop.f32.mrf.mxu0
    %v2278 = vadd.f32 %v2186, %v2277
    %v2279 = vpop.f32.mrf.mxu0
    %2280 = vdwg.mxu0
    %2281 = vmatprep.subr.mxu0 0.0
    %2282 = vmatpush1.msra.mxu0 0.0
    %2283 = vmatprep.subr.mxu0 0.0
    %2284 = vmatpush1.msra.mxu0 0.0
    %2285 = vmatprep.subr.mxu0 0.0
    %2286 = vmatpush1.msra.mxu0 0.0
    %2287 = vmatprep.subr.mxu0 0.0
    %2288 = vmatpush1.msra.mxu0 0.0
    %2289 = vmatprep.subr.mxu0 0.0
    %2290 = vmatpush1.msra.mxu0 0.0
    %2291 = vmatprep.subr.mxu0 0.0
    %2292 = vmatpush1.msra.mxu0 0.0
    %2293 = vmatprep.subr.mxu0 0.0
    %2294 = vmatpush1.msra.mxu0 0.0
    %2295 = vmatprep.subr.mxu0 0.0
    %2296 = vmatpush1.msra.mxu0 0.0
    %2297 = vmatprep.subr.mxu0 0.0
    %2298 = vmatpush1.msra.mxu0 0.0
    %2299 = vmatprep.subr.mxu0 0.0
    %2300 = vmatpush1.msra.mxu0 0.0
    %2301 = vmatprep.subr.mxu0 0.0
    %2302 = vmatpush1.msra.mxu0 0.0
    %2303 = vmatprep.subr.mxu0 0.0
    %2304 = vmatpush1.msra.mxu0 0.0
    %2305 = vmatprep.subr.mxu0 0.0
    %2306 = vmatpush1.msra.mxu0 0.0
    %2307 = vmatprep.subr.mxu0 0.0
    %2308 = vmatpush1.msra.mxu0 0.0
    %2309 = vmatprep.subr.mxu0 0.0
    %2310 = vmatpush1.msra.mxu0 0.0
    %2311 = vmatprep.subr.mxu0 0.0
    %v2312 = vand.u32 %v53, 4294901760
    %2313 = vmatpush1.msra.mxu0 %v2312
    %2314 = vmatprep.subr.mxu0 0.0
    %2315 = vmatpush2.msra.mxu0 0.0
    %2316 = vmatprep.subr.mxu0 0.0
    %2317 = vmatpush2.msra.mxu0 0.0
    %2318 = vmatprep.subr.mxu0 0.0
    %2319 = vmatpush2.msra.mxu0 0.0
    %2320 = vmatprep.subr.mxu0 0.0
    %2321 = vmatpush2.msra.mxu0 0.0
    %2322 = vmatprep.subr.mxu0 0.0
    %2323 = vmatpush2.msra.mxu0 0.0
    %2324 = vmatprep.subr.mxu0 0.0
    %2325 = vmatpush2.msra.mxu0 0.0
    %2326 = vmatprep.subr.mxu0 0.0
    %2327 = vmatpush2.msra.mxu0 0.0
    %2328 = vmatprep.subr.mxu0 0.0
    %2329 = vmatpush2.msra.mxu0 0.0
    %2330 = vmatprep.subr.mxu0 0.0
    %2331 = vmatpush2.msra.mxu0 0.0
    %2332 = vmatprep.subr.mxu0 0.0
    %2333 = vmatpush2.msra.mxu0 0.0
    %2334 = vmatprep.subr.mxu0 0.0
    %2335 = vmatpush2.msra.mxu0 0.0
    %2336 = vmatprep.subr.mxu0 0.0
    %2337 = vmatpush2.msra.mxu0 0.0
    %2338 = vmatprep.subr.mxu0 0.0
    %2339 = vmatpush2.msra.mxu0 0.0
    %2340 = vmatprep.subr.mxu0 0.0
    %2341 = vmatpush2.msra.mxu0 0.0
    %2342 = vmatprep.subr.mxu0 0.0
    %2343 = vmatpush2.msra.mxu0 0.0
    %2344 = vmatprep.subr.mxu0 0.0
    %2345 = vmatpush2.msra.mxu0 0.0
    %2346 = vmatprep.mubr.f32.mxu0 0.0
    %v2347 = vand.u32 %v60, 4294901760
    %2348 = vmatmul.mubr.f32.gmra.mxu0 %v2347
    %v2349 = vpop.f32.mrf.mxu0
    %v2350 = vadd.f32 %v2260, %v2349
    %v2351 = vpop.f32.mrf.mxu0
    %2352 = vmatprep.mubr.f32.mxu0 0.0
    %v2353 = vand.u32 %v63, 4294901760
    %2354 = vmatmul.mubr.f32.gmra.mxu0 %v2353
    %v2355 = vpop.f32.mrf.mxu0
    %v2356 = vadd.f32 %v2266, %v2355
    %v2357 = vpop.f32.mrf.mxu0
    %2358 = vmatprep.mubr.f32.mxu0 0.0
    %v2359 = vand.u32 %v66, 4294901760
    %2360 = vmatmul.mubr.f32.gmra.mxu0 %v2359
    %v2361 = vpop.f32.mrf.mxu0
    %v2362 = vadd.f32 %v2272, %v2361
    %v2363 = vpop.f32.mrf.mxu0
    %2364 = vmatprep.mubr.f32.mxu0 0.0
    %v2365 = vand.u32 %v69, 4294901760
    %2366 = vmatmul.mubr.f32.gmra.mxu0 %v2365
    %v2367 = vpop.f32.mrf.mxu0
    %v2368 = vadd.f32 %v2278, %v2367
    %v2369 = vpop.f32.mrf.mxu0
    %2370 = vdwg.mxu0
    %2371 = vmatprep.subr.mxu0 0.0
    %2372 = vmatpush1.msra.mxu0 0.0
    %2373 = vmatprep.subr.mxu0 0.0
    %2374 = vmatpush1.msra.mxu0 0.0
    %2375 = vmatprep.subr.mxu0 0.0
    %2376 = vmatpush1.msra.mxu0 0.0
    %2377 = vmatprep.subr.mxu0 0.0
    %2378 = vmatpush1.msra.mxu0 0.0
    %2379 = vmatprep.subr.mxu0 0.0
    %2380 = vmatpush1.msra.mxu0 0.0
    %2381 = vmatprep.subr.mxu0 0.0
    %2382 = vmatpush1.msra.mxu0 0.0
    %2383 = vmatprep.subr.mxu0 0.0
    %2384 = vmatpush1.msra.mxu0 0.0
    %2385 = vmatprep.subr.mxu0 0.0
    %2386 = vmatpush1.msra.mxu0 0.0
    %2387 = vmatprep.subr.mxu0 0.0
    %2388 = vmatpush1.msra.mxu0 0.0
    %2389 = vmatprep.subr.mxu0 0.0
    %2390 = vmatpush1.msra.mxu0 0.0
    %2391 = vmatprep.subr.mxu0 0.0
    %2392 = vmatpush1.msra.mxu0 0.0
    %2393 = vmatprep.subr.mxu0 0.0
    %2394 = vmatpush1.msra.mxu0 0.0
    %2395 = vmatprep.subr.mxu0 0.0
    %2396 = vmatpush1.msra.mxu0 0.0
    %2397 = vmatprep.subr.mxu0 0.0
    %2398 = vmatpush1.msra.mxu0 0.0
    %2399 = vmatprep.subr.mxu0 0.0
    %2400 = vmatpush1.msra.mxu0 0.0
    %2401 = vmatprep.subr.mxu0 0.0
    %v2402 = vand.u32 %v54, 4294901760
    %2403 = vmatpush1.msra.mxu0 %v2402
    %2404 = vmatprep.subr.mxu0 0.0
    %2405 = vmatpush2.msra.mxu0 0.0
    %2406 = vmatprep.subr.mxu0 0.0
    %2407 = vmatpush2.msra.mxu0 0.0
    %2408 = vmatprep.subr.mxu0 0.0
    %2409 = vmatpush2.msra.mxu0 0.0
    %2410 = vmatprep.subr.mxu0 0.0
    %2411 = vmatpush2.msra.mxu0 0.0
    %2412 = vmatprep.subr.mxu0 0.0
    %2413 = vmatpush2.msra.mxu0 0.0
    %2414 = vmatprep.subr.mxu0 0.0
    %2415 = vmatpush2.msra.mxu0 0.0
    %2416 = vmatprep.subr.mxu0 0.0
    %2417 = vmatpush2.msra.mxu0 0.0
    %2418 = vmatprep.subr.mxu0 0.0
    %2419 = vmatpush2.msra.mxu0 0.0
    %2420 = vmatprep.subr.mxu0 0.0
    %2421 = vmatpush2.msra.mxu0 0.0
    %2422 = vmatprep.subr.mxu0 0.0
    %2423 = vmatpush2.msra.mxu0 0.0
    %2424 = vmatprep.subr.mxu0 0.0
    %2425 = vmatpush2.msra.mxu0 0.0
    %2426 = vmatprep.subr.mxu0 0.0
    %2427 = vmatpush2.msra.mxu0 0.0
    %2428 = vmatprep.subr.mxu0 0.0
    %2429 = vmatpush2.msra.mxu0 0.0
    %2430 = vmatprep.subr.mxu0 0.0
    %2431 = vmatpush2.msra.mxu0 0.0
    %2432 = vmatprep.subr.mxu0 0.0
    %2433 = vmatpush2.msra.mxu0 0.0
    %2434 = vmatprep.subr.mxu0 0.0
    %2435 = vmatpush2.msra.mxu0 0.0
    %2436 = vmatprep.mubr.f32.mxu0 0.0
    %v2437 = vand.u32 %v60, 4294901760
    %v2438 = vsub.f32 %v60, %v2437
    %v2439 = vand.u32 %v2438, 4294901760
    %v2440 = vsub.f32 %v2438, %v2439
    %v2441 = vand.u32 %v2440, 4294901760
    %2442 = vmatmul.mubr.f32.gmra.mxu0 %v2441
    %v2443 = vpop.f32.mrf.mxu0
    %v2444 = vadd.f32 0.0, %v2443
    %v2445 = vpop.f32.mrf.mxu0
    %2446 = vmatprep.mubr.f32.mxu0 0.0
    %v2447 = vand.u32 %v63, 4294901760
    %v2448 = vsub.f32 %v63, %v2447
    %v2449 = vand.u32 %v2448, 4294901760
    %v2450 = vsub.f32 %v2448, %v2449
    %v2451 = vand.u32 %v2450, 4294901760
    %2452 = vmatmul.mubr.f32.gmra.mxu0 %v2451
    %v2453 = vpop.f32.mrf.mxu0
    %v2454 = vadd.f32 0.0, %v2453
    %v2455 = vpop.f32.mrf.mxu0
    %2456 = vmatprep.mubr.f32.mxu0 0.0
    %v2457 = vand.u32 %v66, 4294901760
    %v2458 = vsub.f32 %v66, %v2457
    %v2459 = vand.u32 %v2458, 4294901760
    %v2460 = vsub.f32 %v2458, %v2459
    %v2461 = vand.u32 %v2460, 4294901760
    %2462 = vmatmul.mubr.f32.gmra.mxu0 %v2461
    %v2463 = vpop.f32.mrf.mxu0
    %v2464 = vadd.f32 0.0, %v2463
    %v2465 = vpop.f32.mrf.mxu0
    %2466 = vmatprep.mubr.f32.mxu0 0.0
    %v2467 = vand.u32 %v69, 4294901760
    %v2468 = vsub.f32 %v69, %v2467
    %v2469 = vand.u32 %v2468, 4294901760
    %v2470 = vsub.f32 %v2468, %v2469
    %v2471 = vand.u32 %v2470, 4294901760
    %2472 = vmatmul.mubr.f32.gmra.mxu0 %v2471
    %v2473 = vpop.f32.mrf.mxu0
    %v2474 = vadd.f32 0.0, %v2473
    %v2475 = vpop.f32.mrf.mxu0
    %2476 = vdwg.mxu0
    %2477 = vmatprep.subr.mxu0 0.0
    %2478 = vmatpush1.msra.mxu0 0.0
    %2479 = vmatprep.subr.mxu0 0.0
    %2480 = vmatpush1.msra.mxu0 0.0
    %2481 = vmatprep.subr.mxu0 0.0
    %2482 = vmatpush1.msra.mxu0 0.0
    %2483 = vmatprep.subr.mxu0 0.0
    %2484 = vmatpush1.msra.mxu0 0.0
    %2485 = vmatprep.subr.mxu0 0.0
    %2486 = vmatpush1.msra.mxu0 0.0
    %2487 = vmatprep.subr.mxu0 0.0
    %2488 = vmatpush1.msra.mxu0 0.0
    %2489 = vmatprep.subr.mxu0 0.0
    %2490 = vmatpush1.msra.mxu0 0.0
    %2491 = vmatprep.subr.mxu0 0.0
    %2492 = vmatpush1.msra.mxu0 0.0
    %2493 = vmatprep.subr.mxu0 0.0
    %2494 = vmatpush1.msra.mxu0 0.0
    %2495 = vmatprep.subr.mxu0 0.0
    %2496 = vmatpush1.msra.mxu0 0.0
    %2497 = vmatprep.subr.mxu0 0.0
    %2498 = vmatpush1.msra.mxu0 0.0
    %2499 = vmatprep.subr.mxu0 0.0
    %2500 = vmatpush1.msra.mxu0 0.0
    %2501 = vmatprep.subr.mxu0 0.0
    %2502 = vmatpush1.msra.mxu0 0.0
    %2503 = vmatprep.subr.mxu0 0.0
    %2504 = vmatpush1.msra.mxu0 0.0
    %2505 = vmatprep.subr.mxu0 0.0
    %2506 = vmatpush1.msra.mxu0 0.0
    %2507 = vmatprep.subr.mxu0 0.0
    %v2508 = vand.u32 %v54, 4294901760
    %v2509 = vsub.f32 %v54, %v2508
    %v2510 = vand.u32 %v2509, 4294901760
    %v2511 = vsub.f32 %v2509, %v2510
    %v2512 = vand.u32 %v2511, 4294901760
    %2513 = vmatpush1.msra.mxu0 %v2512
    %2514 = vmatprep.subr.mxu0 0.0
    %2515 = vmatpush2.msra.mxu0 0.0
    %2516 = vmatprep.subr.mxu0 0.0
    %2517 = vmatpush2.msra.mxu0 0.0
    %2518 = vmatprep.subr.mxu0 0.0
    %2519 = vmatpush2.msra.mxu0 0.0
    %2520 = vmatprep.subr.mxu0 0.0
    %2521 = vmatpush2.msra.mxu0 0.0
    %2522 = vmatprep.subr.mxu0 0.0
    %2523 = vmatpush2.msra.mxu0 0.0
    %2524 = vmatprep.subr.mxu0 0.0
    %2525 = vmatpush2.msra.mxu0 0.0
    %2526 = vmatprep.subr.mxu0 0.0
    %2527 = vmatpush2.msra.mxu0 0.0
    %2528 = vmatprep.subr.mxu0 0.0
    %2529 = vmatpush2.msra.mxu0 0.0
    %2530 = vmatprep.subr.mxu0 0.0
    %2531 = vmatpush2.msra.mxu0 0.0
    %2532 = vmatprep.subr.mxu0 0.0
    %2533 = vmatpush2.msra.mxu0 0.0
    %2534 = vmatprep.subr.mxu0 0.0
    %2535 = vmatpush2.msra.mxu0 0.0
    %2536 = vmatprep.subr.mxu0 0.0
    %2537 = vmatpush2.msra.mxu0 0.0
    %2538 = vmatprep.subr.mxu0 0.0
    %2539 = vmatpush2.msra.mxu0 0.0
    %2540 = vmatprep.subr.mxu0 0.0
    %2541 = vmatpush2.msra.mxu0 0.0
    %2542 = vmatprep.subr.mxu0 0.0
    %2543 = vmatpush2.msra.mxu0 0.0
    %2544 = vmatprep.subr.mxu0 0.0
    %2545 = vmatpush2.msra.mxu0 0.0
    %2546 = vmatprep.mubr.f32.mxu0 0.0
    %v2547 = vand.u32 %v60, 4294901760
    %2548 = vmatmul.mubr.f32.gmra.mxu0 %v2547
    %v2549 = vpop.f32.mrf.mxu0
    %v2550 = vadd.f32 %v2444, %v2549
    %v2551 = vpop.f32.mrf.mxu0
    %2552 = vmatprep.mubr.f32.mxu0 0.0
    %v2553 = vand.u32 %v63, 4294901760
    %2554 = vmatmul.mubr.f32.gmra.mxu0 %v2553
    %v2555 = vpop.f32.mrf.mxu0
    %v2556 = vadd.f32 %v2454, %v2555
    %v2557 = vpop.f32.mrf.mxu0
    %2558 = vmatprep.mubr.f32.mxu0 0.0
    %v2559 = vand.u32 %v66, 4294901760
    %2560 = vmatmul.mubr.f32.gmra.mxu0 %v2559
    %v2561 = vpop.f32.mrf.mxu0
    %v2562 = vadd.f32 %v2464, %v2561
    %v2563 = vpop.f32.mrf.mxu0
    %2564 = vmatprep.mubr.f32.mxu0 0.0
    %v2565 = vand.u32 %v69, 4294901760
    %2566 = vmatmul.mubr.f32.gmra.mxu0 %v2565
    %v2567 = vpop.f32.mrf.mxu0
    %v2568 = vadd.f32 %v2474, %v2567
    %v2569 = vpop.f32.mrf.mxu0
    %2570 = vdwg.mxu0
    %2571 = vmatprep.subr.mxu0 0.0
    %2572 = vmatpush1.msra.mxu0 0.0
    %2573 = vmatprep.subr.mxu0 0.0
    %2574 = vmatpush1.msra.mxu0 0.0
    %2575 = vmatprep.subr.mxu0 0.0
    %2576 = vmatpush1.msra.mxu0 0.0
    %2577 = vmatprep.subr.mxu0 0.0
    %2578 = vmatpush1.msra.mxu0 0.0
    %2579 = vmatprep.subr.mxu0 0.0
    %2580 = vmatpush1.msra.mxu0 0.0
    %2581 = vmatprep.subr.mxu0 0.0
    %2582 = vmatpush1.msra.mxu0 0.0
    %2583 = vmatprep.subr.mxu0 0.0
    %2584 = vmatpush1.msra.mxu0 0.0
    %2585 = vmatprep.subr.mxu0 0.0
    %2586 = vmatpush1.msra.mxu0 0.0
    %2587 = vmatprep.subr.mxu0 0.0
    %2588 = vmatpush1.msra.mxu0 0.0
    %2589 = vmatprep.subr.mxu0 0.0
    %2590 = vmatpush1.msra.mxu0 0.0
    %2591 = vmatprep.subr.mxu0 0.0
    %2592 = vmatpush1.msra.mxu0 0.0
    %2593 = vmatprep.subr.mxu0 0.0
    %2594 = vmatpush1.msra.mxu0 0.0
    %2595 = vmatprep.subr.mxu0 0.0
    %2596 = vmatpush1.msra.mxu0 0.0
    %2597 = vmatprep.subr.mxu0 0.0
    %2598 = vmatpush1.msra.mxu0 0.0
    %2599 = vmatprep.subr.mxu0 0.0
    %2600 = vmatpush1.msra.mxu0 0.0
    %2601 = vmatprep.subr.mxu0 0.0
    %v2602 = vand.u32 %v54, 4294901760
    %v2603 = vsub.f32 %v54, %v2602
    %2604 = vmatpush1.msra.mxu0 %v2603
    %2605 = vmatprep.subr.mxu0 0.0
    %2606 = vmatpush2.msra.mxu0 0.0
    %2607 = vmatprep.subr.mxu0 0.0
    %2608 = vmatpush2.msra.mxu0 0.0
    %2609 = vmatprep.subr.mxu0 0.0
    %2610 = vmatpush2.msra.mxu0 0.0
    %2611 = vmatprep.subr.mxu0 0.0
    %2612 = vmatpush2.msra.mxu0 0.0
    %2613 = vmatprep.subr.mxu0 0.0
    %2614 = vmatpush2.msra.mxu0 0.0
    %2615 = vmatprep.subr.mxu0 0.0
    %2616 = vmatpush2.msra.mxu0 0.0
    %2617 = vmatprep.subr.mxu0 0.0
    %2618 = vmatpush2.msra.mxu0 0.0
    %2619 = vmatprep.subr.mxu0 0.0
    %2620 = vmatpush2.msra.mxu0 0.0
    %2621 = vmatprep.subr.mxu0 0.0
    %2622 = vmatpush2.msra.mxu0 0.0
    %2623 = vmatprep.subr.mxu0 0.0
    %2624 = vmatpush2.msra.mxu0 0.0
    %2625 = vmatprep.subr.mxu0 0.0
    %2626 = vmatpush2.msra.mxu0 0.0
    %2627 = vmatprep.subr.mxu0 0.0
    %2628 = vmatpush2.msra.mxu0 0.0
    %2629 = vmatprep.subr.mxu0 0.0
    %2630 = vmatpush2.msra.mxu0 0.0
    %2631 = vmatprep.subr.mxu0 0.0
    %2632 = vmatpush2.msra.mxu0 0.0
    %2633 = vmatprep.subr.mxu0 0.0
    %2634 = vmatpush2.msra.mxu0 0.0
    %2635 = vmatprep.subr.mxu0 0.0
    %2636 = vmatpush2.msra.mxu0 0.0
    %2637 = vmatprep.mubr.f32.mxu0 0.0
    %v2638 = vand.u32 %v60, 4294901760
    %v2639 = vsub.f32 %v60, %v2638
    %2640 = vmatmul.mubr.f32.gmra.mxu0 %v2639
    %v2641 = vpop.f32.mrf.mxu0
    %v2642 = vadd.f32 %v2550, %v2641
    %v2643 = vpop.f32.mrf.mxu0
    %2644 = vmatprep.mubr.f32.mxu0 0.0
    %v2645 = vand.u32 %v63, 4294901760
    %v2646 = vsub.f32 %v63, %v2645
    %2647 = vmatmul.mubr.f32.gmra.mxu0 %v2646
    %v2648 = vpop.f32.mrf.mxu0
    %v2649 = vadd.f32 %v2556, %v2648
    %v2650 = vpop.f32.mrf.mxu0
    %2651 = vmatprep.mubr.f32.mxu0 0.0
    %v2652 = vand.u32 %v66, 4294901760
    %v2653 = vsub.f32 %v66, %v2652
    %2654 = vmatmul.mubr.f32.gmra.mxu0 %v2653
    %v2655 = vpop.f32.mrf.mxu0
    %v2656 = vadd.f32 %v2562, %v2655
    %v2657 = vpop.f32.mrf.mxu0
    %2658 = vmatprep.mubr.f32.mxu0 0.0
    %v2659 = vand.u32 %v69, 4294901760
    %v2660 = vsub.f32 %v69, %v2659
    %2661 = vmatmul.mubr.f32.gmra.mxu0 %v2660
    %v2662 = vpop.f32.mrf.mxu0
    %v2663 = vadd.f32 %v2568, %v2662
    %v2664 = vpop.f32.mrf.mxu0
    %2665 = vdwg.mxu0
    %2666 = vmatprep.subr.mxu0 0.0
    %2667 = vmatpush1.msra.mxu0 0.0
    %2668 = vmatprep.subr.mxu0 0.0
    %2669 = vmatpush1.msra.mxu0 0.0
    %2670 = vmatprep.subr.mxu0 0.0
    %2671 = vmatpush1.msra.mxu0 0.0
    %2672 = vmatprep.subr.mxu0 0.0
    %2673 = vmatpush1.msra.mxu0 0.0
    %2674 = vmatprep.subr.mxu0 0.0
    %2675 = vmatpush1.msra.mxu0 0.0
    %2676 = vmatprep.subr.mxu0 0.0
    %2677 = vmatpush1.msra.mxu0 0.0
    %2678 = vmatprep.subr.mxu0 0.0
    %2679 = vmatpush1.msra.mxu0 0.0
    %2680 = vmatprep.subr.mxu0 0.0
    %2681 = vmatpush1.msra.mxu0 0.0
    %2682 = vmatprep.subr.mxu0 0.0
    %2683 = vmatpush1.msra.mxu0 0.0
    %2684 = vmatprep.subr.mxu0 0.0
    %2685 = vmatpush1.msra.mxu0 0.0
    %2686 = vmatprep.subr.mxu0 0.0
    %2687 = vmatpush1.msra.mxu0 0.0
    %2688 = vmatprep.subr.mxu0 0.0
    %2689 = vmatpush1.msra.mxu0 0.0
    %2690 = vmatprep.subr.mxu0 0.0
    %2691 = vmatpush1.msra.mxu0 0.0
    %2692 = vmatprep.subr.mxu0 0.0
    %2693 = vmatpush1.msra.mxu0 0.0
    %2694 = vmatprep.subr.mxu0 0.0
    %2695 = vmatpush1.msra.mxu0 0.0
    %2696 = vmatprep.subr.mxu0 0.0
    %v2697 = vand.u32 %v54, 4294901760
    %2698 = vmatpush1.msra.mxu0 %v2697
    %2699 = vmatprep.subr.mxu0 0.0
    %2700 = vmatpush2.msra.mxu0 0.0
    %2701 = vmatprep.subr.mxu0 0.0
    %2702 = vmatpush2.msra.mxu0 0.0
    %2703 = vmatprep.subr.mxu0 0.0
    %2704 = vmatpush2.msra.mxu0 0.0
    %2705 = vmatprep.subr.mxu0 0.0
    %2706 = vmatpush2.msra.mxu0 0.0
    %2707 = vmatprep.subr.mxu0 0.0
    %2708 = vmatpush2.msra.mxu0 0.0
    %2709 = vmatprep.subr.mxu0 0.0
    %2710 = vmatpush2.msra.mxu0 0.0
    %2711 = vmatprep.subr.mxu0 0.0
    %2712 = vmatpush2.msra.mxu0 0.0
    %2713 = vmatprep.subr.mxu0 0.0
    %2714 = vmatpush2.msra.mxu0 0.0
    %2715 = vmatprep.subr.mxu0 0.0
    %2716 = vmatpush2.msra.mxu0 0.0
    %2717 = vmatprep.subr.mxu0 0.0
    %2718 = vmatpush2.msra.mxu0 0.0
    %2719 = vmatprep.subr.mxu0 0.0
    %2720 = vmatpush2.msra.mxu0 0.0
    %2721 = vmatprep.subr.mxu0 0.0
    %2722 = vmatpush2.msra.mxu0 0.0
    %2723 = vmatprep.subr.mxu0 0.0
    %2724 = vmatpush2.msra.mxu0 0.0
    %2725 = vmatprep.subr.mxu0 0.0
    %2726 = vmatpush2.msra.mxu0 0.0
    %2727 = vmatprep.subr.mxu0 0.0
    %2728 = vmatpush2.msra.mxu0 0.0
    %2729 = vmatprep.subr.mxu0 0.0
    %2730 = vmatpush2.msra.mxu0 0.0
    %2731 = vmatprep.mubr.f32.mxu0 0.0
    %v2732 = vand.u32 %v60, 4294901760
    %v2733 = vsub.f32 %v60, %v2732
    %v2734 = vand.u32 %v2733, 4294901760
    %2735 = vmatmul.mubr.f32.gmra.mxu0 %v2734
    %v2736 = vpop.f32.mrf.mxu0
    %v2737 = vadd.f32 %v2642, %v2736
    %v2738 = vpop.f32.mrf.mxu0
    %2739 = vmatprep.mubr.f32.mxu0 0.0
    %v2740 = vand.u32 %v63, 4294901760
    %v2741 = vsub.f32 %v63, %v2740
    %v2742 = vand.u32 %v2741, 4294901760
    %2743 = vmatmul.mubr.f32.gmra.mxu0 %v2742
    %v2744 = vpop.f32.mrf.mxu0
    %v2745 = vadd.f32 %v2649, %v2744
    %v2746 = vpop.f32.mrf.mxu0
    %2747 = vmatprep.mubr.f32.mxu0 0.0
    %v2748 = vand.u32 %v66, 4294901760
    %v2749 = vsub.f32 %v66, %v2748
    %v2750 = vand.u32 %v2749, 4294901760
    %2751 = vmatmul.mubr.f32.gmra.mxu0 %v2750
    %v2752 = vpop.f32.mrf.mxu0
    %v2753 = vadd.f32 %v2656, %v2752
    %v2754 = vpop.f32.mrf.mxu0
    %2755 = vmatprep.mubr.f32.mxu0 0.0
    %v2756 = vand.u32 %v69, 4294901760
    %v2757 = vsub.f32 %v69, %v2756
    %v2758 = vand.u32 %v2757, 4294901760
    %2759 = vmatmul.mubr.f32.gmra.mxu0 %v2758
    %v2760 = vpop.f32.mrf.mxu0
    %v2761 = vadd.f32 %v2663, %v2760
    %v2762 = vpop.f32.mrf.mxu0
    %2763 = vdwg.mxu0
    %2764 = vmatprep.subr.mxu0 0.0
    %2765 = vmatpush1.msra.mxu0 0.0
    %2766 = vmatprep.subr.mxu0 0.0
    %2767 = vmatpush1.msra.mxu0 0.0
    %2768 = vmatprep.subr.mxu0 0.0
    %2769 = vmatpush1.msra.mxu0 0.0
    %2770 = vmatprep.subr.mxu0 0.0
    %2771 = vmatpush1.msra.mxu0 0.0
    %2772 = vmatprep.subr.mxu0 0.0
    %2773 = vmatpush1.msra.mxu0 0.0
    %2774 = vmatprep.subr.mxu0 0.0
    %2775 = vmatpush1.msra.mxu0 0.0
    %2776 = vmatprep.subr.mxu0 0.0
    %2777 = vmatpush1.msra.mxu0 0.0
    %2778 = vmatprep.subr.mxu0 0.0
    %2779 = vmatpush1.msra.mxu0 0.0
    %2780 = vmatprep.subr.mxu0 0.0
    %2781 = vmatpush1.msra.mxu0 0.0
    %2782 = vmatprep.subr.mxu0 0.0
    %2783 = vmatpush1.msra.mxu0 0.0
    %2784 = vmatprep.subr.mxu0 0.0
    %2785 = vmatpush1.msra.mxu0 0.0
    %2786 = vmatprep.subr.mxu0 0.0
    %2787 = vmatpush1.msra.mxu0 0.0
    %2788 = vmatprep.subr.mxu0 0.0
    %2789 = vmatpush1.msra.mxu0 0.0
    %2790 = vmatprep.subr.mxu0 0.0
    %2791 = vmatpush1.msra.mxu0 0.0
    %2792 = vmatprep.subr.mxu0 0.0
    %2793 = vmatpush1.msra.mxu0 0.0
    %2794 = vmatprep.subr.mxu0 0.0
    %v2795 = vand.u32 %v54, 4294901760
    %v2796 = vsub.f32 %v54, %v2795
    %v2797 = vand.u32 %v2796, 4294901760
    %2798 = vmatpush1.msra.mxu0 %v2797
    %2799 = vmatprep.subr.mxu0 0.0
    %2800 = vmatpush2.msra.mxu0 0.0
    %2801 = vmatprep.subr.mxu0 0.0
    %2802 = vmatpush2.msra.mxu0 0.0
    %2803 = vmatprep.subr.mxu0 0.0
    %2804 = vmatpush2.msra.mxu0 0.0
    %2805 = vmatprep.subr.mxu0 0.0
    %2806 = vmatpush2.msra.mxu0 0.0
    %2807 = vmatprep.subr.mxu0 0.0
    %2808 = vmatpush2.msra.mxu0 0.0
    %2809 = vmatprep.subr.mxu0 0.0
    %2810 = vmatpush2.msra.mxu0 0.0
    %2811 = vmatprep.subr.mxu0 0.0
    %2812 = vmatpush2.msra.mxu0 0.0
    %2813 = vmatprep.subr.mxu0 0.0
    %2814 = vmatpush2.msra.mxu0 0.0
    %2815 = vmatprep.subr.mxu0 0.0
    %2816 = vmatpush2.msra.mxu0 0.0
    %2817 = vmatprep.subr.mxu0 0.0
    %2818 = vmatpush2.msra.mxu0 0.0
    %2819 = vmatprep.subr.mxu0 0.0
    %2820 = vmatpush2.msra.mxu0 0.0
    %2821 = vmatprep.subr.mxu0 0.0
    %2822 = vmatpush2.msra.mxu0 0.0
    %2823 = vmatprep.subr.mxu0 0.0
    %2824 = vmatpush2.msra.mxu0 0.0
    %2825 = vmatprep.subr.mxu0 0.0
    %2826 = vmatpush2.msra.mxu0 0.0
    %2827 = vmatprep.subr.mxu0 0.0
    %2828 = vmatpush2.msra.mxu0 0.0
    %2829 = vmatprep.subr.mxu0 0.0
    %2830 = vmatpush2.msra.mxu0 0.0
    %2831 = vmatprep.mubr.f32.mxu0 0.0
    %v2832 = vand.u32 %v60, 4294901760
    %2833 = vmatmul.mubr.f32.gmra.mxu0 %v2832
    %v2834 = vpop.f32.mrf.mxu0
    %v2835 = vadd.f32 %v2737, %v2834
    %v2836 = vpop.f32.mrf.mxu0
    %2837 = vmatprep.mubr.f32.mxu0 0.0
    %v2838 = vand.u32 %v63, 4294901760
    %2839 = vmatmul.mubr.f32.gmra.mxu0 %v2838
    %v2840 = vpop.f32.mrf.mxu0
    %v2841 = vadd.f32 %v2745, %v2840
    %v2842 = vpop.f32.mrf.mxu0
    %2843 = vmatprep.mubr.f32.mxu0 0.0
    %v2844 = vand.u32 %v66, 4294901760
    %2845 = vmatmul.mubr.f32.gmra.mxu0 %v2844
    %v2846 = vpop.f32.mrf.mxu0
    %v2847 = vadd.f32 %v2753, %v2846
    %v2848 = vpop.f32.mrf.mxu0
    %2849 = vmatprep.mubr.f32.mxu0 0.0
    %v2850 = vand.u32 %v69, 4294901760
    %2851 = vmatmul.mubr.f32.gmra.mxu0 %v2850
    %v2852 = vpop.f32.mrf.mxu0
    %v2853 = vadd.f32 %v2761, %v2852
    %v2854 = vpop.f32.mrf.mxu0
    %2855 = vdwg.mxu0
    %2856 = vmatprep.subr.mxu0 0.0
    %2857 = vmatpush1.msra.mxu0 0.0
    %2858 = vmatprep.subr.mxu0 0.0
    %2859 = vmatpush1.msra.mxu0 0.0
    %2860 = vmatprep.subr.mxu0 0.0
    %2861 = vmatpush1.msra.mxu0 0.0
    %2862 = vmatprep.subr.mxu0 0.0
    %2863 = vmatpush1.msra.mxu0 0.0
    %2864 = vmatprep.subr.mxu0 0.0
    %2865 = vmatpush1.msra.mxu0 0.0
    %2866 = vmatprep.subr.mxu0 0.0
    %2867 = vmatpush1.msra.mxu0 0.0
    %2868 = vmatprep.subr.mxu0 0.0
    %2869 = vmatpush1.msra.mxu0 0.0
    %2870 = vmatprep.subr.mxu0 0.0
    %2871 = vmatpush1.msra.mxu0 0.0
    %2872 = vmatprep.subr.mxu0 0.0
    %2873 = vmatpush1.msra.mxu0 0.0
    %2874 = vmatprep.subr.mxu0 0.0
    %2875 = vmatpush1.msra.mxu0 0.0
    %2876 = vmatprep.subr.mxu0 0.0
    %2877 = vmatpush1.msra.mxu0 0.0
    %2878 = vmatprep.subr.mxu0 0.0
    %2879 = vmatpush1.msra.mxu0 0.0
    %2880 = vmatprep.subr.mxu0 0.0
    %2881 = vmatpush1.msra.mxu0 0.0
    %2882 = vmatprep.subr.mxu0 0.0
    %2883 = vmatpush1.msra.mxu0 0.0
    %2884 = vmatprep.subr.mxu0 0.0
    %2885 = vmatpush1.msra.mxu0 0.0
    %2886 = vmatprep.subr.mxu0 0.0
    %v2887 = vand.u32 %v54, 4294901760
    %2888 = vmatpush1.msra.mxu0 %v2887
    %2889 = vmatprep.subr.mxu0 0.0
    %2890 = vmatpush2.msra.mxu0 0.0
    %2891 = vmatprep.subr.mxu0 0.0
    %2892 = vmatpush2.msra.mxu0 0.0
    %2893 = vmatprep.subr.mxu0 0.0
    %2894 = vmatpush2.msra.mxu0 0.0
    %2895 = vmatprep.subr.mxu0 0.0
    %2896 = vmatpush2.msra.mxu0 0.0
    %2897 = vmatprep.subr.mxu0 0.0
    %2898 = vmatpush2.msra.mxu0 0.0
    %2899 = vmatprep.subr.mxu0 0.0
    %2900 = vmatpush2.msra.mxu0 0.0
    %2901 = vmatprep.subr.mxu0 0.0
    %2902 = vmatpush2.msra.mxu0 0.0
    %2903 = vmatprep.subr.mxu0 0.0
    %2904 = vmatpush2.msra.mxu0 0.0
    %2905 = vmatprep.subr.mxu0 0.0
    %2906 = vmatpush2.msra.mxu0 0.0
    %2907 = vmatprep.subr.mxu0 0.0
    %2908 = vmatpush2.msra.mxu0 0.0
    %2909 = vmatprep.subr.mxu0 0.0
    %2910 = vmatpush2.msra.mxu0 0.0
    %2911 = vmatprep.subr.mxu0 0.0
    %2912 = vmatpush2.msra.mxu0 0.0
    %2913 = vmatprep.subr.mxu0 0.0
    %2914 = vmatpush2.msra.mxu0 0.0
    %2915 = vmatprep.subr.mxu0 0.0
    %2916 = vmatpush2.msra.mxu0 0.0
    %2917 = vmatprep.subr.mxu0 0.0
    %2918 = vmatpush2.msra.mxu0 0.0
    %2919 = vmatprep.subr.mxu0 0.0
    %2920 = vmatpush2.msra.mxu0 0.0
    %2921 = vmatprep.mubr.f32.mxu0 0.0
    %v2922 = vand.u32 %v60, 4294901760
    %2923 = vmatmul.mubr.f32.gmra.mxu0 %v2922
    %v2924 = vpop.f32.mrf.mxu0
    %v2925 = vadd.f32 %v2835, %v2924
    %v2926 = vpop.f32.mrf.mxu0
    %2927 = vmatprep.mubr.f32.mxu0 0.0
    %v2928 = vand.u32 %v63, 4294901760
    %2929 = vmatmul.mubr.f32.gmra.mxu0 %v2928
    %v2930 = vpop.f32.mrf.mxu0
    %v2931 = vadd.f32 %v2841, %v2930
    %v2932 = vpop.f32.mrf.mxu0
    %2933 = vmatprep.mubr.f32.mxu0 0.0
    %v2934 = vand.u32 %v66, 4294901760
    %2935 = vmatmul.mubr.f32.gmra.mxu0 %v2934
    %v2936 = vpop.f32.mrf.mxu0
    %v2937 = vadd.f32 %v2847, %v2936
    %v2938 = vpop.f32.mrf.mxu0
    %2939 = vmatprep.mubr.f32.mxu0 0.0
    %v2940 = vand.u32 %v69, 4294901760
    %2941 = vmatmul.mubr.f32.gmra.mxu0 %v2940
    %v2942 = vpop.f32.mrf.mxu0
    %v2943 = vadd.f32 %v2853, %v2942
    %v2944 = vpop.f32.mrf.mxu0
    %2945 = vdwg.mxu0
    %2946 = vmatprep.subr.mxu0 0.0
    %2947 = vmatpush1.msra.mxu0 0.0
    %2948 = vmatprep.subr.mxu0 0.0
    %2949 = vmatpush1.msra.mxu0 0.0
    %2950 = vmatprep.subr.mxu0 0.0
    %2951 = vmatpush1.msra.mxu0 0.0
    %2952 = vmatprep.subr.mxu0 0.0
    %2953 = vmatpush1.msra.mxu0 0.0
    %2954 = vmatprep.subr.mxu0 0.0
    %2955 = vmatpush1.msra.mxu0 0.0
    %2956 = vmatprep.subr.mxu0 0.0
    %2957 = vmatpush1.msra.mxu0 0.0
    %2958 = vmatprep.subr.mxu0 0.0
    %2959 = vmatpush1.msra.mxu0 0.0
    %2960 = vmatprep.subr.mxu0 0.0
    %2961 = vmatpush1.msra.mxu0 0.0
    %2962 = vmatprep.subr.mxu0 0.0
    %2963 = vmatpush1.msra.mxu0 0.0
    %2964 = vmatprep.subr.mxu0 0.0
    %2965 = vmatpush1.msra.mxu0 0.0
    %2966 = vmatprep.subr.mxu0 0.0
    %2967 = vmatpush1.msra.mxu0 0.0
    %2968 = vmatprep.subr.mxu0 0.0
    %2969 = vmatpush1.msra.mxu0 0.0
    %2970 = vmatprep.subr.mxu0 0.0
    %2971 = vmatpush1.msra.mxu0 0.0
    %2972 = vmatprep.subr.mxu0 0.0
    %2973 = vmatpush1.msra.mxu0 0.0
    %2974 = vmatprep.subr.mxu0 0.0
    %2975 = vmatpush1.msra.mxu0 0.0
    %2976 = vmatprep.subr.mxu0 0.0
    %v2977 = vand.u32 %v55, 4294901760
    %2978 = vmatpush1.msra.mxu0 %v2977
    %2979 = vmatprep.subr.mxu0 0.0
    %2980 = vmatpush2.msra.mxu0 0.0
    %2981 = vmatprep.subr.mxu0 0.0
    %2982 = vmatpush2.msra.mxu0 0.0
    %2983 = vmatprep.subr.mxu0 0.0
    %2984 = vmatpush2.msra.mxu0 0.0
    %2985 = vmatprep.subr.mxu0 0.0
    %2986 = vmatpush2.msra.mxu0 0.0
    %2987 = vmatprep.subr.mxu0 0.0
    %2988 = vmatpush2.msra.mxu0 0.0
    %2989 = vmatprep.subr.mxu0 0.0
    %2990 = vmatpush2.msra.mxu0 0.0
    %2991 = vmatprep.subr.mxu0 0.0
    %2992 = vmatpush2.msra.mxu0 0.0
    %2993 = vmatprep.subr.mxu0 0.0
    %2994 = vmatpush2.msra.mxu0 0.0
    %2995 = vmatprep.subr.mxu0 0.0
    %2996 = vmatpush2.msra.mxu0 0.0
    %2997 = vmatprep.subr.mxu0 0.0
    %2998 = vmatpush2.msra.mxu0 0.0
    %2999 = vmatprep.subr.mxu0 0.0
    %3000 = vmatpush2.msra.mxu0 0.0
    %3001 = vmatprep.subr.mxu0 0.0
    %3002 = vmatpush2.msra.mxu0 0.0
    %3003 = vmatprep.subr.mxu0 0.0
    %3004 = vmatpush2.msra.mxu0 0.0
    %3005 = vmatprep.subr.mxu0 0.0
    %3006 = vmatpush2.msra.mxu0 0.0
    %3007 = vmatprep.subr.mxu0 0.0
    %3008 = vmatpush2.msra.mxu0 0.0
    %3009 = vmatprep.subr.mxu0 0.0
    %3010 = vmatpush2.msra.mxu0 0.0
    %3011 = vmatprep.mubr.f32.mxu0 0.0
    %v3012 = vand.u32 %v60, 4294901760
    %v3013 = vsub.f32 %v60, %v3012
    %v3014 = vand.u32 %v3013, 4294901760
    %v3015 = vsub.f32 %v3013, %v3014
    %v3016 = vand.u32 %v3015, 4294901760
    %3017 = vmatmul.mubr.f32.gmra.mxu0 %v3016
    %v3018 = vpop.f32.mrf.mxu0
    %v3019 = vadd.f32 0.0, %v3018
    %v3020 = vpop.f32.mrf.mxu0
    %3021 = vmatprep.mubr.f32.mxu0 0.0
    %v3022 = vand.u32 %v63, 4294901760
    %v3023 = vsub.f32 %v63, %v3022
    %v3024 = vand.u32 %v3023, 4294901760
    %v3025 = vsub.f32 %v3023, %v3024
    %v3026 = vand.u32 %v3025, 4294901760
    %3027 = vmatmul.mubr.f32.gmra.mxu0 %v3026
    %v3028 = vpop.f32.mrf.mxu0
    %v3029 = vadd.f32 0.0, %v3028
    %v3030 = vpop.f32.mrf.mxu0
    %3031 = vmatprep.mubr.f32.mxu0 0.0
    %v3032 = vand.u32 %v66, 4294901760
    %v3033 = vsub.f32 %v66, %v3032
    %v3034 = vand.u32 %v3033, 4294901760
    %v3035 = vsub.f32 %v3033, %v3034
    %v3036 = vand.u32 %v3035, 4294901760
    %3037 = vmatmul.mubr.f32.gmra.mxu0 %v3036
    %v3038 = vpop.f32.mrf.mxu0
    %v3039 = vadd.f32 0.0, %v3038
    %v3040 = vpop.f32.mrf.mxu0
    %3041 = vmatprep.mubr.f32.mxu0 0.0
    %v3042 = vand.u32 %v69, 4294901760
    %v3043 = vsub.f32 %v69, %v3042
    %v3044 = vand.u32 %v3043, 4294901760
    %v3045 = vsub.f32 %v3043, %v3044
    %v3046 = vand.u32 %v3045, 4294901760
    %3047 = vmatmul.mubr.f32.gmra.mxu0 %v3046
    %v3048 = vpop.f32.mrf.mxu0
    %v3049 = vadd.f32 0.0, %v3048
    %v3050 = vpop.f32.mrf.mxu0
    %3051 = vdwg.mxu0
    %3052 = vmatprep.subr.mxu0 0.0
    %3053 = vmatpush1.msra.mxu0 0.0
    %3054 = vmatprep.subr.mxu0 0.0
    %3055 = vmatpush1.msra.mxu0 0.0
    %3056 = vmatprep.subr.mxu0 0.0
    %3057 = vmatpush1.msra.mxu0 0.0
    %3058 = vmatprep.subr.mxu0 0.0
    %3059 = vmatpush1.msra.mxu0 0.0
    %3060 = vmatprep.subr.mxu0 0.0
    %3061 = vmatpush1.msra.mxu0 0.0
    %3062 = vmatprep.subr.mxu0 0.0
    %3063 = vmatpush1.msra.mxu0 0.0
    %3064 = vmatprep.subr.mxu0 0.0
    %3065 = vmatpush1.msra.mxu0 0.0
    %3066 = vmatprep.subr.mxu0 0.0
    %3067 = vmatpush1.msra.mxu0 0.0
    %3068 = vmatprep.subr.mxu0 0.0
    %3069 = vmatpush1.msra.mxu0 0.0
    %3070 = vmatprep.subr.mxu0 0.0
    %3071 = vmatpush1.msra.mxu0 0.0
    %3072 = vmatprep.subr.mxu0 0.0
    %3073 = vmatpush1.msra.mxu0 0.0
    %3074 = vmatprep.subr.mxu0 0.0
    %3075 = vmatpush1.msra.mxu0 0.0
    %3076 = vmatprep.subr.mxu0 0.0
    %3077 = vmatpush1.msra.mxu0 0.0
    %3078 = vmatprep.subr.mxu0 0.0
    %3079 = vmatpush1.msra.mxu0 0.0
    %3080 = vmatprep.subr.mxu0 0.0
    %3081 = vmatpush1.msra.mxu0 0.0
    %3082 = vmatprep.subr.mxu0 0.0
    %v3083 = vand.u32 %v55, 4294901760
    %v3084 = vsub.f32 %v55, %v3083
    %v3085 = vand.u32 %v3084, 4294901760
    %v3086 = vsub.f32 %v3084, %v3085
    %v3087 = vand.u32 %v3086, 4294901760
    %3088 = vmatpush1.msra.mxu0 %v3087
    %3089 = vmatprep.subr.mxu0 0.0
    %3090 = vmatpush2.msra.mxu0 0.0
    %3091 = vmatprep.subr.mxu0 0.0
    %3092 = vmatpush2.msra.mxu0 0.0
    %3093 = vmatprep.subr.mxu0 0.0
    %3094 = vmatpush2.msra.mxu0 0.0
    %3095 = vmatprep.subr.mxu0 0.0
    %3096 = vmatpush2.msra.mxu0 0.0
    %3097 = vmatprep.subr.mxu0 0.0
    %3098 = vmatpush2.msra.mxu0 0.0
    %3099 = vmatprep.subr.mxu0 0.0
    %3100 = vmatpush2.msra.mxu0 0.0
    %3101 = vmatprep.subr.mxu0 0.0
    %3102 = vmatpush2.msra.mxu0 0.0
    %3103 = vmatprep.subr.mxu0 0.0
    %3104 = vmatpush2.msra.mxu0 0.0
    %3105 = vmatprep.subr.mxu0 0.0
    %3106 = vmatpush2.msra.mxu0 0.0
    %3107 = vmatprep.subr.mxu0 0.0
    %3108 = vmatpush2.msra.mxu0 0.0
    %3109 = vmatprep.subr.mxu0 0.0
    %3110 = vmatpush2.msra.mxu0 0.0
    %3111 = vmatprep.subr.mxu0 0.0
    %3112 = vmatpush2.msra.mxu0 0.0
    %3113 = vmatprep.subr.mxu0 0.0
    %3114 = vmatpush2.msra.mxu0 0.0
    %3115 = vmatprep.subr.mxu0 0.0
    %3116 = vmatpush2.msra.mxu0 0.0
    %3117 = vmatprep.subr.mxu0 0.0
    %3118 = vmatpush2.msra.mxu0 0.0
    %3119 = vmatprep.subr.mxu0 0.0
    %3120 = vmatpush2.msra.mxu0 0.0
    %3121 = vmatprep.mubr.f32.mxu0 0.0
    %v3122 = vand.u32 %v60, 4294901760
    %3123 = vmatmul.mubr.f32.gmra.mxu0 %v3122
    %v3124 = vpop.f32.mrf.mxu0
    %v3125 = vadd.f32 %v3019, %v3124
    %v3126 = vpop.f32.mrf.mxu0
    %3127 = vmatprep.mubr.f32.mxu0 0.0
    %v3128 = vand.u32 %v63, 4294901760
    %3129 = vmatmul.mubr.f32.gmra.mxu0 %v3128
    %v3130 = vpop.f32.mrf.mxu0
    %v3131 = vadd.f32 %v3029, %v3130
    %v3132 = vpop.f32.mrf.mxu0
    %3133 = vmatprep.mubr.f32.mxu0 0.0
    %v3134 = vand.u32 %v66, 4294901760
    %3135 = vmatmul.mubr.f32.gmra.mxu0 %v3134
    %v3136 = vpop.f32.mrf.mxu0
    %v3137 = vadd.f32 %v3039, %v3136
    %v3138 = vpop.f32.mrf.mxu0
    %3139 = vmatprep.mubr.f32.mxu0 0.0
    %v3140 = vand.u32 %v69, 4294901760
    %3141 = vmatmul.mubr.f32.gmra.mxu0 %v3140
    %v3142 = vpop.f32.mrf.mxu0
    %v3143 = vadd.f32 %v3049, %v3142
    %v3144 = vpop.f32.mrf.mxu0
    %3145 = vdwg.mxu0
    %3146 = vmatprep.subr.mxu0 0.0
    %3147 = vmatpush1.msra.mxu0 0.0
    %3148 = vmatprep.subr.mxu0 0.0
    %3149 = vmatpush1.msra.mxu0 0.0
    %3150 = vmatprep.subr.mxu0 0.0
    %3151 = vmatpush1.msra.mxu0 0.0
    %3152 = vmatprep.subr.mxu0 0.0
    %3153 = vmatpush1.msra.mxu0 0.0
    %3154 = vmatprep.subr.mxu0 0.0
    %3155 = vmatpush1.msra.mxu0 0.0
    %3156 = vmatprep.subr.mxu0 0.0
    %3157 = vmatpush1.msra.mxu0 0.0
    %3158 = vmatprep.subr.mxu0 0.0
    %3159 = vmatpush1.msra.mxu0 0.0
    %3160 = vmatprep.subr.mxu0 0.0
    %3161 = vmatpush1.msra.mxu0 0.0
    %3162 = vmatprep.subr.mxu0 0.0
    %3163 = vmatpush1.msra.mxu0 0.0
    %3164 = vmatprep.subr.mxu0 0.0
    %3165 = vmatpush1.msra.mxu0 0.0
    %3166 = vmatprep.subr.mxu0 0.0
    %3167 = vmatpush1.msra.mxu0 0.0
    %3168 = vmatprep.subr.mxu0 0.0
    %3169 = vmatpush1.msra.mxu0 0.0
    %3170 = vmatprep.subr.mxu0 0.0
    %3171 = vmatpush1.msra.mxu0 0.0
    %3172 = vmatprep.subr.mxu0 0.0
    %3173 = vmatpush1.msra.mxu0 0.0
    %3174 = vmatprep.subr.mxu0 0.0
    %3175 = vmatpush1.msra.mxu0 0.0
    %3176 = vmatprep.subr.mxu0 0.0
    %v3177 = vand.u32 %v55, 4294901760
    %v3178 = vsub.f32 %v55, %v3177
    %3179 = vmatpush1.msra.mxu0 %v3178
    %3180 = vmatprep.subr.mxu0 0.0
    %3181 = vmatpush2.msra.mxu0 0.0
    %3182 = vmatprep.subr.mxu0 0.0
    %3183 = vmatpush2.msra.mxu0 0.0
    %3184 = vmatprep.subr.mxu0 0.0
    %3185 = vmatpush2.msra.mxu0 0.0
    %3186 = vmatprep.subr.mxu0 0.0
    %3187 = vmatpush2.msra.mxu0 0.0
    %3188 = vmatprep.subr.mxu0 0.0
    %3189 = vmatpush2.msra.mxu0 0.0
    %3190 = vmatprep.subr.mxu0 0.0
    %3191 = vmatpush2.msra.mxu0 0.0
    %3192 = vmatprep.subr.mxu0 0.0
    %3193 = vmatpush2.msra.mxu0 0.0
    %3194 = vmatprep.subr.mxu0 0.0
    %3195 = vmatpush2.msra.mxu0 0.0
    %3196 = vmatprep.subr.mxu0 0.0
    %3197 = vmatpush2.msra.mxu0 0.0
    %3198 = vmatprep.subr.mxu0 0.0
    %3199 = vmatpush2.msra.mxu0 0.0
    %3200 = vmatprep.subr.mxu0 0.0
    %3201 = vmatpush2.msra.mxu0 0.0
    %3202 = vmatprep.subr.mxu0 0.0
    %3203 = vmatpush2.msra.mxu0 0.0
    %3204 = vmatprep.subr.mxu0 0.0
    %3205 = vmatpush2.msra.mxu0 0.0
    %3206 = vmatprep.subr.mxu0 0.0
    %3207 = vmatpush2.msra.mxu0 0.0
    %3208 = vmatprep.subr.mxu0 0.0
    %3209 = vmatpush2.msra.mxu0 0.0
    %3210 = vmatprep.subr.mxu0 0.0
    %3211 = vmatpush2.msra.mxu0 0.0
    %3212 = vmatprep.mubr.f32.mxu0 0.0
    %v3213 = vand.u32 %v60, 4294901760
    %v3214 = vsub.f32 %v60, %v3213
    %3215 = vmatmul.mubr.f32.gmra.mxu0 %v3214
    %v3216 = vpop.f32.mrf.mxu0
    %v3217 = vadd.f32 %v3125, %v3216
    %v3218 = vpop.f32.mrf.mxu0
    %3219 = vmatprep.mubr.f32.mxu0 0.0
    %v3220 = vand.u32 %v63, 4294901760
    %v3221 = vsub.f32 %v63, %v3220
    %3222 = vmatmul.mubr.f32.gmra.mxu0 %v3221
    %v3223 = vpop.f32.mrf.mxu0
    %v3224 = vadd.f32 %v3131, %v3223
    %v3225 = vpop.f32.mrf.mxu0
    %3226 = vmatprep.mubr.f32.mxu0 0.0
    %v3227 = vand.u32 %v66, 4294901760
    %v3228 = vsub.f32 %v66, %v3227
    %3229 = vmatmul.mubr.f32.gmra.mxu0 %v3228
    %v3230 = vpop.f32.mrf.mxu0
    %v3231 = vadd.f32 %v3137, %v3230
    %v3232 = vpop.f32.mrf.mxu0
    %3233 = vmatprep.mubr.f32.mxu0 0.0
    %v3234 = vand.u32 %v69, 4294901760
    %v3235 = vsub.f32 %v69, %v3234
    %3236 = vmatmul.mubr.f32.gmra.mxu0 %v3235
    %v3237 = vpop.f32.mrf.mxu0
    %v3238 = vadd.f32 %v3143, %v3237
    %v3239 = vpop.f32.mrf.mxu0
    %3240 = vdwg.mxu0
    %3241 = vmatprep.subr.mxu0 0.0
    %3242 = vmatpush1.msra.mxu0 0.0
    %3243 = vmatprep.subr.mxu0 0.0
    %3244 = vmatpush1.msra.mxu0 0.0
    %3245 = vmatprep.subr.mxu0 0.0
    %3246 = vmatpush1.msra.mxu0 0.0
    %3247 = vmatprep.subr.mxu0 0.0
    %3248 = vmatpush1.msra.mxu0 0.0
    %3249 = vmatprep.subr.mxu0 0.0
    %3250 = vmatpush1.msra.mxu0 0.0
    %3251 = vmatprep.subr.mxu0 0.0
    %3252 = vmatpush1.msra.mxu0 0.0
    %3253 = vmatprep.subr.mxu0 0.0
    %3254 = vmatpush1.msra.mxu0 0.0
    %3255 = vmatprep.subr.mxu0 0.0
    %3256 = vmatpush1.msra.mxu0 0.0
    %3257 = vmatprep.subr.mxu0 0.0
    %3258 = vmatpush1.msra.mxu0 0.0
    %3259 = vmatprep.subr.mxu0 0.0
    %3260 = vmatpush1.msra.mxu0 0.0
    %3261 = vmatprep.subr.mxu0 0.0
    %3262 = vmatpush1.msra.mxu0 0.0
    %3263 = vmatprep.subr.mxu0 0.0
    %3264 = vmatpush1.msra.mxu0 0.0
    %3265 = vmatprep.subr.mxu0 0.0
    %3266 = vmatpush1.msra.mxu0 0.0
    %3267 = vmatprep.subr.mxu0 0.0
    %3268 = vmatpush1.msra.mxu0 0.0
    %3269 = vmatprep.subr.mxu0 0.0
    %3270 = vmatpush1.msra.mxu0 0.0
    %3271 = vmatprep.subr.mxu0 0.0
    %v3272 = vand.u32 %v55, 4294901760
    %3273 = vmatpush1.msra.mxu0 %v3272
    %3274 = vmatprep.subr.mxu0 0.0
    %3275 = vmatpush2.msra.mxu0 0.0
    %3276 = vmatprep.subr.mxu0 0.0
    %3277 = vmatpush2.msra.mxu0 0.0
    %3278 = vmatprep.subr.mxu0 0.0
    %3279 = vmatpush2.msra.mxu0 0.0
    %3280 = vmatprep.subr.mxu0 0.0
    %3281 = vmatpush2.msra.mxu0 0.0
    %3282 = vmatprep.subr.mxu0 0.0
    %3283 = vmatpush2.msra.mxu0 0.0
    %3284 = vmatprep.subr.mxu0 0.0
    %3285 = vmatpush2.msra.mxu0 0.0
    %3286 = vmatprep.subr.mxu0 0.0
    %3287 = vmatpush2.msra.mxu0 0.0
    %3288 = vmatprep.subr.mxu0 0.0
    %3289 = vmatpush2.msra.mxu0 0.0
    %3290 = vmatprep.subr.mxu0 0.0
    %3291 = vmatpush2.msra.mxu0 0.0
    %3292 = vmatprep.subr.mxu0 0.0
    %3293 = vmatpush2.msra.mxu0 0.0
    %3294 = vmatprep.subr.mxu0 0.0
    %3295 = vmatpush2.msra.mxu0 0.0
    %3296 = vmatprep.subr.mxu0 0.0
    %3297 = vmatpush2.msra.mxu0 0.0
    %3298 = vmatprep.subr.mxu0 0.0
    %3299 = vmatpush2.msra.mxu0 0.0
    %3300 = vmatprep.subr.mxu0 0.0
    %3301 = vmatpush2.msra.mxu0 0.0
    %3302 = vmatprep.subr.mxu0 0.0
    %3303 = vmatpush2.msra.mxu0 0.0
    %3304 = vmatprep.subr.mxu0 0.0
    %3305 = vmatpush2.msra.mxu0 0.0
    %3306 = vmatprep.mubr.f32.mxu0 0.0
    %v3307 = vand.u32 %v60, 4294901760
    %v3308 = vsub.f32 %v60, %v3307
    %v3309 = vand.u32 %v3308, 4294901760
    %3310 = vmatmul.mubr.f32.gmra.mxu0 %v3309
    %v3311 = vpop.f32.mrf.mxu0
    %v3312 = vadd.f32 %v3217, %v3311
    %v3313 = vpop.f32.mrf.mxu0
    %3314 = vmatprep.mubr.f32.mxu0 0.0
    %v3315 = vand.u32 %v63, 4294901760
    %v3316 = vsub.f32 %v63, %v3315
    %v3317 = vand.u32 %v3316, 4294901760
    %3318 = vmatmul.mubr.f32.gmra.mxu0 %v3317
    %v3319 = vpop.f32.mrf.mxu0
    %v3320 = vadd.f32 %v3224, %v3319
    %v3321 = vpop.f32.mrf.mxu0
    %3322 = vmatprep.mubr.f32.mxu0 0.0
    %v3323 = vand.u32 %v66, 4294901760
    %v3324 = vsub.f32 %v66, %v3323
    %v3325 = vand.u32 %v3324, 4294901760
    %3326 = vmatmul.mubr.f32.gmra.mxu0 %v3325
    %v3327 = vpop.f32.mrf.mxu0
    %v3328 = vadd.f32 %v3231, %v3327
    %v3329 = vpop.f32.mrf.mxu0
    %3330 = vmatprep.mubr.f32.mxu0 0.0
    %v3331 = vand.u32 %v69, 4294901760
    %v3332 = vsub.f32 %v69, %v3331
    %v3333 = vand.u32 %v3332, 4294901760
    %3334 = vmatmul.mubr.f32.gmra.mxu0 %v3333
    %v3335 = vpop.f32.mrf.mxu0
    %v3336 = vadd.f32 %v3238, %v3335
    %v3337 = vpop.f32.mrf.mxu0
    %3338 = vdwg.mxu0
    %3339 = vmatprep.subr.mxu0 0.0
    %3340 = vmatpush1.msra.mxu0 0.0
    %3341 = vmatprep.subr.mxu0 0.0
    %3342 = vmatpush1.msra.mxu0 0.0
    %3343 = vmatprep.subr.mxu0 0.0
    %3344 = vmatpush1.msra.mxu0 0.0
    %3345 = vmatprep.subr.mxu0 0.0
    %3346 = vmatpush1.msra.mxu0 0.0
    %3347 = vmatprep.subr.mxu0 0.0
    %3348 = vmatpush1.msra.mxu0 0.0
    %3349 = vmatprep.subr.mxu0 0.0
    %3350 = vmatpush1.msra.mxu0 0.0
    %3351 = vmatprep.subr.mxu0 0.0
    %3352 = vmatpush1.msra.mxu0 0.0
    %3353 = vmatprep.subr.mxu0 0.0
    %3354 = vmatpush1.msra.mxu0 0.0
    %3355 = vmatprep.subr.mxu0 0.0
    %3356 = vmatpush1.msra.mxu0 0.0
    %3357 = vmatprep.subr.mxu0 0.0
    %3358 = vmatpush1.msra.mxu0 0.0
    %3359 = vmatprep.subr.mxu0 0.0
    %3360 = vmatpush1.msra.mxu0 0.0
    %3361 = vmatprep.subr.mxu0 0.0
    %3362 = vmatpush1.msra.mxu0 0.0
    %3363 = vmatprep.subr.mxu0 0.0
    %3364 = vmatpush1.msra.mxu0 0.0
    %3365 = vmatprep.subr.mxu0 0.0
    %3366 = vmatpush1.msra.mxu0 0.0
    %3367 = vmatprep.subr.mxu0 0.0
    %3368 = vmatpush1.msra.mxu0 0.0
    %3369 = vmatprep.subr.mxu0 0.0
    %v3370 = vand.u32 %v55, 4294901760
    %v3371 = vsub.f32 %v55, %v3370
    %v3372 = vand.u32 %v3371, 4294901760
    %3373 = vmatpush1.msra.mxu0 %v3372
    %3374 = vmatprep.subr.mxu0 0.0
    %3375 = vmatpush2.msra.mxu0 0.0
    %3376 = vmatprep.subr.mxu0 0.0
    %3377 = vmatpush2.msra.mxu0 0.0
    %3378 = vmatprep.subr.mxu0 0.0
    %3379 = vmatpush2.msra.mxu0 0.0
    %3380 = vmatprep.subr.mxu0 0.0
    %3381 = vmatpush2.msra.mxu0 0.0
    %3382 = vmatprep.subr.mxu0 0.0
    %3383 = vmatpush2.msra.mxu0 0.0
    %3384 = vmatprep.subr.mxu0 0.0
    %3385 = vmatpush2.msra.mxu0 0.0
    %3386 = vmatprep.subr.mxu0 0.0
    %3387 = vmatpush2.msra.mxu0 0.0
    %3388 = vmatprep.subr.mxu0 0.0
    %3389 = vmatpush2.msra.mxu0 0.0
    %3390 = vmatprep.subr.mxu0 0.0
    %3391 = vmatpush2.msra.mxu0 0.0
    %3392 = vmatprep.subr.mxu0 0.0
    %3393 = vmatpush2.msra.mxu0 0.0
    %3394 = vmatprep.subr.mxu0 0.0
    %3395 = vmatpush2.msra.mxu0 0.0
    %3396 = vmatprep.subr.mxu0 0.0
    %3397 = vmatpush2.msra.mxu0 0.0
    %3398 = vmatprep.subr.mxu0 0.0
    %3399 = vmatpush2.msra.mxu0 0.0
    %3400 = vmatprep.subr.mxu0 0.0
    %3401 = vmatpush2.msra.mxu0 0.0
    %3402 = vmatprep.subr.mxu0 0.0
    %3403 = vmatpush2.msra.mxu0 0.0
    %3404 = vmatprep.subr.mxu0 0.0
    %3405 = vmatpush2.msra.mxu0 0.0
    %3406 = vmatprep.mubr.f32.mxu0 0.0
    %v3407 = vand.u32 %v60, 4294901760
    %3408 = vmatmul.mubr.f32.gmra.mxu0 %v3407
    %v3409 = vpop.f32.mrf.mxu0
    %v3410 = vadd.f32 %v3312, %v3409
    %v3411 = vpop.f32.mrf.mxu0
    %3412 = vmatprep.mubr.f32.mxu0 0.0
    %v3413 = vand.u32 %v63, 4294901760
    %3414 = vmatmul.mubr.f32.gmra.mxu0 %v3413
    %v3415 = vpop.f32.mrf.mxu0
    %v3416 = vadd.f32 %v3320, %v3415
    %v3417 = vpop.f32.mrf.mxu0
    %3418 = vmatprep.mubr.f32.mxu0 0.0
    %v3419 = vand.u32 %v66, 4294901760
    %3420 = vmatmul.mubr.f32.gmra.mxu0 %v3419
    %v3421 = vpop.f32.mrf.mxu0
    %v3422 = vadd.f32 %v3328, %v3421
    %v3423 = vpop.f32.mrf.mxu0
    %3424 = vmatprep.mubr.f32.mxu0 0.0
    %v3425 = vand.u32 %v69, 4294901760
    %3426 = vmatmul.mubr.f32.gmra.mxu0 %v3425
    %v3427 = vpop.f32.mrf.mxu0
    %v3428 = vadd.f32 %v3336, %v3427
    %v3429 = vpop.f32.mrf.mxu0
    %3430 = vdwg.mxu0
    %3431 = vmatprep.subr.mxu0 0.0
    %3432 = vmatpush1.msra.mxu0 0.0
    %3433 = vmatprep.subr.mxu0 0.0
    %3434 = vmatpush1.msra.mxu0 0.0
    %3435 = vmatprep.subr.mxu0 0.0
    %3436 = vmatpush1.msra.mxu0 0.0
    %3437 = vmatprep.subr.mxu0 0.0
    %3438 = vmatpush1.msra.mxu0 0.0
    %3439 = vmatprep.subr.mxu0 0.0
    %3440 = vmatpush1.msra.mxu0 0.0
    %3441 = vmatprep.subr.mxu0 0.0
    %3442 = vmatpush1.msra.mxu0 0.0
    %3443 = vmatprep.subr.mxu0 0.0
    %3444 = vmatpush1.msra.mxu0 0.0
    %3445 = vmatprep.subr.mxu0 0.0
    %3446 = vmatpush1.msra.mxu0 0.0
    %3447 = vmatprep.subr.mxu0 0.0
    %3448 = vmatpush1.msra.mxu0 0.0
    %3449 = vmatprep.subr.mxu0 0.0
    %3450 = vmatpush1.msra.mxu0 0.0
    %3451 = vmatprep.subr.mxu0 0.0
    %3452 = vmatpush1.msra.mxu0 0.0
    %3453 = vmatprep.subr.mxu0 0.0
    %3454 = vmatpush1.msra.mxu0 0.0
    %3455 = vmatprep.subr.mxu0 0.0
    %3456 = vmatpush1.msra.mxu0 0.0
    %3457 = vmatprep.subr.mxu0 0.0
    %3458 = vmatpush1.msra.mxu0 0.0
    %3459 = vmatprep.subr.mxu0 0.0
    %3460 = vmatpush1.msra.mxu0 0.0
    %3461 = vmatprep.subr.mxu0 0.0
    %v3462 = vand.u32 %v55, 4294901760
    %3463 = vmatpush1.msra.mxu0 %v3462
    %3464 = vmatprep.subr.mxu0 0.0
    %3465 = vmatpush2.msra.mxu0 0.0
    %3466 = vmatprep.subr.mxu0 0.0
    %3467 = vmatpush2.msra.mxu0 0.0
    %3468 = vmatprep.subr.mxu0 0.0
    %3469 = vmatpush2.msra.mxu0 0.0
    %3470 = vmatprep.subr.mxu0 0.0
    %3471 = vmatpush2.msra.mxu0 0.0
    %3472 = vmatprep.subr.mxu0 0.0
    %3473 = vmatpush2.msra.mxu0 0.0
    %3474 = vmatprep.subr.mxu0 0.0
    %3475 = vmatpush2.msra.mxu0 0.0
    %3476 = vmatprep.subr.mxu0 0.0
    %3477 = vmatpush2.msra.mxu0 0.0
    %3478 = vmatprep.subr.mxu0 0.0
    %3479 = vmatpush2.msra.mxu0 0.0
    %3480 = vmatprep.subr.mxu0 0.0
    %3481 = vmatpush2.msra.mxu0 0.0
    %3482 = vmatprep.subr.mxu0 0.0
    %3483 = vmatpush2.msra.mxu0 0.0
    %3484 = vmatprep.subr.mxu0 0.0
    %3485 = vmatpush2.msra.mxu0 0.0
    %3486 = vmatprep.subr.mxu0 0.0
    %3487 = vmatpush2.msra.mxu0 0.0
    %3488 = vmatprep.subr.mxu0 0.0
    %3489 = vmatpush2.msra.mxu0 0.0
    %3490 = vmatprep.subr.mxu0 0.0
    %3491 = vmatpush2.msra.mxu0 0.0
    %3492 = vmatprep.subr.mxu0 0.0
    %3493 = vmatpush2.msra.mxu0 0.0
    %3494 = vmatprep.subr.mxu0 0.0
    %3495 = vmatpush2.msra.mxu0 0.0
    %3496 = vmatprep.mubr.f32.mxu0 0.0
    %v3497 = vand.u32 %v60, 4294901760
    %3498 = vmatmul.mubr.f32.gmra.mxu0 %v3497
    %v3499 = vpop.f32.mrf.mxu0
    %v3500 = vadd.f32 %v3410, %v3499
    %v3501 = vpop.f32.mrf.mxu0
    %3502 = vmatprep.mubr.f32.mxu0 0.0
    %v3503 = vand.u32 %v63, 4294901760
    %3504 = vmatmul.mubr.f32.gmra.mxu0 %v3503
    %v3505 = vpop.f32.mrf.mxu0
    %v3506 = vadd.f32 %v3416, %v3505
    %v3507 = vpop.f32.mrf.mxu0
    %3508 = vmatprep.mubr.f32.mxu0 0.0
    %v3509 = vand.u32 %v66, 4294901760
    %3510 = vmatmul.mubr.f32.gmra.mxu0 %v3509
    %v3511 = vpop.f32.mrf.mxu0
    %v3512 = vadd.f32 %v3422, %v3511
    %v3513 = vpop.f32.mrf.mxu0
    %3514 = vmatprep.mubr.f32.mxu0 0.0
    %v3515 = vand.u32 %v69, 4294901760
    %3516 = vmatmul.mubr.f32.gmra.mxu0 %v3515
    %v3517 = vpop.f32.mrf.mxu0
    %v3518 = vadd.f32 %v3428, %v3517
    %v3519 = vpop.f32.mrf.mxu0
    %3520 = vdwg.mxu0
    %3521 = vmatprep.subr.mxu0 0.0
    %3522 = vmatpush1.msra.mxu0 0.0
    %3523 = vmatprep.subr.mxu0 0.0
    %3524 = vmatpush1.msra.mxu0 0.0
    %3525 = vmatprep.subr.mxu0 0.0
    %3526 = vmatpush1.msra.mxu0 0.0
    %3527 = vmatprep.subr.mxu0 0.0
    %3528 = vmatpush1.msra.mxu0 0.0
    %3529 = vmatprep.subr.mxu0 0.0
    %3530 = vmatpush1.msra.mxu0 0.0
    %3531 = vmatprep.subr.mxu0 0.0
    %3532 = vmatpush1.msra.mxu0 0.0
    %3533 = vmatprep.subr.mxu0 0.0
    %3534 = vmatpush1.msra.mxu0 0.0
    %3535 = vmatprep.subr.mxu0 0.0
    %3536 = vmatpush1.msra.mxu0 0.0
    %3537 = vmatprep.subr.mxu0 0.0
    %3538 = vmatpush1.msra.mxu0 0.0
    %3539 = vmatprep.subr.mxu0 0.0
    %3540 = vmatpush1.msra.mxu0 0.0
    %3541 = vmatprep.subr.mxu0 0.0
    %3542 = vmatpush1.msra.mxu0 0.0
    %3543 = vmatprep.subr.mxu0 0.0
    %3544 = vmatpush1.msra.mxu0 0.0
    %3545 = vmatprep.subr.mxu0 0.0
    %3546 = vmatpush1.msra.mxu0 0.0
    %3547 = vmatprep.subr.mxu0 0.0
    %3548 = vmatpush1.msra.mxu0 0.0
    %3549 = vmatprep.subr.mxu0 0.0
    %3550 = vmatpush1.msra.mxu0 0.0
    %3551 = vmatprep.subr.mxu0 0.0
    %v3552 = vand.u32 %v56, 4294901760
    %3553 = vmatpush1.msra.mxu0 %v3552
    %3554 = vmatprep.subr.mxu0 0.0
    %3555 = vmatpush2.msra.mxu0 0.0
    %3556 = vmatprep.subr.mxu0 0.0
    %3557 = vmatpush2.msra.mxu0 0.0
    %3558 = vmatprep.subr.mxu0 0.0
    %3559 = vmatpush2.msra.mxu0 0.0
    %3560 = vmatprep.subr.mxu0 0.0
    %3561 = vmatpush2.msra.mxu0 0.0
    %3562 = vmatprep.subr.mxu0 0.0
    %3563 = vmatpush2.msra.mxu0 0.0
    %3564 = vmatprep.subr.mxu0 0.0
    %3565 = vmatpush2.msra.mxu0 0.0
    %3566 = vmatprep.subr.mxu0 0.0
    %3567 = vmatpush2.msra.mxu0 0.0
    %3568 = vmatprep.subr.mxu0 0.0
    %3569 = vmatpush2.msra.mxu0 0.0
    %3570 = vmatprep.subr.mxu0 0.0
    %3571 = vmatpush2.msra.mxu0 0.0
    %3572 = vmatprep.subr.mxu0 0.0
    %3573 = vmatpush2.msra.mxu0 0.0
    %3574 = vmatprep.subr.mxu0 0.0
    %3575 = vmatpush2.msra.mxu0 0.0
    %3576 = vmatprep.subr.mxu0 0.0
    %3577 = vmatpush2.msra.mxu0 0.0
    %3578 = vmatprep.subr.mxu0 0.0
    %3579 = vmatpush2.msra.mxu0 0.0
    %3580 = vmatprep.subr.mxu0 0.0
    %3581 = vmatpush2.msra.mxu0 0.0
    %3582 = vmatprep.subr.mxu0 0.0
    %3583 = vmatpush2.msra.mxu0 0.0
    %3584 = vmatprep.subr.mxu0 0.0
    %3585 = vmatpush2.msra.mxu0 0.0
    %3586 = vmatprep.mubr.f32.mxu0 0.0
    %v3587 = vand.u32 %v60, 4294901760
    %v3588 = vsub.f32 %v60, %v3587
    %v3589 = vand.u32 %v3588, 4294901760
    %v3590 = vsub.f32 %v3588, %v3589
    %v3591 = vand.u32 %v3590, 4294901760
    %3592 = vmatmul.mubr.f32.gmra.mxu0 %v3591
    %v3593 = vpop.f32.mrf.mxu0
    %v3594 = vadd.f32 0.0, %v3593
    %v3595 = vpop.f32.mrf.mxu0
    %3596 = vmatprep.mubr.f32.mxu0 0.0
    %v3597 = vand.u32 %v63, 4294901760
    %v3598 = vsub.f32 %v63, %v3597
    %v3599 = vand.u32 %v3598, 4294901760
    %v3600 = vsub.f32 %v3598, %v3599
    %v3601 = vand.u32 %v3600, 4294901760
    %3602 = vmatmul.mubr.f32.gmra.mxu0 %v3601
    %v3603 = vpop.f32.mrf.mxu0
    %v3604 = vadd.f32 0.0, %v3603
    %v3605 = vpop.f32.mrf.mxu0
    %3606 = vmatprep.mubr.f32.mxu0 0.0
    %v3607 = vand.u32 %v66, 4294901760
    %v3608 = vsub.f32 %v66, %v3607
    %v3609 = vand.u32 %v3608, 4294901760
    %v3610 = vsub.f32 %v3608, %v3609
    %v3611 = vand.u32 %v3610, 4294901760
    %3612 = vmatmul.mubr.f32.gmra.mxu0 %v3611
    %v3613 = vpop.f32.mrf.mxu0
    %v3614 = vadd.f32 0.0, %v3613
    %v3615 = vpop.f32.mrf.mxu0
    %3616 = vmatprep.mubr.f32.mxu0 0.0
    %v3617 = vand.u32 %v69, 4294901760
    %v3618 = vsub.f32 %v69, %v3617
    %v3619 = vand.u32 %v3618, 4294901760
    %v3620 = vsub.f32 %v3618, %v3619
    %v3621 = vand.u32 %v3620, 4294901760
    %3622 = vmatmul.mubr.f32.gmra.mxu0 %v3621
    %v3623 = vpop.f32.mrf.mxu0
    %v3624 = vadd.f32 0.0, %v3623
    %v3625 = vpop.f32.mrf.mxu0
    %3626 = vdwg.mxu0
    %3627 = vmatprep.subr.mxu0 0.0
    %3628 = vmatpush1.msra.mxu0 0.0
    %3629 = vmatprep.subr.mxu0 0.0
    %3630 = vmatpush1.msra.mxu0 0.0
    %3631 = vmatprep.subr.mxu0 0.0
    %3632 = vmatpush1.msra.mxu0 0.0
    %3633 = vmatprep.subr.mxu0 0.0
    %3634 = vmatpush1.msra.mxu0 0.0
    %3635 = vmatprep.subr.mxu0 0.0
    %3636 = vmatpush1.msra.mxu0 0.0
    %3637 = vmatprep.subr.mxu0 0.0
    %3638 = vmatpush1.msra.mxu0 0.0
    %3639 = vmatprep.subr.mxu0 0.0
    %3640 = vmatpush1.msra.mxu0 0.0
    %3641 = vmatprep.subr.mxu0 0.0
    %3642 = vmatpush1.msra.mxu0 0.0
    %3643 = vmatprep.subr.mxu0 0.0
    %3644 = vmatpush1.msra.mxu0 0.0
    %3645 = vmatprep.subr.mxu0 0.0
    %3646 = vmatpush1.msra.mxu0 0.0
    %3647 = vmatprep.subr.mxu0 0.0
    %3648 = vmatpush1.msra.mxu0 0.0
    %3649 = vmatprep.subr.mxu0 0.0
    %3650 = vmatpush1.msra.mxu0 0.0
    %3651 = vmatprep.subr.mxu0 0.0
    %3652 = vmatpush1.msra.mxu0 0.0
    %3653 = vmatprep.subr.mxu0 0.0
    %3654 = vmatpush1.msra.mxu0 0.0
    %3655 = vmatprep.subr.mxu0 0.0
    %3656 = vmatpush1.msra.mxu0 0.0
    %3657 = vmatprep.subr.mxu0 0.0
    %v3658 = vand.u32 %v56, 4294901760
    %v3659 = vsub.f32 %v56, %v3658
    %v3660 = vand.u32 %v3659, 4294901760
    %v3661 = vsub.f32 %v3659, %v3660
    %v3662 = vand.u32 %v3661, 4294901760
    %3663 = vmatpush1.msra.mxu0 %v3662
    %3664 = vmatprep.subr.mxu0 0.0
    %3665 = vmatpush2.msra.mxu0 0.0
    %3666 = vmatprep.subr.mxu0 0.0
    %3667 = vmatpush2.msra.mxu0 0.0
    %3668 = vmatprep.subr.mxu0 0.0
    %3669 = vmatpush2.msra.mxu0 0.0
    %3670 = vmatprep.subr.mxu0 0.0
    %3671 = vmatpush2.msra.mxu0 0.0
    %3672 = vmatprep.subr.mxu0 0.0
    %3673 = vmatpush2.msra.mxu0 0.0
    %3674 = vmatprep.subr.mxu0 0.0
    %3675 = vmatpush2.msra.mxu0 0.0
    %3676 = vmatprep.subr.mxu0 0.0
    %3677 = vmatpush2.msra.mxu0 0.0
    %3678 = vmatprep.subr.mxu0 0.0
    %3679 = vmatpush2.msra.mxu0 0.0
    %3680 = vmatprep.subr.mxu0 0.0
    %3681 = vmatpush2.msra.mxu0 0.0
    %3682 = vmatprep.subr.mxu0 0.0
    %3683 = vmatpush2.msra.mxu0 0.0
    %3684 = vmatprep.subr.mxu0 0.0
    %3685 = vmatpush2.msra.mxu0 0.0
    %3686 = vmatprep.subr.mxu0 0.0
    %3687 = vmatpush2.msra.mxu0 0.0
    %3688 = vmatprep.subr.mxu0 0.0
    %3689 = vmatpush2.msra.mxu0 0.0
    %3690 = vmatprep.subr.mxu0 0.0
    %3691 = vmatpush2.msra.mxu0 0.0
    %3692 = vmatprep.subr.mxu0 0.0
    %3693 = vmatpush2.msra.mxu0 0.0
    %3694 = vmatprep.subr.mxu0 0.0
    %3695 = vmatpush2.msra.mxu0 0.0
    %3696 = vmatprep.mubr.f32.mxu0 0.0
    %v3697 = vand.u32 %v60, 4294901760
    %3698 = vmatmul.mubr.f32.gmra.mxu0 %v3697
    %v3699 = vpop.f32.mrf.mxu0
    %v3700 = vadd.f32 %v3594, %v3699
    %v3701 = vpop.f32.mrf.mxu0
    %3702 = vmatprep.mubr.f32.mxu0 0.0
    %v3703 = vand.u32 %v63, 4294901760
    %3704 = vmatmul.mubr.f32.gmra.mxu0 %v3703
    %v3705 = vpop.f32.mrf.mxu0
    %v3706 = vadd.f32 %v3604, %v3705
    %v3707 = vpop.f32.mrf.mxu0
    %3708 = vmatprep.mubr.f32.mxu0 0.0
    %v3709 = vand.u32 %v66, 4294901760
    %3710 = vmatmul.mubr.f32.gmra.mxu0 %v3709
    %v3711 = vpop.f32.mrf.mxu0
    %v3712 = vadd.f32 %v3614, %v3711
    %v3713 = vpop.f32.mrf.mxu0
    %3714 = vmatprep.mubr.f32.mxu0 0.0
    %v3715 = vand.u32 %v69, 4294901760
    %3716 = vmatmul.mubr.f32.gmra.mxu0 %v3715
    %v3717 = vpop.f32.mrf.mxu0
    %v3718 = vadd.f32 %v3624, %v3717
    %v3719 = vpop.f32.mrf.mxu0
    %3720 = vdwg.mxu0
    %3721 = vmatprep.subr.mxu0 0.0
    %3722 = vmatpush1.msra.mxu0 0.0
    %3723 = vmatprep.subr.mxu0 0.0
    %3724 = vmatpush1.msra.mxu0 0.0
    %3725 = vmatprep.subr.mxu0 0.0
    %3726 = vmatpush1.msra.mxu0 0.0
    %3727 = vmatprep.subr.mxu0 0.0
    %3728 = vmatpush1.msra.mxu0 0.0
    %3729 = vmatprep.subr.mxu0 0.0
    %3730 = vmatpush1.msra.mxu0 0.0
    %3731 = vmatprep.subr.mxu0 0.0
    %3732 = vmatpush1.msra.mxu0 0.0
    %3733 = vmatprep.subr.mxu0 0.0
    %3734 = vmatpush1.msra.mxu0 0.0
    %3735 = vmatprep.subr.mxu0 0.0
    %3736 = vmatpush1.msra.mxu0 0.0
    %3737 = vmatprep.subr.mxu0 0.0
    %3738 = vmatpush1.msra.mxu0 0.0
    %3739 = vmatprep.subr.mxu0 0.0
    %3740 = vmatpush1.msra.mxu0 0.0
    %3741 = vmatprep.subr.mxu0 0.0
    %3742 = vmatpush1.msra.mxu0 0.0
    %3743 = vmatprep.subr.mxu0 0.0
    %3744 = vmatpush1.msra.mxu0 0.0
    %3745 = vmatprep.subr.mxu0 0.0
    %3746 = vmatpush1.msra.mxu0 0.0
    %3747 = vmatprep.subr.mxu0 0.0
    %3748 = vmatpush1.msra.mxu0 0.0
    %3749 = vmatprep.subr.mxu0 0.0
    %3750 = vmatpush1.msra.mxu0 0.0
    %3751 = vmatprep.subr.mxu0 0.0
    %v3752 = vand.u32 %v56, 4294901760
    %v3753 = vsub.f32 %v56, %v3752
    %3754 = vmatpush1.msra.mxu0 %v3753
    %3755 = vmatprep.subr.mxu0 0.0
    %3756 = vmatpush2.msra.mxu0 0.0
    %3757 = vmatprep.subr.mxu0 0.0
    %3758 = vmatpush2.msra.mxu0 0.0
    %3759 = vmatprep.subr.mxu0 0.0
    %3760 = vmatpush2.msra.mxu0 0.0
    %3761 = vmatprep.subr.mxu0 0.0
    %3762 = vmatpush2.msra.mxu0 0.0
    %3763 = vmatprep.subr.mxu0 0.0
    %3764 = vmatpush2.msra.mxu0 0.0
    %3765 = vmatprep.subr.mxu0 0.0
    %3766 = vmatpush2.msra.mxu0 0.0
    %3767 = vmatprep.subr.mxu0 0.0
    %3768 = vmatpush2.msra.mxu0 0.0
    %3769 = vmatprep.subr.mxu0 0.0
    %3770 = vmatpush2.msra.mxu0 0.0
    %3771 = vmatprep.subr.mxu0 0.0
    %3772 = vmatpush2.msra.mxu0 0.0
    %3773 = vmatprep.subr.mxu0 0.0
    %3774 = vmatpush2.msra.mxu0 0.0
    %3775 = vmatprep.subr.mxu0 0.0
    %3776 = vmatpush2.msra.mxu0 0.0
    %3777 = vmatprep.subr.mxu0 0.0
    %3778 = vmatpush2.msra.mxu0 0.0
    %3779 = vmatprep.subr.mxu0 0.0
    %3780 = vmatpush2.msra.mxu0 0.0
    %3781 = vmatprep.subr.mxu0 0.0
    %3782 = vmatpush2.msra.mxu0 0.0
    %3783 = vmatprep.subr.mxu0 0.0
    %3784 = vmatpush2.msra.mxu0 0.0
    %3785 = vmatprep.subr.mxu0 0.0
    %3786 = vmatpush2.msra.mxu0 0.0
    %3787 = vmatprep.mubr.f32.mxu0 0.0
    %v3788 = vand.u32 %v60, 4294901760
    %v3789 = vsub.f32 %v60, %v3788
    %3790 = vmatmul.mubr.f32.gmra.mxu0 %v3789
    %v3791 = vpop.f32.mrf.mxu0
    %v3792 = vadd.f32 %v3700, %v3791
    %v3793 = vpop.f32.mrf.mxu0
    %3794 = vmatprep.mubr.f32.mxu0 0.0
    %v3795 = vand.u32 %v63, 4294901760
    %v3796 = vsub.f32 %v63, %v3795
    %3797 = vmatmul.mubr.f32.gmra.mxu0 %v3796
    %v3798 = vpop.f32.mrf.mxu0
    %v3799 = vadd.f32 %v3706, %v3798
    %v3800 = vpop.f32.mrf.mxu0
    %3801 = vmatprep.mubr.f32.mxu0 0.0
    %v3802 = vand.u32 %v66, 4294901760
    %v3803 = vsub.f32 %v66, %v3802
    %3804 = vmatmul.mubr.f32.gmra.mxu0 %v3803
    %v3805 = vpop.f32.mrf.mxu0
    %v3806 = vadd.f32 %v3712, %v3805
    %v3807 = vpop.f32.mrf.mxu0
    %3808 = vmatprep.mubr.f32.mxu0 0.0
    %v3809 = vand.u32 %v69, 4294901760
    %v3810 = vsub.f32 %v69, %v3809
    %3811 = vmatmul.mubr.f32.gmra.mxu0 %v3810
    %v3812 = vpop.f32.mrf.mxu0
    %v3813 = vadd.f32 %v3718, %v3812
    %v3814 = vpop.f32.mrf.mxu0
    %3815 = vdwg.mxu0
    %3816 = vmatprep.subr.mxu0 0.0
    %3817 = vmatpush1.msra.mxu0 0.0
    %3818 = vmatprep.subr.mxu0 0.0
    %3819 = vmatpush1.msra.mxu0 0.0
    %3820 = vmatprep.subr.mxu0 0.0
    %3821 = vmatpush1.msra.mxu0 0.0
    %3822 = vmatprep.subr.mxu0 0.0
    %3823 = vmatpush1.msra.mxu0 0.0
    %3824 = vmatprep.subr.mxu0 0.0
    %3825 = vmatpush1.msra.mxu0 0.0
    %3826 = vmatprep.subr.mxu0 0.0
    %3827 = vmatpush1.msra.mxu0 0.0
    %3828 = vmatprep.subr.mxu0 0.0
    %3829 = vmatpush1.msra.mxu0 0.0
    %3830 = vmatprep.subr.mxu0 0.0
    %3831 = vmatpush1.msra.mxu0 0.0
    %3832 = vmatprep.subr.mxu0 0.0
    %3833 = vmatpush1.msra.mxu0 0.0
    %3834 = vmatprep.subr.mxu0 0.0
    %3835 = vmatpush1.msra.mxu0 0.0
    %3836 = vmatprep.subr.mxu0 0.0
    %3837 = vmatpush1.msra.mxu0 0.0
    %3838 = vmatprep.subr.mxu0 0.0
    %3839 = vmatpush1.msra.mxu0 0.0
    %3840 = vmatprep.subr.mxu0 0.0
    %3841 = vmatpush1.msra.mxu0 0.0
    %3842 = vmatprep.subr.mxu0 0.0
    %3843 = vmatpush1.msra.mxu0 0.0
    %3844 = vmatprep.subr.mxu0 0.0
    %3845 = vmatpush1.msra.mxu0 0.0
    %3846 = vmatprep.subr.mxu0 0.0
    %v3847 = vand.u32 %v56, 4294901760
    %3848 = vmatpush1.msra.mxu0 %v3847
    %3849 = vmatprep.subr.mxu0 0.0
    %3850 = vmatpush2.msra.mxu0 0.0
    %3851 = vmatprep.subr.mxu0 0.0
    %3852 = vmatpush2.msra.mxu0 0.0
    %3853 = vmatprep.subr.mxu0 0.0
    %3854 = vmatpush2.msra.mxu0 0.0
    %3855 = vmatprep.subr.mxu0 0.0
    %3856 = vmatpush2.msra.mxu0 0.0
    %3857 = vmatprep.subr.mxu0 0.0
    %3858 = vmatpush2.msra.mxu0 0.0
    %3859 = vmatprep.subr.mxu0 0.0
    %3860 = vmatpush2.msra.mxu0 0.0
    %3861 = vmatprep.subr.mxu0 0.0
    %3862 = vmatpush2.msra.mxu0 0.0
    %3863 = vmatprep.subr.mxu0 0.0
    %3864 = vmatpush2.msra.mxu0 0.0
    %3865 = vmatprep.subr.mxu0 0.0
    %3866 = vmatpush2.msra.mxu0 0.0
    %3867 = vmatprep.subr.mxu0 0.0
    %3868 = vmatpush2.msra.mxu0 0.0
    %3869 = vmatprep.subr.mxu0 0.0
    %3870 = vmatpush2.msra.mxu0 0.0
    %3871 = vmatprep.subr.mxu0 0.0
    %3872 = vmatpush2.msra.mxu0 0.0
    %3873 = vmatprep.subr.mxu0 0.0
    %3874 = vmatpush2.msra.mxu0 0.0
    %3875 = vmatprep.subr.mxu0 0.0
    %3876 = vmatpush2.msra.mxu0 0.0
    %3877 = vmatprep.subr.mxu0 0.0
    %3878 = vmatpush2.msra.mxu0 0.0
    %3879 = vmatprep.subr.mxu0 0.0
    %3880 = vmatpush2.msra.mxu0 0.0
    %3881 = vmatprep.mubr.f32.mxu0 0.0
    %v3882 = vand.u32 %v60, 4294901760
    %v3883 = vsub.f32 %v60, %v3882
    %v3884 = vand.u32 %v3883, 4294901760
    %3885 = vmatmul.mubr.f32.gmra.mxu0 %v3884
    %v3886 = vpop.f32.mrf.mxu0
    %v3887 = vadd.f32 %v3792, %v3886
    %v3888 = vpop.f32.mrf.mxu0
    %3889 = vmatprep.mubr.f32.mxu0 0.0
    %v3890 = vand.u32 %v63, 4294901760
    %v3891 = vsub.f32 %v63, %v3890
    %v3892 = vand.u32 %v3891, 4294901760
    %3893 = vmatmul.mubr.f32.gmra.mxu0 %v3892
    %v3894 = vpop.f32.mrf.mxu0
    %v3895 = vadd.f32 %v3799, %v3894
    %v3896 = vpop.f32.mrf.mxu0
    %3897 = vmatprep.mubr.f32.mxu0 0.0
    %v3898 = vand.u32 %v66, 4294901760
    %v3899 = vsub.f32 %v66, %v3898
    %v3900 = vand.u32 %v3899, 4294901760
    %3901 = vmatmul.mubr.f32.gmra.mxu0 %v3900
    %v3902 = vpop.f32.mrf.mxu0
    %v3903 = vadd.f32 %v3806, %v3902
    %v3904 = vpop.f32.mrf.mxu0
    %3905 = vmatprep.mubr.f32.mxu0 0.0
    %v3906 = vand.u32 %v69, 4294901760
    %v3907 = vsub.f32 %v69, %v3906
    %v3908 = vand.u32 %v3907, 4294901760
    %3909 = vmatmul.mubr.f32.gmra.mxu0 %v3908
    %v3910 = vpop.f32.mrf.mxu0
    %v3911 = vadd.f32 %v3813, %v3910
    %v3912 = vpop.f32.mrf.mxu0
    %3913 = vdwg.mxu0
    %3914 = vmatprep.subr.mxu0 0.0
    %3915 = vmatpush1.msra.mxu0 0.0
    %3916 = vmatprep.subr.mxu0 0.0
    %3917 = vmatpush1.msra.mxu0 0.0
    %3918 = vmatprep.subr.mxu0 0.0
    %3919 = vmatpush1.msra.mxu0 0.0
    %3920 = vmatprep.subr.mxu0 0.0
    %3921 = vmatpush1.msra.mxu0 0.0
    %3922 = vmatprep.subr.mxu0 0.0
    %3923 = vmatpush1.msra.mxu0 0.0
    %3924 = vmatprep.subr.mxu0 0.0
    %3925 = vmatpush1.msra.mxu0 0.0
    %3926 = vmatprep.subr.mxu0 0.0
    %3927 = vmatpush1.msra.mxu0 0.0
    %3928 = vmatprep.subr.mxu0 0.0
    %3929 = vmatpush1.msra.mxu0 0.0
    %3930 = vmatprep.subr.mxu0 0.0
    %3931 = vmatpush1.msra.mxu0 0.0
    %3932 = vmatprep.subr.mxu0 0.0
    %3933 = vmatpush1.msra.mxu0 0.0
    %3934 = vmatprep.subr.mxu0 0.0
    %3935 = vmatpush1.msra.mxu0 0.0
    %3936 = vmatprep.subr.mxu0 0.0
    %3937 = vmatpush1.msra.mxu0 0.0
    %3938 = vmatprep.subr.mxu0 0.0
    %3939 = vmatpush1.msra.mxu0 0.0
    %3940 = vmatprep.subr.mxu0 0.0
    %3941 = vmatpush1.msra.mxu0 0.0
    %3942 = vmatprep.subr.mxu0 0.0
    %3943 = vmatpush1.msra.mxu0 0.0
    %3944 = vmatprep.subr.mxu0 0.0
    %v3945 = vand.u32 %v56, 4294901760
    %v3946 = vsub.f32 %v56, %v3945
    %v3947 = vand.u32 %v3946, 4294901760
    %3948 = vmatpush1.msra.mxu0 %v3947
    %3949 = vmatprep.subr.mxu0 0.0
    %3950 = vmatpush2.msra.mxu0 0.0
    %3951 = vmatprep.subr.mxu0 0.0
    %3952 = vmatpush2.msra.mxu0 0.0
    %3953 = vmatprep.subr.mxu0 0.0
    %3954 = vmatpush2.msra.mxu0 0.0
    %3955 = vmatprep.subr.mxu0 0.0
    %3956 = vmatpush2.msra.mxu0 0.0
    %3957 = vmatprep.subr.mxu0 0.0
    %3958 = vmatpush2.msra.mxu0 0.0
    %3959 = vmatprep.subr.mxu0 0.0
    %3960 = vmatpush2.msra.mxu0 0.0
    %3961 = vmatprep.subr.mxu0 0.0
    %3962 = vmatpush2.msra.mxu0 0.0
    %3963 = vmatprep.subr.mxu0 0.0
    %3964 = vmatpush2.msra.mxu0 0.0
    %3965 = vmatprep.subr.mxu0 0.0
    %3966 = vmatpush2.msra.mxu0 0.0
    %3967 = vmatprep.subr.mxu0 0.0
    %3968 = vmatpush2.msra.mxu0 0.0
    %3969 = vmatprep.subr.mxu0 0.0
    %3970 = vmatpush2.msra.mxu0 0.0
    %3971 = vmatprep.subr.mxu0 0.0
    %3972 = vmatpush2.msra.mxu0 0.0
    %3973 = vmatprep.subr.mxu0 0.0
    %3974 = vmatpush2.msra.mxu0 0.0
    %3975 = vmatprep.subr.mxu0 0.0
    %3976 = vmatpush2.msra.mxu0 0.0
    %3977 = vmatprep.subr.mxu0 0.0
    %3978 = vmatpush2.msra.mxu0 0.0
    %3979 = vmatprep.subr.mxu0 0.0
    %3980 = vmatpush2.msra.mxu0 0.0
    %3981 = vmatprep.mubr.f32.mxu0 0.0
    %v3982 = vand.u32 %v60, 4294901760
    %3983 = vmatmul.mubr.f32.gmra.mxu0 %v3982
    %v3984 = vpop.f32.mrf.mxu0
    %v3985 = vadd.f32 %v3887, %v3984
    %v3986 = vpop.f32.mrf.mxu0
    %3987 = vmatprep.mubr.f32.mxu0 0.0
    %v3988 = vand.u32 %v63, 4294901760
    %3989 = vmatmul.mubr.f32.gmra.mxu0 %v3988
    %v3990 = vpop.f32.mrf.mxu0
    %v3991 = vadd.f32 %v3895, %v3990
    %v3992 = vpop.f32.mrf.mxu0
    %3993 = vmatprep.mubr.f32.mxu0 0.0
    %v3994 = vand.u32 %v66, 4294901760
    %3995 = vmatmul.mubr.f32.gmra.mxu0 %v3994
    %v3996 = vpop.f32.mrf.mxu0
    %v3997 = vadd.f32 %v3903, %v3996
    %v3998 = vpop.f32.mrf.mxu0
    %3999 = vmatprep.mubr.f32.mxu0 0.0
    %v4000 = vand.u32 %v69, 4294901760
    %4001 = vmatmul.mubr.f32.gmra.mxu0 %v4000
    %v4002 = vpop.f32.mrf.mxu0
    %v4003 = vadd.f32 %v3911, %v4002
    %v4004 = vpop.f32.mrf.mxu0
    %4005 = vdwg.mxu0
    %4006 = vmatprep.subr.mxu0 0.0
    %4007 = vmatpush1.msra.mxu0 0.0
    %4008 = vmatprep.subr.mxu0 0.0
    %4009 = vmatpush1.msra.mxu0 0.0
    %4010 = vmatprep.subr.mxu0 0.0
    %4011 = vmatpush1.msra.mxu0 0.0
    %4012 = vmatprep.subr.mxu0 0.0
    %4013 = vmatpush1.msra.mxu0 0.0
    %4014 = vmatprep.subr.mxu0 0.0
    %4015 = vmatpush1.msra.mxu0 0.0
    %4016 = vmatprep.subr.mxu0 0.0
    %4017 = vmatpush1.msra.mxu0 0.0
    %4018 = vmatprep.subr.mxu0 0.0
    %4019 = vmatpush1.msra.mxu0 0.0
    %4020 = vmatprep.subr.mxu0 0.0
    %4021 = vmatpush1.msra.mxu0 0.0
    %4022 = vmatprep.subr.mxu0 0.0
    %4023 = vmatpush1.msra.mxu0 0.0
    %4024 = vmatprep.subr.mxu0 0.0
    %4025 = vmatpush1.msra.mxu0 0.0
    %4026 = vmatprep.subr.mxu0 0.0
    %4027 = vmatpush1.msra.mxu0 0.0
    %4028 = vmatprep.subr.mxu0 0.0
    %4029 = vmatpush1.msra.mxu0 0.0
    %4030 = vmatprep.subr.mxu0 0.0
    %4031 = vmatpush1.msra.mxu0 0.0
    %4032 = vmatprep.subr.mxu0 0.0
    %4033 = vmatpush1.msra.mxu0 0.0
    %4034 = vmatprep.subr.mxu0 0.0
    %4035 = vmatpush1.msra.mxu0 0.0
    %4036 = vmatprep.subr.mxu0 0.0
    %v4037 = vand.u32 %v56, 4294901760
    %4038 = vmatpush1.msra.mxu0 %v4037
    %4039 = vmatprep.subr.mxu0 0.0
    %4040 = vmatpush2.msra.mxu0 0.0
    %4041 = vmatprep.subr.mxu0 0.0
    %4042 = vmatpush2.msra.mxu0 0.0
    %4043 = vmatprep.subr.mxu0 0.0
    %4044 = vmatpush2.msra.mxu0 0.0
    %4045 = vmatprep.subr.mxu0 0.0
    %4046 = vmatpush2.msra.mxu0 0.0
    %4047 = vmatprep.subr.mxu0 0.0
    %4048 = vmatpush2.msra.mxu0 0.0
    %4049 = vmatprep.subr.mxu0 0.0
    %4050 = vmatpush2.msra.mxu0 0.0
    %4051 = vmatprep.subr.mxu0 0.0
    %4052 = vmatpush2.msra.mxu0 0.0
    %4053 = vmatprep.subr.mxu0 0.0
    %4054 = vmatpush2.msra.mxu0 0.0
    %4055 = vmatprep.subr.mxu0 0.0
    %4056 = vmatpush2.msra.mxu0 0.0
    %4057 = vmatprep.subr.mxu0 0.0
    %4058 = vmatpush2.msra.mxu0 0.0
    %4059 = vmatprep.subr.mxu0 0.0
    %4060 = vmatpush2.msra.mxu0 0.0
    %4061 = vmatprep.subr.mxu0 0.0
    %4062 = vmatpush2.msra.mxu0 0.0
    %4063 = vmatprep.subr.mxu0 0.0
    %4064 = vmatpush2.msra.mxu0 0.0
    %4065 = vmatprep.subr.mxu0 0.0
    %4066 = vmatpush2.msra.mxu0 0.0
    %4067 = vmatprep.subr.mxu0 0.0
    %4068 = vmatpush2.msra.mxu0 0.0
    %4069 = vmatprep.subr.mxu0 0.0
    %4070 = vmatpush2.msra.mxu0 0.0
    %4071 = vmatprep.mubr.f32.mxu0 0.0
    %v4072 = vand.u32 %v60, 4294901760
    %4073 = vmatmul.mubr.f32.gmra.mxu0 %v4072
    %v4074 = vpop.f32.mrf.mxu0
    %v4075 = vadd.f32 %v3985, %v4074
    %v4076 = vpop.f32.mrf.mxu0
    %4077 = vmatprep.mubr.f32.mxu0 0.0
    %v4078 = vand.u32 %v63, 4294901760
    %4079 = vmatmul.mubr.f32.gmra.mxu0 %v4078
    %v4080 = vpop.f32.mrf.mxu0
    %v4081 = vadd.f32 %v3991, %v4080
    %v4082 = vpop.f32.mrf.mxu0
    %4083 = vmatprep.mubr.f32.mxu0 0.0
    %v4084 = vand.u32 %v66, 4294901760
    %4085 = vmatmul.mubr.f32.gmra.mxu0 %v4084
    %v4086 = vpop.f32.mrf.mxu0
    %v4087 = vadd.f32 %v3997, %v4086
    %v4088 = vpop.f32.mrf.mxu0
    %4089 = vmatprep.mubr.f32.mxu0 0.0
    %v4090 = vand.u32 %v69, 4294901760
    %4091 = vmatmul.mubr.f32.gmra.mxu0 %v4090
    %v4092 = vpop.f32.mrf.mxu0
    %v4093 = vadd.f32 %v4003, %v4092
    %v4094 = vpop.f32.mrf.mxu0
    %4095 = vdwg.mxu0
    %4096 = vmatprep.subr.mxu0 0.0
    %4097 = vmatpush1.msra.mxu0 0.0
    %4098 = vmatprep.subr.mxu0 0.0
    %4099 = vmatpush1.msra.mxu0 0.0
    %4100 = vmatprep.subr.mxu0 0.0
    %4101 = vmatpush1.msra.mxu0 0.0
    %4102 = vmatprep.subr.mxu0 0.0
    %4103 = vmatpush1.msra.mxu0 0.0
    %4104 = vmatprep.subr.mxu0 0.0
    %4105 = vmatpush1.msra.mxu0 0.0
    %4106 = vmatprep.subr.mxu0 0.0
    %4107 = vmatpush1.msra.mxu0 0.0
    %4108 = vmatprep.subr.mxu0 0.0
    %4109 = vmatpush1.msra.mxu0 0.0
    %4110 = vmatprep.subr.mxu0 0.0
    %4111 = vmatpush1.msra.mxu0 0.0
    %4112 = vmatprep.subr.mxu0 0.0
    %4113 = vmatpush1.msra.mxu0 0.0
    %4114 = vmatprep.subr.mxu0 0.0
    %4115 = vmatpush1.msra.mxu0 0.0
    %4116 = vmatprep.subr.mxu0 0.0
    %4117 = vmatpush1.msra.mxu0 0.0
    %4118 = vmatprep.subr.mxu0 0.0
    %4119 = vmatpush1.msra.mxu0 0.0
    %4120 = vmatprep.subr.mxu0 0.0
    %4121 = vmatpush1.msra.mxu0 0.0
    %4122 = vmatprep.subr.mxu0 0.0
    %4123 = vmatpush1.msra.mxu0 0.0
    %4124 = vmatprep.subr.mxu0 0.0
    %4125 = vmatpush1.msra.mxu0 0.0
    %4126 = vmatprep.subr.mxu0 0.0
    %v4127 = vand.u32 %v57, 4294901760
    %4128 = vmatpush1.msra.mxu0 %v4127
    %4129 = vmatprep.subr.mxu0 0.0
    %4130 = vmatpush2.msra.mxu0 0.0
    %4131 = vmatprep.subr.mxu0 0.0
    %4132 = vmatpush2.msra.mxu0 0.0
    %4133 = vmatprep.subr.mxu0 0.0
    %4134 = vmatpush2.msra.mxu0 0.0
    %4135 = vmatprep.subr.mxu0 0.0
    %4136 = vmatpush2.msra.mxu0 0.0
    %4137 = vmatprep.subr.mxu0 0.0
    %4138 = vmatpush2.msra.mxu0 0.0
    %4139 = vmatprep.subr.mxu0 0.0
    %4140 = vmatpush2.msra.mxu0 0.0
    %4141 = vmatprep.subr.mxu0 0.0
    %4142 = vmatpush2.msra.mxu0 0.0
    %4143 = vmatprep.subr.mxu0 0.0
    %4144 = vmatpush2.msra.mxu0 0.0
    %4145 = vmatprep.subr.mxu0 0.0
    %4146 = vmatpush2.msra.mxu0 0.0
    %4147 = vmatprep.subr.mxu0 0.0
    %4148 = vmatpush2.msra.mxu0 0.0
    %4149 = vmatprep.subr.mxu0 0.0
    %4150 = vmatpush2.msra.mxu0 0.0
    %4151 = vmatprep.subr.mxu0 0.0
    %4152 = vmatpush2.msra.mxu0 0.0
    %4153 = vmatprep.subr.mxu0 0.0
    %4154 = vmatpush2.msra.mxu0 0.0
    %4155 = vmatprep.subr.mxu0 0.0
    %4156 = vmatpush2.msra.mxu0 0.0
    %4157 = vmatprep.subr.mxu0 0.0
    %4158 = vmatpush2.msra.mxu0 0.0
    %4159 = vmatprep.subr.mxu0 0.0
    %4160 = vmatpush2.msra.mxu0 0.0
    %4161 = vmatprep.mubr.f32.mxu0 0.0
    %v4162 = vand.u32 %v60, 4294901760
    %v4163 = vsub.f32 %v60, %v4162
    %v4164 = vand.u32 %v4163, 4294901760
    %v4165 = vsub.f32 %v4163, %v4164
    %v4166 = vand.u32 %v4165, 4294901760
    %4167 = vmatmul.mubr.f32.gmra.mxu0 %v4166
    %v4168 = vpop.f32.mrf.mxu0
    %v4169 = vadd.f32 0.0, %v4168
    %v4170 = vpop.f32.mrf.mxu0
    %4171 = vmatprep.mubr.f32.mxu0 0.0
    %v4172 = vand.u32 %v63, 4294901760
    %v4173 = vsub.f32 %v63, %v4172
    %v4174 = vand.u32 %v4173, 4294901760
    %v4175 = vsub.f32 %v4173, %v4174
    %v4176 = vand.u32 %v4175, 4294901760
    %4177 = vmatmul.mubr.f32.gmra.mxu0 %v4176
    %v4178 = vpop.f32.mrf.mxu0
    %v4179 = vadd.f32 0.0, %v4178
    %v4180 = vpop.f32.mrf.mxu0
    %4181 = vmatprep.mubr.f32.mxu0 0.0
    %v4182 = vand.u32 %v66, 4294901760
    %v4183 = vsub.f32 %v66, %v4182
    %v4184 = vand.u32 %v4183, 4294901760
    %v4185 = vsub.f32 %v4183, %v4184
    %v4186 = vand.u32 %v4185, 4294901760
    %4187 = vmatmul.mubr.f32.gmra.mxu0 %v4186
    %v4188 = vpop.f32.mrf.mxu0
    %v4189 = vadd.f32 0.0, %v4188
    %v4190 = vpop.f32.mrf.mxu0
    %4191 = vmatprep.mubr.f32.mxu0 0.0
    %v4192 = vand.u32 %v69, 4294901760
    %v4193 = vsub.f32 %v69, %v4192
    %v4194 = vand.u32 %v4193, 4294901760
    %v4195 = vsub.f32 %v4193, %v4194
    %v4196 = vand.u32 %v4195, 4294901760
    %4197 = vmatmul.mubr.f32.gmra.mxu0 %v4196
    %v4198 = vpop.f32.mrf.mxu0
    %v4199 = vadd.f32 0.0, %v4198
    %v4200 = vpop.f32.mrf.mxu0
    %4201 = vdwg.mxu0
    %4202 = vmatprep.subr.mxu0 0.0
    %4203 = vmatpush1.msra.mxu0 0.0
    %4204 = vmatprep.subr.mxu0 0.0
    %4205 = vmatpush1.msra.mxu0 0.0
    %4206 = vmatprep.subr.mxu0 0.0
    %4207 = vmatpush1.msra.mxu0 0.0
    %4208 = vmatprep.subr.mxu0 0.0
    %4209 = vmatpush1.msra.mxu0 0.0
    %4210 = vmatprep.subr.mxu0 0.0
    %4211 = vmatpush1.msra.mxu0 0.0
    %4212 = vmatprep.subr.mxu0 0.0
    %4213 = vmatpush1.msra.mxu0 0.0
    %4214 = vmatprep.subr.mxu0 0.0
    %4215 = vmatpush1.msra.mxu0 0.0
    %4216 = vmatprep.subr.mxu0 0.0
    %4217 = vmatpush1.msra.mxu0 0.0
    %4218 = vmatprep.subr.mxu0 0.0
    %4219 = vmatpush1.msra.mxu0 0.0
    %4220 = vmatprep.subr.mxu0 0.0
    %4221 = vmatpush1.msra.mxu0 0.0
    %4222 = vmatprep.subr.mxu0 0.0
    %4223 = vmatpush1.msra.mxu0 0.0
    %4224 = vmatprep.subr.mxu0 0.0
    %4225 = vmatpush1.msra.mxu0 0.0
    %4226 = vmatprep.subr.mxu0 0.0
    %4227 = vmatpush1.msra.mxu0 0.0
    %4228 = vmatprep.subr.mxu0 0.0
    %4229 = vmatpush1.msra.mxu0 0.0
    %4230 = vmatprep.subr.mxu0 0.0
    %4231 = vmatpush1.msra.mxu0 0.0
    %4232 = vmatprep.subr.mxu0 0.0
    %v4233 = vand.u32 %v57, 4294901760
    %v4234 = vsub.f32 %v57, %v4233
    %v4235 = vand.u32 %v4234, 4294901760
    %v4236 = vsub.f32 %v4234, %v4235
    %v4237 = vand.u32 %v4236, 4294901760
    %4238 = vmatpush1.msra.mxu0 %v4237
    %4239 = vmatprep.subr.mxu0 0.0
    %4240 = vmatpush2.msra.mxu0 0.0
    %4241 = vmatprep.subr.mxu0 0.0
    %4242 = vmatpush2.msra.mxu0 0.0
    %4243 = vmatprep.subr.mxu0 0.0
    %4244 = vmatpush2.msra.mxu0 0.0
    %4245 = vmatprep.subr.mxu0 0.0
    %4246 = vmatpush2.msra.mxu0 0.0
    %4247 = vmatprep.subr.mxu0 0.0
    %4248 = vmatpush2.msra.mxu0 0.0
    %4249 = vmatprep.subr.mxu0 0.0
    %4250 = vmatpush2.msra.mxu0 0.0
    %4251 = vmatprep.subr.mxu0 0.0
    %4252 = vmatpush2.msra.mxu0 0.0
    %4253 = vmatprep.subr.mxu0 0.0
    %4254 = vmatpush2.msra.mxu0 0.0
    %4255 = vmatprep.subr.mxu0 0.0
    %4256 = vmatpush2.msra.mxu0 0.0
    %4257 = vmatprep.subr.mxu0 0.0
    %4258 = vmatpush2.msra.mxu0 0.0
    %4259 = vmatprep.subr.mxu0 0.0
    %4260 = vmatpush2.msra.mxu0 0.0
    %4261 = vmatprep.subr.mxu0 0.0
    %4262 = vmatpush2.msra.mxu0 0.0
    %4263 = vmatprep.subr.mxu0 0.0
    %4264 = vmatpush2.msra.mxu0 0.0
    %4265 = vmatprep.subr.mxu0 0.0
    %4266 = vmatpush2.msra.mxu0 0.0
    %4267 = vmatprep.subr.mxu0 0.0
    %4268 = vmatpush2.msra.mxu0 0.0
    %4269 = vmatprep.subr.mxu0 0.0
    %4270 = vmatpush2.msra.mxu0 0.0
    %4271 = vmatprep.mubr.f32.mxu0 0.0
    %v4272 = vand.u32 %v60, 4294901760
    %4273 = vmatmul.mubr.f32.gmra.mxu0 %v4272
    %v4274 = vpop.f32.mrf.mxu0
    %v4275 = vadd.f32 %v4169, %v4274
    %v4276 = vpop.f32.mrf.mxu0
    %4277 = vmatprep.mubr.f32.mxu0 0.0
    %v4278 = vand.u32 %v63, 4294901760
    %4279 = vmatmul.mubr.f32.gmra.mxu0 %v4278
    %v4280 = vpop.f32.mrf.mxu0
    %v4281 = vadd.f32 %v4179, %v4280
    %v4282 = vpop.f32.mrf.mxu0
    %4283 = vmatprep.mubr.f32.mxu0 0.0
    %v4284 = vand.u32 %v66, 4294901760
    %4285 = vmatmul.mubr.f32.gmra.mxu0 %v4284
    %v4286 = vpop.f32.mrf.mxu0
    %v4287 = vadd.f32 %v4189, %v4286
    %v4288 = vpop.f32.mrf.mxu0
    %4289 = vmatprep.mubr.f32.mxu0 0.0
    %v4290 = vand.u32 %v69, 4294901760
    %4291 = vmatmul.mubr.f32.gmra.mxu0 %v4290
    %v4292 = vpop.f32.mrf.mxu0
    %v4293 = vadd.f32 %v4199, %v4292
    %v4294 = vpop.f32.mrf.mxu0
    %4295 = vdwg.mxu0
    %4296 = vmatprep.subr.mxu0 0.0
    %4297 = vmatpush1.msra.mxu0 0.0
    %4298 = vmatprep.subr.mxu0 0.0
    %4299 = vmatpush1.msra.mxu0 0.0
    %4300 = vmatprep.subr.mxu0 0.0
    %4301 = vmatpush1.msra.mxu0 0.0
    %4302 = vmatprep.subr.mxu0 0.0
    %4303 = vmatpush1.msra.mxu0 0.0
    %4304 = vmatprep.subr.mxu0 0.0
    %4305 = vmatpush1.msra.mxu0 0.0
    %4306 = vmatprep.subr.mxu0 0.0
    %4307 = vmatpush1.msra.mxu0 0.0
    %4308 = vmatprep.subr.mxu0 0.0
    %4309 = vmatpush1.msra.mxu0 0.0
    %4310 = vmatprep.subr.mxu0 0.0
    %4311 = vmatpush1.msra.mxu0 0.0
    %4312 = vmatprep.subr.mxu0 0.0
    %4313 = vmatpush1.msra.mxu0 0.0
    %4314 = vmatprep.subr.mxu0 0.0
    %4315 = vmatpush1.msra.mxu0 0.0
    %4316 = vmatprep.subr.mxu0 0.0
    %4317 = vmatpush1.msra.mxu0 0.0
    %4318 = vmatprep.subr.mxu0 0.0
    %4319 = vmatpush1.msra.mxu0 0.0
    %4320 = vmatprep.subr.mxu0 0.0
    %4321 = vmatpush1.msra.mxu0 0.0
    %4322 = vmatprep.subr.mxu0 0.0
    %4323 = vmatpush1.msra.mxu0 0.0
    %4324 = vmatprep.subr.mxu0 0.0
    %4325 = vmatpush1.msra.mxu0 0.0
    %4326 = vmatprep.subr.mxu0 0.0
    %v4327 = vand.u32 %v57, 4294901760
    %v4328 = vsub.f32 %v57, %v4327
    %4329 = vmatpush1.msra.mxu0 %v4328
    %4330 = vmatprep.subr.mxu0 0.0
    %4331 = vmatpush2.msra.mxu0 0.0
    %4332 = vmatprep.subr.mxu0 0.0
    %4333 = vmatpush2.msra.mxu0 0.0
    %4334 = vmatprep.subr.mxu0 0.0
    %4335 = vmatpush2.msra.mxu0 0.0
    %4336 = vmatprep.subr.mxu0 0.0
    %4337 = vmatpush2.msra.mxu0 0.0
    %4338 = vmatprep.subr.mxu0 0.0
    %4339 = vmatpush2.msra.mxu0 0.0
    %4340 = vmatprep.subr.mxu0 0.0
    %4341 = vmatpush2.msra.mxu0 0.0
    %4342 = vmatprep.subr.mxu0 0.0
    %4343 = vmatpush2.msra.mxu0 0.0
    %4344 = vmatprep.subr.mxu0 0.0
    %4345 = vmatpush2.msra.mxu0 0.0
    %4346 = vmatprep.subr.mxu0 0.0
    %4347 = vmatpush2.msra.mxu0 0.0
    %4348 = vmatprep.subr.mxu0 0.0
    %4349 = vmatpush2.msra.mxu0 0.0
    %4350 = vmatprep.subr.mxu0 0.0
    %4351 = vmatpush2.msra.mxu0 0.0
    %4352 = vmatprep.subr.mxu0 0.0
    %4353 = vmatpush2.msra.mxu0 0.0
    %4354 = vmatprep.subr.mxu0 0.0
    %4355 = vmatpush2.msra.mxu0 0.0
    %4356 = vmatprep.subr.mxu0 0.0
    %4357 = vmatpush2.msra.mxu0 0.0
    %4358 = vmatprep.subr.mxu0 0.0
    %4359 = vmatpush2.msra.mxu0 0.0
    %4360 = vmatprep.subr.mxu0 0.0
    %4361 = vmatpush2.msra.mxu0 0.0
    %4362 = vmatprep.mubr.f32.mxu0 0.0
    %v4363 = vand.u32 %v60, 4294901760
    %v4364 = vsub.f32 %v60, %v4363
    %4365 = vmatmul.mubr.f32.gmra.mxu0 %v4364
    %v4366 = vpop.f32.mrf.mxu0
    %v4367 = vadd.f32 %v4275, %v4366
    %v4368 = vpop.f32.mrf.mxu0
    %4369 = vmatprep.mubr.f32.mxu0 0.0
    %v4370 = vand.u32 %v63, 4294901760
    %v4371 = vsub.f32 %v63, %v4370
    %4372 = vmatmul.mubr.f32.gmra.mxu0 %v4371
    %v4373 = vpop.f32.mrf.mxu0
    %v4374 = vadd.f32 %v4281, %v4373
    %v4375 = vpop.f32.mrf.mxu0
    %4376 = vmatprep.mubr.f32.mxu0 0.0
    %v4377 = vand.u32 %v66, 4294901760
    %v4378 = vsub.f32 %v66, %v4377
    %4379 = vmatmul.mubr.f32.gmra.mxu0 %v4378
    %v4380 = vpop.f32.mrf.mxu0
    %v4381 = vadd.f32 %v4287, %v4380
    %v4382 = vpop.f32.mrf.mxu0
    %4383 = vmatprep.mubr.f32.mxu0 0.0
    %v4384 = vand.u32 %v69, 4294901760
    %v4385 = vsub.f32 %v69, %v4384
    %4386 = vmatmul.mubr.f32.gmra.mxu0 %v4385
    %v4387 = vpop.f32.mrf.mxu0
    %v4388 = vadd.f32 %v4293, %v4387
    %v4389 = vpop.f32.mrf.mxu0
    %4390 = vdwg.mxu0
    %4391 = vmatprep.subr.mxu0 0.0
    %4392 = vmatpush1.msra.mxu0 0.0
    %4393 = vmatprep.subr.mxu0 0.0
    %4394 = vmatpush1.msra.mxu0 0.0
    %4395 = vmatprep.subr.mxu0 0.0
    %4396 = vmatpush1.msra.mxu0 0.0
    %4397 = vmatprep.subr.mxu0 0.0
    %4398 = vmatpush1.msra.mxu0 0.0
    %4399 = vmatprep.subr.mxu0 0.0
    %4400 = vmatpush1.msra.mxu0 0.0
    %4401 = vmatprep.subr.mxu0 0.0
    %4402 = vmatpush1.msra.mxu0 0.0
    %4403 = vmatprep.subr.mxu0 0.0
    %4404 = vmatpush1.msra.mxu0 0.0
    %4405 = vmatprep.subr.mxu0 0.0
    %4406 = vmatpush1.msra.mxu0 0.0
    %4407 = vmatprep.subr.mxu0 0.0
    %4408 = vmatpush1.msra.mxu0 0.0
    %4409 = vmatprep.subr.mxu0 0.0
    %4410 = vmatpush1.msra.mxu0 0.0
    %4411 = vmatprep.subr.mxu0 0.0
    %4412 = vmatpush1.msra.mxu0 0.0
    %4413 = vmatprep.subr.mxu0 0.0
    %4414 = vmatpush1.msra.mxu0 0.0
    %4415 = vmatprep.subr.mxu0 0.0
    %4416 = vmatpush1.msra.mxu0 0.0
    %4417 = vmatprep.subr.mxu0 0.0
    %4418 = vmatpush1.msra.mxu0 0.0
    %4419 = vmatprep.subr.mxu0 0.0
    %4420 = vmatpush1.msra.mxu0 0.0
    %4421 = vmatprep.subr.mxu0 0.0
    %v4422 = vand.u32 %v57, 4294901760
    %4423 = vmatpush1.msra.mxu0 %v4422
    %4424 = vmatprep.subr.mxu0 0.0
    %4425 = vmatpush2.msra.mxu0 0.0
    %4426 = vmatprep.subr.mxu0 0.0
    %4427 = vmatpush2.msra.mxu0 0.0
    %4428 = vmatprep.subr.mxu0 0.0
    %4429 = vmatpush2.msra.mxu0 0.0
    %4430 = vmatprep.subr.mxu0 0.0
    %4431 = vmatpush2.msra.mxu0 0.0
    %4432 = vmatprep.subr.mxu0 0.0
    %4433 = vmatpush2.msra.mxu0 0.0
    %4434 = vmatprep.subr.mxu0 0.0
    %4435 = vmatpush2.msra.mxu0 0.0
    %4436 = vmatprep.subr.mxu0 0.0
    %4437 = vmatpush2.msra.mxu0 0.0
    %4438 = vmatprep.subr.mxu0 0.0
    %4439 = vmatpush2.msra.mxu0 0.0
    %4440 = vmatprep.subr.mxu0 0.0
    %4441 = vmatpush2.msra.mxu0 0.0
    %4442 = vmatprep.subr.mxu0 0.0
    %4443 = vmatpush2.msra.mxu0 0.0
    %4444 = vmatprep.subr.mxu0 0.0
    %4445 = vmatpush2.msra.mxu0 0.0
    %4446 = vmatprep.subr.mxu0 0.0
    %4447 = vmatpush2.msra.mxu0 0.0
    %4448 = vmatprep.subr.mxu0 0.0
    %4449 = vmatpush2.msra.mxu0 0.0
    %4450 = vmatprep.subr.mxu0 0.0
    %4451 = vmatpush2.msra.mxu0 0.0
    %4452 = vmatprep.subr.mxu0 0.0
    %4453 = vmatpush2.msra.mxu0 0.0
    %4454 = vmatprep.subr.mxu0 0.0
    %4455 = vmatpush2.msra.mxu0 0.0
    %4456 = vmatprep.mubr.f32.mxu0 0.0
    %v4457 = vand.u32 %v60, 4294901760
    %v4458 = vsub.f32 %v60, %v4457
    %v4459 = vand.u32 %v4458, 4294901760
    %4460 = vmatmul.mubr.f32.gmra.mxu0 %v4459
    %v4461 = vpop.f32.mrf.mxu0
    %v4462 = vadd.f32 %v4367, %v4461
    %v4463 = vpop.f32.mrf.mxu0
    %4464 = vmatprep.mubr.f32.mxu0 0.0
    %v4465 = vand.u32 %v63, 4294901760
    %v4466 = vsub.f32 %v63, %v4465
    %v4467 = vand.u32 %v4466, 4294901760
    %4468 = vmatmul.mubr.f32.gmra.mxu0 %v4467
    %v4469 = vpop.f32.mrf.mxu0
    %v4470 = vadd.f32 %v4374, %v4469
    %v4471 = vpop.f32.mrf.mxu0
    %4472 = vmatprep.mubr.f32.mxu0 0.0
    %v4473 = vand.u32 %v66, 4294901760
    %v4474 = vsub.f32 %v66, %v4473
    %v4475 = vand.u32 %v4474, 4294901760
    %4476 = vmatmul.mubr.f32.gmra.mxu0 %v4475
    %v4477 = vpop.f32.mrf.mxu0
    %v4478 = vadd.f32 %v4381, %v4477
    %v4479 = vpop.f32.mrf.mxu0
    %4480 = vmatprep.mubr.f32.mxu0 0.0
    %v4481 = vand.u32 %v69, 4294901760
    %v4482 = vsub.f32 %v69, %v4481
    %v4483 = vand.u32 %v4482, 4294901760
    %4484 = vmatmul.mubr.f32.gmra.mxu0 %v4483
    %v4485 = vpop.f32.mrf.mxu0
    %v4486 = vadd.f32 %v4388, %v4485
    %v4487 = vpop.f32.mrf.mxu0
    %4488 = vdwg.mxu0
    %4489 = vmatprep.subr.mxu0 0.0
    %4490 = vmatpush1.msra.mxu0 0.0
    %4491 = vmatprep.subr.mxu0 0.0
    %4492 = vmatpush1.msra.mxu0 0.0
    %4493 = vmatprep.subr.mxu0 0.0
    %4494 = vmatpush1.msra.mxu0 0.0
    %4495 = vmatprep.subr.mxu0 0.0
    %4496 = vmatpush1.msra.mxu0 0.0
    %4497 = vmatprep.subr.mxu0 0.0
    %4498 = vmatpush1.msra.mxu0 0.0
    %4499 = vmatprep.subr.mxu0 0.0
    %4500 = vmatpush1.msra.mxu0 0.0
    %4501 = vmatprep.subr.mxu0 0.0
    %4502 = vmatpush1.msra.mxu0 0.0
    %4503 = vmatprep.subr.mxu0 0.0
    %4504 = vmatpush1.msra.mxu0 0.0
    %4505 = vmatprep.subr.mxu0 0.0
    %4506 = vmatpush1.msra.mxu0 0.0
    %4507 = vmatprep.subr.mxu0 0.0
    %4508 = vmatpush1.msra.mxu0 0.0
    %4509 = vmatprep.subr.mxu0 0.0
    %4510 = vmatpush1.msra.mxu0 0.0
    %4511 = vmatprep.subr.mxu0 0.0
    %4512 = vmatpush1.msra.mxu0 0.0
    %4513 = vmatprep.subr.mxu0 0.0
    %4514 = vmatpush1.msra.mxu0 0.0
    %4515 = vmatprep.subr.mxu0 0.0
    %4516 = vmatpush1.msra.mxu0 0.0
    %4517 = vmatprep.subr.mxu0 0.0
    %4518 = vmatpush1.msra.mxu0 0.0
    %4519 = vmatprep.subr.mxu0 0.0
    %v4520 = vand.u32 %v57, 4294901760
    %v4521 = vsub.f32 %v57, %v4520
    %v4522 = vand.u32 %v4521, 4294901760
    %4523 = vmatpush1.msra.mxu0 %v4522
    %4524 = vmatprep.subr.mxu0 0.0
    %4525 = vmatpush2.msra.mxu0 0.0
    %4526 = vmatprep.subr.mxu0 0.0
    %4527 = vmatpush2.msra.mxu0 0.0
    %4528 = vmatprep.subr.mxu0 0.0
    %4529 = vmatpush2.msra.mxu0 0.0
    %4530 = vmatprep.subr.mxu0 0.0
    %4531 = vmatpush2.msra.mxu0 0.0
    %4532 = vmatprep.subr.mxu0 0.0
    %4533 = vmatpush2.msra.mxu0 0.0
    %4534 = vmatprep.subr.mxu0 0.0
    %4535 = vmatpush2.msra.mxu0 0.0
    %4536 = vmatprep.subr.mxu0 0.0
    %4537 = vmatpush2.msra.mxu0 0.0
    %4538 = vmatprep.subr.mxu0 0.0
    %4539 = vmatpush2.msra.mxu0 0.0
    %4540 = vmatprep.subr.mxu0 0.0
    %4541 = vmatpush2.msra.mxu0 0.0
    %4542 = vmatprep.subr.mxu0 0.0
    %4543 = vmatpush2.msra.mxu0 0.0
    %4544 = vmatprep.subr.mxu0 0.0
    %4545 = vmatpush2.msra.mxu0 0.0
    %4546 = vmatprep.subr.mxu0 0.0
    %4547 = vmatpush2.msra.mxu0 0.0
    %4548 = vmatprep.subr.mxu0 0.0
    %4549 = vmatpush2.msra.mxu0 0.0
    %4550 = vmatprep.subr.mxu0 0.0
    %4551 = vmatpush2.msra.mxu0 0.0
    %4552 = vmatprep.subr.mxu0 0.0
    %4553 = vmatpush2.msra.mxu0 0.0
    %4554 = vmatprep.subr.mxu0 0.0
    %4555 = vmatpush2.msra.mxu0 0.0
    %4556 = vmatprep.mubr.f32.mxu0 0.0
    %v4557 = vand.u32 %v60, 4294901760
    %4558 = vmatmul.mubr.f32.gmra.mxu0 %v4557
    %v4559 = vpop.f32.mrf.mxu0
    %v4560 = vadd.f32 %v4462, %v4559
    %v4561 = vpop.f32.mrf.mxu0
    %4562 = vmatprep.mubr.f32.mxu0 0.0
    %v4563 = vand.u32 %v63, 4294901760
    %4564 = vmatmul.mubr.f32.gmra.mxu0 %v4563
    %v4565 = vpop.f32.mrf.mxu0
    %v4566 = vadd.f32 %v4470, %v4565
    %v4567 = vpop.f32.mrf.mxu0
    %4568 = vmatprep.mubr.f32.mxu0 0.0
    %v4569 = vand.u32 %v66, 4294901760
    %4570 = vmatmul.mubr.f32.gmra.mxu0 %v4569
    %v4571 = vpop.f32.mrf.mxu0
    %v4572 = vadd.f32 %v4478, %v4571
    %v4573 = vpop.f32.mrf.mxu0
    %4574 = vmatprep.mubr.f32.mxu0 0.0
    %v4575 = vand.u32 %v69, 4294901760
    %4576 = vmatmul.mubr.f32.gmra.mxu0 %v4575
    %v4577 = vpop.f32.mrf.mxu0
    %v4578 = vadd.f32 %v4486, %v4577
    %v4579 = vpop.f32.mrf.mxu0
    %4580 = vdwg.mxu0
    %4581 = vmatprep.subr.mxu0 0.0
    %4582 = vmatpush1.msra.mxu0 0.0
    %4583 = vmatprep.subr.mxu0 0.0
    %4584 = vmatpush1.msra.mxu0 0.0
    %4585 = vmatprep.subr.mxu0 0.0
    %4586 = vmatpush1.msra.mxu0 0.0
    %4587 = vmatprep.subr.mxu0 0.0
    %4588 = vmatpush1.msra.mxu0 0.0
    %4589 = vmatprep.subr.mxu0 0.0
    %4590 = vmatpush1.msra.mxu0 0.0
    %4591 = vmatprep.subr.mxu0 0.0
    %4592 = vmatpush1.msra.mxu0 0.0
    %4593 = vmatprep.subr.mxu0 0.0
    %4594 = vmatpush1.msra.mxu0 0.0
    %4595 = vmatprep.subr.mxu0 0.0
    %4596 = vmatpush1.msra.mxu0 0.0
    %4597 = vmatprep.subr.mxu0 0.0
    %4598 = vmatpush1.msra.mxu0 0.0
    %4599 = vmatprep.subr.mxu0 0.0
    %4600 = vmatpush1.msra.mxu0 0.0
    %4601 = vmatprep.subr.mxu0 0.0
    %4602 = vmatpush1.msra.mxu0 0.0
    %4603 = vmatprep.subr.mxu0 0.0
    %4604 = vmatpush1.msra.mxu0 0.0
    %4605 = vmatprep.subr.mxu0 0.0
    %4606 = vmatpush1.msra.mxu0 0.0
    %4607 = vmatprep.subr.mxu0 0.0
    %4608 = vmatpush1.msra.mxu0 0.0
    %4609 = vmatprep.subr.mxu0 0.0
    %4610 = vmatpush1.msra.mxu0 0.0
    %4611 = vmatprep.subr.mxu0 0.0
    %v4612 = vand.u32 %v57, 4294901760
    %4613 = vmatpush1.msra.mxu0 %v4612
    %4614 = vmatprep.subr.mxu0 0.0
    %4615 = vmatpush2.msra.mxu0 0.0
    %4616 = vmatprep.subr.mxu0 0.0
    %4617 = vmatpush2.msra.mxu0 0.0
    %4618 = vmatprep.subr.mxu0 0.0
    %4619 = vmatpush2.msra.mxu0 0.0
    %4620 = vmatprep.subr.mxu0 0.0
    %4621 = vmatpush2.msra.mxu0 0.0
    %4622 = vmatprep.subr.mxu0 0.0
    %4623 = vmatpush2.msra.mxu0 0.0
    %4624 = vmatprep.subr.mxu0 0.0
    %4625 = vmatpush2.msra.mxu0 0.0
    %4626 = vmatprep.subr.mxu0 0.0
    %4627 = vmatpush2.msra.mxu0 0.0
    %4628 = vmatprep.subr.mxu0 0.0
    %4629 = vmatpush2.msra.mxu0 0.0
    %4630 = vmatprep.subr.mxu0 0.0
    %4631 = vmatpush2.msra.mxu0 0.0
    %4632 = vmatprep.subr.mxu0 0.0
    %4633 = vmatpush2.msra.mxu0 0.0
    %4634 = vmatprep.subr.mxu0 0.0
    %4635 = vmatpush2.msra.mxu0 0.0
    %4636 = vmatprep.subr.mxu0 0.0
    %4637 = vmatpush2.msra.mxu0 0.0
    %4638 = vmatprep.subr.mxu0 0.0
    %4639 = vmatpush2.msra.mxu0 0.0
    %4640 = vmatprep.subr.mxu0 0.0
    %4641 = vmatpush2.msra.mxu0 0.0
    %4642 = vmatprep.subr.mxu0 0.0
    %4643 = vmatpush2.msra.mxu0 0.0
    %4644 = vmatprep.subr.mxu0 0.0
    %4645 = vmatpush2.msra.mxu0 0.0
    %4646 = vmatprep.mubr.f32.mxu0 0.0
    %v4647 = vand.u32 %v60, 4294901760
    %4648 = vmatmul.mubr.f32.gmra.mxu0 %v4647
    %v4649 = vpop.f32.mrf.mxu0
    %v4650 = vadd.f32 %v4560, %v4649
    %v4651 = vpop.f32.mrf.mxu0
    %4652 = vmatprep.mubr.f32.mxu0 0.0
    %v4653 = vand.u32 %v63, 4294901760
    %4654 = vmatmul.mubr.f32.gmra.mxu0 %v4653
    %v4655 = vpop.f32.mrf.mxu0
    %v4656 = vadd.f32 %v4566, %v4655
    %v4657 = vpop.f32.mrf.mxu0
    %4658 = vmatprep.mubr.f32.mxu0 0.0
    %v4659 = vand.u32 %v66, 4294901760
    %4660 = vmatmul.mubr.f32.gmra.mxu0 %v4659
    %v4661 = vpop.f32.mrf.mxu0
    %v4662 = vadd.f32 %v4572, %v4661
    %v4663 = vpop.f32.mrf.mxu0
    %4664 = vmatprep.mubr.f32.mxu0 0.0
    %v4665 = vand.u32 %v69, 4294901760
    %4666 = vmatmul.mubr.f32.gmra.mxu0 %v4665
    %v4667 = vpop.f32.mrf.mxu0
    %v4668 = vadd.f32 %v4578, %v4667
    %v4669 = vpop.f32.mrf.mxu0
    %4670 = vdwg.mxu0
    %v4671 = vmax.f32 %v625, 0.0
    %v4672 = vmax.f32 %v631, 0.0
    %v4673 = vmax.f32 %v1200, 0.0
    %v4674 = vmax.f32 %v1206, 0.0
    %v4675 = vmax.f32 %v1775, 0.0
    %v4676 = vmax.f32 %v1781, 0.0
    %v4677 = vmax.f32 %v2350, 0.0
    %v4678 = vmax.f32 %v2356, 0.0
    %v4679 = vmax.f32 %v2925, 0.0
    %v4680 = vmax.f32 %v2931, 0.0
    %v4681 = vmax.f32 %v3500, 0.0
    %v4682 = vmax.f32 %v3506, 0.0
    %v4683 = vmax.f32 %v4075, 0.0
    %v4684 = vmax.f32 %v4081, 0.0
    %v4685 = vmax.f32 %v4650, 0.0
    %v4686 = vmax.f32 %v4656, 0.0
    %v4687 = vmax.f32 %v637, 0.0
    %v4688 = vmax.f32 %v643, 0.0
    %v4689 = vmax.f32 %v1212, 0.0
    %v4690 = vmax.f32 %v1218, 0.0
    %v4691 = vmax.f32 %v1787, 0.0
    %v4692 = vmax.f32 %v1793, 0.0
    %v4693 = vmax.f32 %v2362, 0.0
    %v4694 = vmax.f32 %v2368, 0.0
    %v4695 = vmax.f32 %v2937, 0.0
    %v4696 = vmax.f32 %v2943, 0.0
    %v4697 = vmax.f32 %v3512, 0.0
    %v4698 = vmax.f32 %v3518, 0.0
    %v4699 = vmax.f32 %v4087, 0.0
    %v4700 = vmax.f32 %v4093, 0.0
    %v4701 = vmax.f32 %v4662, 0.0
    %v4702 = vmax.f32 %v4668, 0.0
    %v4703 = vmax.f32 %v4671, %v4687
    %v4704 = vmax.f32 %v4672, %v4688
    %v4705 = vmax.f32 %v4673, %v4689
    %v4706 = vmax.f32 %v4674, %v4690
    %v4707 = vmax.f32 %v4675, %v4691
    %v4708 = vmax.f32 %v4676, %v4692
    %v4709 = vmax.f32 %v4677, %v4693
    %v4710 = vmax.f32 %v4678, %v4694
    %v4711 = vmax.f32 %v4679, %v4695
    %v4712 = vmax.f32 %v4680, %v4696
    %v4713 = vmax.f32 %v4681, %v4697
    %v4714 = vmax.f32 %v4682, %v4698
    %v4715 = vmax.f32 %v4683, %v4699
    %v4716 = vmax.f32 %v4684, %v4700
    %v4717 = vmax.f32 %v4685, %v4701
    %v4718 = vmax.f32 %v4686, %v4702
    %v4719 = vlaneseq
    %v4720 = vand.u32 %v4719, 127
    %v4721 = vld [vmem:[#allocation5] sm:$0xff]
    %v4722 = vld [vmem:[#allocation5 + $0x8] sm:$0xff]
    %v4723 = vmul.f32 %v4703, %v4721
    %v4724 = vmul.f32 %v4704, %v4722
    %v4725 = vmul.f32 %v4705, %v4721
    %v4726 = vmul.f32 %v4706, %v4722
    %v4727 = vmul.f32 %v4707, %v4721
    %v4728 = vmul.f32 %v4708, %v4722
    %v4729 = vmul.f32 %v4709, %v4721
    %v4730 = vmul.f32 %v4710, %v4722
    %v4731 = vmul.f32 %v4711, %v4721
    %v4732 = vmul.f32 %v4712, %v4722
    %v4733 = vmul.f32 %v4713, %v4721
    %v4734 = vmul.f32 %v4714, %v4722
    %v4735 = vmul.f32 %v4715, %v4721
    %v4736 = vmul.f32 %v4716, %v4722
    %v4737 = vmul.f32 %v4717, %v4721
    %v4738 = vmul.f32 %v4718, %v4722
    %v4739 = vadd.f32 %v4723, %v4724
    %v4740 = vrot.slane %v4739, 4
    %v4741 = vadd.f32 %v4739, %v4740
    %v4742 = vrot.slane %v4741, 2
    %v4743 = vadd.f32 %v4741, %v4742
    %v4744 = vrot.slane %v4743, 1
    %v4745 = vadd.f32 %v4743, %v4744
    %v4746 = vadd.f32 %v4725, %v4726
    %v4747 = vrot.slane %v4746, 4
    %v4748 = vadd.f32 %v4746, %v4747
    %v4749 = vrot.slane %v4748, 2
    %v4750 = vadd.f32 %v4748, %v4749
    %v4751 = vrot.slane %v4750, 1
    %v4752 = vadd.f32 %v4750, %v4751
    %v4753 = vadd.f32 %v4727, %v4728
    %v4754 = vrot.slane %v4753, 4
    %v4755 = vadd.f32 %v4753, %v4754
    %v4756 = vrot.slane %v4755, 2
    %v4757 = vadd.f32 %v4755, %v4756
    %v4758 = vrot.slane %v4757, 1
    %v4759 = vadd.f32 %v4757, %v4758
    %v4760 = vadd.f32 %v4729, %v4730
    %v4761 = vrot.slane %v4760, 4
    %v4762 = vadd.f32 %v4760, %v4761
    %v4763 = vrot.slane %v4762, 2
    %v4764 = vadd.f32 %v4762, %v4763
    %v4765 = vrot.slane %v4764, 1
    %v4766 = vadd.f32 %v4764, %v4765
    %v4767 = vadd.f32 %v4731, %v4732
    %v4768 = vrot.slane %v4767, 4
    %v4769 = vadd.f32 %v4767, %v4768
    %v4770 = vrot.slane %v4769, 2
    %v4771 = vadd.f32 %v4769, %v4770
    %v4772 = vrot.slane %v4771, 1
    %v4773 = vadd.f32 %v4771, %v4772
    %v4774 = vadd.f32 %v4733, %v4734
    %v4775 = vrot.slane %v4774, 4
    %v4776 = vadd.f32 %v4774, %v4775
    %v4777 = vrot.slane %v4776, 2
    %v4778 = vadd.f32 %v4776, %v4777
    %v4779 = vrot.slane %v4778, 1
    %v4780 = vadd.f32 %v4778, %v4779
    %v4781 = vadd.f32 %v4735, %v4736
    %v4782 = vrot.slane %v4781, 4
    %v4783 = vadd.f32 %v4781, %v4782
    %v4784 = vrot.slane %v4783, 2
    %v4785 = vadd.f32 %v4783, %v4784
    %v4786 = vrot.slane %v4785, 1
    %v4787 = vadd.f32 %v4785, %v4786
    %v4788 = vadd.f32 %v4737, %v4738
    %v4789 = vrot.slane %v4788, 4
    %v4790 = vadd.f32 %v4788, %v4789
    %v4791 = vrot.slane %v4790, 2
    %v4792 = vadd.f32 %v4790, %v4791
    %v4793 = vrot.slane %v4792, 1
    %v4794 = vadd.f32 %v4792, %v4793
    %vm4803 = vcmask 1041409
    %v4804 = vsel %vm4803, %v4752, %v4745
    %vm4805 = vcmask 1042434
    %v4806 = vsel %vm4805, %v4759, %v4804
    %vm4807 = vcmask 1043459
    %v4808 = vsel %vm4807, %v4766, %v4806
    %vm4809 = vcmask 1044484
    %v4810 = vsel %vm4809, %v4773, %v4808
    %vm4811 = vcmask 1045509
    %v4812 = vsel %vm4811, %v4780, %v4810
    %vm4813 = vcmask 1046534
    %v4814 = vsel %vm4813, %v4787, %v4812
    %vm4815 = vcmask 1047559
    %v4816 = vsel %vm4815, %v4794, %v4814
    %4818 = vadd.xlane.f32.xlu0 %v4816
    %v4819 = vpop.xlane.xlu0 %4818
    %vm4820 = vcmp.eq.s32.totalorder %v4720, 0
    %v4821 = vsel %vm4820, 1, 0
    %v4822 = vcvt.s32.f32 %v4821
    %v4823 = vmul.f32 %v4819, %v4822
    %v4824 = vadd.f32 %v4823, 0.0
    %s4825 = scalar_lea.vmem [#allocation5], 16
    %v4826 = vld [vmem:[%s4825] sm:$0xff]
    %v4827 = vld [vmem:[%s4825 + $0x8] sm:$0xff]
    %v4828 = vmul.f32 %v4703, %v4826
    %v4829 = vmul.f32 %v4704, %v4827
    %v4830 = vmul.f32 %v4705, %v4826
    %v4831 = vmul.f32 %v4706, %v4827
    %v4832 = vmul.f32 %v4707, %v4826
    %v4833 = vmul.f32 %v4708, %v4827
    %v4834 = vmul.f32 %v4709, %v4826
    %v4835 = vmul.f32 %v4710, %v4827
    %v4836 = vmul.f32 %v4711, %v4826
    %v4837 = vmul.f32 %v4712, %v4827
    %v4838 = vmul.f32 %v4713, %v4826
    %v4839 = vmul.f32 %v4714, %v4827
    %v4840 = vmul.f32 %v4715, %v4826
    %v4841 = vmul.f32 %v4716, %v4827
    %v4842 = vmul.f32 %v4717, %v4826
    %v4843 = vmul.f32 %v4718, %v4827
    %v4844 = vadd.f32 %v4828, %v4829
    %v4845 = vrot.slane %v4844, 4
    %v4846 = vadd.f32 %v4844, %v4845
    %v4847 = vrot.slane %v4846, 2
    %v4848 = vadd.f32 %v4846, %v4847
    %v4849 = vrot.slane %v4848, 1
    %v4850 = vadd.f32 %v4848, %v4849
    %v4851 = vadd.f32 %v4830, %v4831
    %v4852 = vrot.slane %v4851, 4
    %v4853 = vadd.f32 %v4851, %v4852
    %v4854 = vrot.slane %v4853, 2
    %v4855 = vadd.f32 %v4853, %v4854
    %v4856 = vrot.slane %v4855, 1
    %v4857 = vadd.f32 %v4855, %v4856
    %v4858 = vadd.f32 %v4832, %v4833
    %v4859 = vrot.slane %v4858, 4
    %v4860 = vadd.f32 %v4858, %v4859
    %v4861 = vrot.slane %v4860, 2
    %v4862 = vadd.f32 %v4860, %v4861
    %v4863 = vrot.slane %v4862, 1
    %v4864 = vadd.f32 %v4862, %v4863
    %v4865 = vadd.f32 %v4834, %v4835
    %v4866 = vrot.slane %v4865, 4
    %v4867 = vadd.f32 %v4865, %v4866
    %v4868 = vrot.slane %v4867, 2
    %v4869 = vadd.f32 %v4867, %v4868
    %v4870 = vrot.slane %v4869, 1
    %v4871 = vadd.f32 %v4869, %v4870
    %v4872 = vadd.f32 %v4836, %v4837
    %v4873 = vrot.slane %v4872, 4
    %v4874 = vadd.f32 %v4872, %v4873
    %v4875 = vrot.slane %v4874, 2
    %v4876 = vadd.f32 %v4874, %v4875
    %v4877 = vrot.slane %v4876, 1
    %v4878 = vadd.f32 %v4876, %v4877
    %v4879 = vadd.f32 %v4838, %v4839
    %v4880 = vrot.slane %v4879, 4
    %v4881 = vadd.f32 %v4879, %v4880
    %v4882 = vrot.slane %v4881, 2
    %v4883 = vadd.f32 %v4881, %v4882
    %v4884 = vrot.slane %v4883, 1
    %v4885 = vadd.f32 %v4883, %v4884
    %v4886 = vadd.f32 %v4840, %v4841
    %v4887 = vrot.slane %v4886, 4
    %v4888 = vadd.f32 %v4886, %v4887
    %v4889 = vrot.slane %v4888, 2
    %v4890 = vadd.f32 %v4888, %v4889
    %v4891 = vrot.slane %v4890, 1
    %v4892 = vadd.f32 %v4890, %v4891
    %v4893 = vadd.f32 %v4842, %v4843
    %v4894 = vrot.slane %v4893, 4
    %v4895 = vadd.f32 %v4893, %v4894
    %v4896 = vrot.slane %v4895, 2
    %v4897 = vadd.f32 %v4895, %v4896
    %v4898 = vrot.slane %v4897, 1
    %v4899 = vadd.f32 %v4897, %v4898
    %v4908 = vsel %vm4803, %v4857, %v4850
    %v4909 = vsel %vm4805, %v4864, %v4908
    %v4910 = vsel %vm4807, %v4871, %v4909
    %v4911 = vsel %vm4809, %v4878, %v4910
    %v4912 = vsel %vm4811, %v4885, %v4911
    %v4913 = vsel %vm4813, %v4892, %v4912
    %v4914 = vsel %vm4815, %v4899, %v4913
    %4916 = vadd.xlane.f32.xlu0 %v4914
    %v4917 = vpop.xlane.xlu0 %4916
    %vm4918 = vcmp.eq.s32.totalorder %v4720, 1
    %v4919 = vsel %vm4918, 1, 0
    %v4920 = vcvt.s32.f32 %v4919
    %v4921 = vmul.f32 %v4917, %v4920
    %v4922 = vadd.f32 %v4824, %v4921
    %s4923 = scalar_lea.vmem [#allocation5], 32
    %v4924 = vld [vmem:[%s4923] sm:$0xff]
    %v4925 = vld [vmem:[%s4923 + $0x8] sm:$0xff]
    %v4926 = vmul.f32 %v4703, %v4924
    %v4927 = vmul.f32 %v4704, %v4925
    %v4928 = vmul.f32 %v4705, %v4924
    %v4929 = vmul.f32 %v4706, %v4925
    %v4930 = vmul.f32 %v4707, %v4924
    %v4931 = vmul.f32 %v4708, %v4925
    %v4932 = vmul.f32 %v4709, %v4924
    %v4933 = vmul.f32 %v4710, %v4925
    %v4934 = vmul.f32 %v4711, %v4924
    %v4935 = vmul.f32 %v4712, %v4925
    %v4936 = vmul.f32 %v4713, %v4924
    %v4937 = vmul.f32 %v4714, %v4925
    %v4938 = vmul.f32 %v4715, %v4924
    %v4939 = vmul.f32 %v4716, %v4925
    %v4940 = vmul.f32 %v4717, %v4924
    %v4941 = vmul.f32 %v4718, %v4925
    %v4942 = vadd.f32 %v4926, %v4927
    %v4943 = vrot.slane %v4942, 4
    %v4944 = vadd.f32 %v4942, %v4943
    %v4945 = vrot.slane %v4944, 2
    %v4946 = vadd.f32 %v4944, %v4945
    %v4947 = vrot.slane %v4946, 1
    %v4948 = vadd.f32 %v4946, %v4947
    %v4949 = vadd.f32 %v4928, %v4929
    %v4950 = vrot.slane %v4949, 4
    %v4951 = vadd.f32 %v4949, %v4950
    %v4952 = vrot.slane %v4951, 2
    %v4953 = vadd.f32 %v4951, %v4952
    %v4954 = vrot.slane %v4953, 1
    %v4955 = vadd.f32 %v4953, %v4954
    %v4956 = vadd.f32 %v4930, %v4931
    %v4957 = vrot.slane %v4956, 4
    %v4958 = vadd.f32 %v4956, %v4957
    %v4959 = vrot.slane %v4958, 2
    %v4960 = vadd.f32 %v4958, %v4959
    %v4961 = vrot.slane %v4960, 1
    %v4962 = vadd.f32 %v4960, %v4961
    %v4963 = vadd.f32 %v4932, %v4933
    %v4964 = vrot.slane %v4963, 4
    %v4965 = vadd.f32 %v4963, %v4964
    %v4966 = vrot.slane %v4965, 2
    %v4967 = vadd.f32 %v4965, %v4966
    %v4968 = vrot.slane %v4967, 1
    %v4969 = vadd.f32 %v4967, %v4968
    %v4970 = vadd.f32 %v4934, %v4935
    %v4971 = vrot.slane %v4970, 4
    %v4972 = vadd.f32 %v4970, %v4971
    %v4973 = vrot.slane %v4972, 2
    %v4974 = vadd.f32 %v4972, %v4973
    %v4975 = vrot.slane %v4974, 1
    %v4976 = vadd.f32 %v4974, %v4975
    %v4977 = vadd.f32 %v4936, %v4937
    %v4978 = vrot.slane %v4977, 4
    %v4979 = vadd.f32 %v4977, %v4978
    %v4980 = vrot.slane %v4979, 2
    %v4981 = vadd.f32 %v4979, %v4980
    %v4982 = vrot.slane %v4981, 1
    %v4983 = vadd.f32 %v4981, %v4982
    %v4984 = vadd.f32 %v4938, %v4939
    %v4985 = vrot.slane %v4984, 4
    %v4986 = vadd.f32 %v4984, %v4985
    %v4987 = vrot.slane %v4986, 2
    %v4988 = vadd.f32 %v4986, %v4987
    %v4989 = vrot.slane %v4988, 1
    %v4990 = vadd.f32 %v4988, %v4989
    %v4991 = vadd.f32 %v4940, %v4941
    %v4992 = vrot.slane %v4991, 4
    %v4993 = vadd.f32 %v4991, %v4992
    %v4994 = vrot.slane %v4993, 2
    %v4995 = vadd.f32 %v4993, %v4994
    %v4996 = vrot.slane %v4995, 1
    %v4997 = vadd.f32 %v4995, %v4996
    %v5006 = vsel %vm4803, %v4955, %v4948
    %v5007 = vsel %vm4805, %v4962, %v5006
    %v5008 = vsel %vm4807, %v4969, %v5007
    %v5009 = vsel %vm4809, %v4976, %v5008
    %v5010 = vsel %vm4811, %v4983, %v5009
    %v5011 = vsel %vm4813, %v4990, %v5010
    %v5012 = vsel %vm4815, %v4997, %v5011
    %5014 = vadd.xlane.f32.xlu0 %v5012
    %v5015 = vpop.xlane.xlu0 %5014
    %vm5016 = vcmp.eq.s32.totalorder %v4720, 2
    %v5017 = vsel %vm5016, 1, 0
    %v5018 = vcvt.s32.f32 %v5017
    %v5019 = vmul.f32 %v5015, %v5018
    %v5020 = vadd.f32 %v4922, %v5019
    %v5021 = vld [vmem:[%s3] sm:$0x1]
    %v5023 = vlaneseq
    %v5024 = vshrl.u32 %v5023, 7
    %v5025 = vsub.s32 0, %v5024
    %v5026 = vrot.slane %v5021, %v5025
    %v5028 = vadd.f32 %v5020, %v5026
    %5029 = vst [vmem:[#allocation7] sm:$0xff] %v5028
    // Predicated region
    $region26: #{tpu_custom_call.1} parent=1 // pred_check
      _
    $region27: #{tpu_custom_call.1} parent=1 // pred_check_branch
      %5031 = sbr.rel (0) target = $region29
    $region28: #{tpu_custom_call.1} parent=1 // pred_region
      %s5033 = ssub.s32 128, 128
      %5034 = vsyncadd [#allocation4], %s5033
      %s5036 = sshll.u32 [#allocation7], 4
      %s5037 = int_to_ptr.vmem [resolvable:$true] %s5036
      %5039 = dma.vmem_to_hbm [thread:$0]  %s5037, 128, %s4, [#allocation4]
    $region29: #{tpu_custom_call.1} parent=1 // pred_fallthru
      _
    // Predicated region
    $region30: #{tpu_custom_call.1} parent=1 // pred_check
      _
    $region31: #{tpu_custom_call.1} parent=1 // pred_check_branch
      %5041 = sbr.rel (0) target = $region33
    $region32: #{tpu_custom_call.1} parent=1 // pred_region
      %5042 = dma.done [#allocation4], 128
    $region33: #{tpu_custom_call.1} parent=1 // pred_fallthru
      _
    %5043 = vsyncpa [#allocation3], 1
    %5044 = vsyncpa [#allocation6], 1
    %5045 = vsyncpa [#allocation4], 1

</llo_original>
